<compile_context>
chip_gen: v7x
topology: tpu7x:2x2x1
jax: 0.10.0
libtpu: 0.0.40
codegen_flags: <defaults>
</compile_context>

<pallas_src>
import math
import functools

import jax
import jax.numpy as jnp
from jax.experimental import pallas as pl
from jax.experimental.pallas import tpu as pltpu


# ----------------------------------------------------------------------------
# In-kernel helpers
# ----------------------------------------------------------------------------

def _layernorm(x, gamma, beta, eps):
    mu = jnp.mean(x, axis=-1, keepdims=True)
    xc = x - mu
    var = jnp.mean(xc * xc, axis=-1, keepdims=True)
    return xc * jax.lax.rsqrt(var + eps) * gamma + beta


def _softmax_rows(s):
    s = s - jnp.max(s, axis=-1, keepdims=True)
    p = jnp.exp(s)
    return p * pl.reciprocal(jnp.sum(p, axis=-1, keepdims=True), approx=True)


def _bmm(a, b, a_dim, b_dim):
    """Batched matmul over leading head dim: contract a[a_dim] with b[b_dim]."""
    return jax.lax.dot_general(
        a, b, (((a_dim,), (b_dim,)), ((0,), (0,))),
        preferred_element_type=jnp.float32)


# ----------------------------------------------------------------------------
# Fused per-layer decoder kernel (self-attn + cross-attn + FFN + 3x LayerNorm)
# ----------------------------------------------------------------------------

def _decoder_layer_kernel(*refs, nhead, scale, eps, has_pad):
    o_ref = refs[-1]
    ins = refs[:-1]
    if has_pad:
        x_ref, mem_ref, mask_ref, pad_ref = ins[:4]
        w = ins[4:]
    else:
        x_ref, mem_ref, mask_ref = ins[:3]
        pad_ref = None
        w = ins[3:]
    (wqkv_ref, bqkv_ref, wo_sa_ref, bo_sa_ref, g1_ref, b1_ref,
     wq_ref, bq_ref, wkv_ref, bkv_ref, wo_ca_ref, bo_ca_ref, g2_ref, b2_ref,
     w1_ref, bf1_ref, w2_ref, bf2_ref, g3_ref, b3_ref) = w

    T, E = x_ref.shape[1], x_ref.shape[2]
    S = mem_ref.shape[1]
    H = nhead
    dh = E // H

    x = x_ref[0].astype(jnp.float32)                    # (T, E) residual stream
    mem = mem_ref[0]                                    # (S, E) bf16

    mask = mask_ref[...]                                # (T, T) additive
    if has_pad:
        mask = mask + pad_ref[0]                        # + (1, T) pad bias

    # ---------------- self attention ----------------
    xb = x.astype(jnp.bfloat16)
    xh = jnp.broadcast_to(xb[None], (H, T, E))          # (H, T, E)
    qkv = _bmm(xh, wqkv_ref[...], 2, 1) + bqkv_ref[...]  # (H, T, 3*dh) f32
    q = qkv[:, :, 0:dh].astype(jnp.bfloat16)
    k = qkv[:, :, dh:2 * dh].astype(jnp.bfloat16)
    v = qkv[:, :, 2 * dh:3 * dh].astype(jnp.bfloat16)

    s = _bmm(q, k, 2, 2) * scale + mask[None]           # (H, T, T)
    p = _softmax_rows(s).astype(jnp.bfloat16)
    oh = _bmm(p, v, 2, 1)                               # (H, T, dh) f32

    o_cat = jnp.concatenate([oh[h] for h in range(H)],
                            axis=-1).astype(jnp.bfloat16)        # (T, E)
    attn = jnp.dot(o_cat, wo_sa_ref[...],
                   preferred_element_type=jnp.float32) + bo_sa_ref[...]
    x = _layernorm(x + attn, g1_ref[...], b1_ref[...], eps)

    # ---------------- cross attention ----------------
    xb = x.astype(jnp.bfloat16)
    xh = jnp.broadcast_to(xb[None], (H, T, E))
    qc = (_bmm(xh, wq_ref[...], 2, 1) + bq_ref[...]).astype(jnp.bfloat16)   # (H,T,dh)

    memh = jnp.broadcast_to(mem[None], (H, S, E))
    kv = _bmm(memh, wkv_ref[...], 2, 1) + bkv_ref[...]   # (H, S, 2*dh) f32
    kc = kv[:, :, 0:dh].astype(jnp.bfloat16)
    vc = kv[:, :, dh:2 * dh].astype(jnp.bfloat16)

    sc = _bmm(qc, kc, 2, 2) * scale                      # (H, T, S); no memory mask
    pc = _softmax_rows(sc).astype(jnp.bfloat16)
    ohc = _bmm(pc, vc, 2, 1)                             # (H, T, dh) f32

    oc_cat = jnp.concatenate([ohc[h] for h in range(H)],
                             axis=-1).astype(jnp.bfloat16)       # (T, E)
    attn2 = jnp.dot(oc_cat, wo_ca_ref[...],
                    preferred_element_type=jnp.float32) + bo_ca_ref[...]
    x = _layernorm(x + attn2, g2_ref[...], b2_ref[...], eps)

    # ---------------- feed forward ----------------
    xb = x.astype(jnp.bfloat16)
    h1 = jnp.dot(xb, w1_ref[...],
                 preferred_element_type=jnp.float32) + bf1_ref[...]
    h1 = jnp.maximum(h1, 0.0).astype(jnp.bfloat16)
    y = jnp.dot(h1, w2_ref[...],
                preferred_element_type=jnp.float32) + bf2_ref[...]
    x = _layernorm(x + y, g3_ref[...], b3_ref[...], eps)

    o_ref[0] = x.astype(o_ref.dtype)


def decoder_layer_block(x, mem, tgt_mask, pad_bias, p, nhead, eps):
    B, T, E = x.shape
    S = mem.shape[1]
    H = nhead
    dh = E // H
    F = p["w1"].shape[1]
    scale = 1.0 / math.sqrt(dh)
    has_pad = pad_bias is not None

    const2 = lambda b: (0, 0)
    const3 = lambda b: (0, 0, 0)

    in_specs = [
        pl.BlockSpec((1, T, E), lambda b: (b, 0, 0)),        # x
        pl.BlockSpec((1, S, E), lambda b: (b, 0, 0)),        # memory
        pl.BlockSpec((T, T), const2),                        # causal mask
    ]
    args = [x, mem, tgt_mask]
    if has_pad:
        in_specs.append(pl.BlockSpec((1, 1, T), lambda b: (b, 0, 0)))
        args.append(pad_bias)

    in_specs += [
        pl.BlockSpec((H, E, 3 * dh), const3),                # sa_wqkv_h
        pl.BlockSpec((H, 1, 3 * dh), const3),                # sa_bqkv_h
        pl.BlockSpec((E, E), const2),                        # sa_wo
        pl.BlockSpec((1, E), const2),                        # sa_bo
        pl.BlockSpec((1, E), const2),                        # norm1_g
        pl.BlockSpec((1, E), const2),                        # norm1_b
        pl.BlockSpec((H, E, dh), const3),                    # ca_wq_h
        pl.BlockSpec((H, 1, dh), const3),                    # ca_bq_h
        pl.BlockSpec((H, E, 2 * dh), const3),                # ca_wkv_h
        pl.BlockSpec((H, 1, 2 * dh), const3),                # ca_bkv_h
        pl.BlockSpec((E, E), const2),                        # ca_wo
        pl.BlockSpec((1, E), const2),                        # ca_bo
        pl.BlockSpec((1, E), const2),                        # norm2_g
        pl.BlockSpec((1, E), const2),                        # norm2_b
        pl.BlockSpec((E, F), const2),                        # w1
        pl.BlockSpec((1, F), const2),                        # b1
        pl.BlockSpec((F, E), const2),                        # w2
        pl.BlockSpec((1, E), const2),                        # b2
        pl.BlockSpec((1, E), const2),                        # norm3_g
        pl.BlockSpec((1, E), const2),                        # norm3_b
    ]
    args += [
        p["sa_wqkv_h"], p["sa_bqkv_h"], p["sa_wo"], p["sa_bo"],
        p["norm1_g"], p["norm1_b"],
        p["ca_wq_h"], p["ca_bq_h"], p["ca_wkv_h"], p["ca_bkv_h"],
        p["ca_wo"], p["ca_bo"], p["norm2_g"], p["norm2_b"],
        p["w1"], p["b1"], p["w2"], p["b2"], p["norm3_g"], p["norm3_b"],
    ]

    return pl.pallas_call(
        functools.partial(_decoder_layer_kernel, nhead=nhead, scale=scale,
                          eps=eps, has_pad=has_pad),
        out_shape=jax.ShapeDtypeStruct((B, T, E), jnp.bfloat16),
        grid=(B,),
        in_specs=in_specs,
        out_specs=pl.BlockSpec((1, T, E), lambda b: (b, 0, 0)),
        compiler_params=pltpu.CompilerParams(dimension_semantics=("parallel",)),
    )(*args)


# ----------------------------------------------------------------------------
# Generator kernel (final LayerNorm fused; LN computed once per row tile)
# ----------------------------------------------------------------------------

def _generator_kernel(x_ref, g_ref, bln_ref, w_ref, b_ref, o_ref, xn_ref, *, eps):
    @pl.when(pl.program_id(1) == 0)
    def _():
        xn = _layernorm(x_ref[...].astype(jnp.float32),
                        g_ref[...], bln_ref[...], eps)
        xn_ref[...] = xn.astype(jnp.bfloat16)

    o_ref[...] = (jnp.dot(xn_ref[...], w_ref[...],
                          preferred_element_type=jnp.float32) + b_ref[...])


def _pick_tile(n, prefs):
    for t in prefs:
        if n % t == 0:
            return t
    return n


def generator_block(x2d, gamma, beta, w, bias, eps):
    M, E = x2d.shape
    V = w.shape[1]
    tm = _pick_tile(M, (512, 256, 128, 64, 32, 16, 8))
    tn = _pick_tile(V, (1024, 512, 256, 128))
    return pl.pallas_call(
        functools.partial(_generator_kernel, eps=eps),
        out_shape=jax.ShapeDtypeStruct((M, V), jnp.float32),
        grid=(M // tm, V // tn),
        in_specs=[
            pl.BlockSpec((tm, E), lambda i, j: (i, 0)),
            pl.BlockSpec((1, E), lambda i, j: (0, 0)),
            pl.BlockSpec((1, E), lambda i, j: (0, 0)),
            pl.BlockSpec((E, tn), lambda i, j: (0, j)),
            pl.BlockSpec((1, tn), lambda i, j: (0, j)),
        ],
        out_specs=pl.BlockSpec((tm, tn), lambda i, j: (i, j)),
        scratch_shapes=[pltpu.VMEM((tm, E), jnp.bfloat16)],
        compiler_params=pltpu.CompilerParams(
            dimension_semantics=("parallel", "arbitrary")),
    )(x2d, gamma, beta, w, bias)


# ----------------------------------------------------------------------------
# Forward pass
# ----------------------------------------------------------------------------

def seq2seq_decoder_forward(params, tgt_input, img_features, tgt_mask,
                            tgt_padding_mask=None):
    """Forward pass of Seq2SeqDecoder (eval mode; dropout = identity)."""
    nhead = params["nhead"]
    eps = params["eps"]
    T, B = tgt_input.shape
    E = params["emb"].shape[1]

    # TokenEmbedding (gather in plain JAX glue) + PositionalEncoding
    tok = params["emb"][tgt_input] * math.sqrt(E)            # (T, B, E) f32
    tgt = tok + params["pos_embedding"][:T]                  # (T, B, E)

    # batch-major, bf16 activations between fused blocks
    x = jnp.transpose(tgt, (1, 0, 2)).astype(jnp.bfloat16)          # (B, T, E)
    mem = jnp.transpose(img_features, (1, 0, 2)).astype(jnp.bfloat16)  # (B, S, E)

    tgt_mask = tgt_mask.astype(jnp.float32)                  # (T, T) additive
    if tgt_padding_mask is not None:                         # (B, T) bool -> additive
        pad_bias = jnp.where(tgt_padding_mask, -1e9, 0.0)
        pad_bias = pad_bias.astype(jnp.float32).reshape(B, 1, T)
    else:
        pad_bias = None

    for p in params["layers"]:
        x = decoder_layer_block(x, mem, tgt_mask, pad_bias, p, nhead, eps)

    # final decoder LayerNorm fused into the generator matmul
    logits = generator_block(x.reshape(B * T, E),
                             params["final_norm_g"], params["final_norm_b"],
                             params["gen_w"], params["gen_b"], eps)
    V = logits.shape[-1]
    return jnp.transpose(logits.reshape(B, T, V), (1, 0, 2))      # (T, B, V)


# ----------------------------------------------------------------------------
# Deterministic parameter initialization
# ----------------------------------------------------------------------------

def init_params(key, d_model, nhead, vocab, num_layers, dim_ff,
                maxlen=64, eps=1e-5):
    E, H = d_model, nhead
    dh = E // H
    std = 0.05
    keys = jax.random.split(key, 2 + 10 * num_layers)

    # PositionalEncoding buffer (maxlen, 1, E), as in the PyTorch module.
    den = jnp.exp(-jnp.arange(0, E, 2, dtype=jnp.float32) * (math.log(10000.0) / E))
    pos = jnp.arange(0, maxlen, dtype=jnp.float32).reshape(maxlen, 1)
    pe = jnp.zeros((maxlen, E), jnp.float32)
    pe = pe.at[:, 0::2].set(jnp.sin(pos * den))
    pe = pe.at[:, 1::2].set(jnp.cos(pos * den))
    pe = pe[:, None, :]

    def w(k, shape):
        # matmul weights stored in bf16 (halves DMA bytes); f32 accumulation.
        return (jax.random.normal(k, shape, jnp.float32) * std).astype(jnp.bfloat16)

    def to_heads(wm):
        # (E, E) -> (H, E, dh): head-major layout for batched per-head matmuls
        return jnp.transpose(wm.reshape(E, H, dh), (1, 0, 2))

    layers = []
    ki = 2
    for _ in range(num_layers):
        ks = keys[ki:ki + 10]
        ki += 10
        wq_sa, wk_sa, wv_sa = w(ks[0], (E, E)), w(ks[1], (E, E)), w(ks[2], (E, E))
        wk_ca, wv_ca = w(ks[5], (E, E)), w(ks[6], (E, E))
        layers.append({
            "sa_wqkv_h": jnp.concatenate(
                [to_heads(wq_sa), to_heads(wk_sa), to_heads(wv_sa)], axis=-1),  # (H,E,3dh)
            "sa_bqkv_h": jnp.zeros((H, 1, 3 * dh), jnp.float32),
            "sa_wo": w(ks[3], (E, E)),
            "sa_bo": jnp.zeros((1, E), jnp.float32),
            "norm1_g": jnp.ones((1, E), jnp.float32),
            "norm1_b": jnp.zeros((1, E), jnp.float32),
            "ca_wq_h": to_heads(w(ks[4], (E, E))),                              # (H,E,dh)
            "ca_bq_h": jnp.zeros((H, 1, dh), jnp.float32),
            "ca_wkv_h": jnp.concatenate(
                [to_heads(wk_ca), to_heads(wv_ca)], axis=-1),                   # (H,E,2dh)
            "ca_bkv_h": jnp.zeros((H, 1, 2 * dh), jnp.float32),
            "ca_wo": w(ks[7], (E, E)),
            "ca_bo": jnp.zeros((1, E), jnp.float32),
            "norm2_g": jnp.ones((1, E), jnp.float32),
            "norm2_b": jnp.zeros((1, E), jnp.float32),
            "w1": w(ks[8], (E, dim_ff)),
            "b1": jnp.zeros((1, dim_ff), jnp.float32),
            "w2": w(ks[9], (dim_ff, E)),
            "b2": jnp.zeros((1, E), jnp.float32),
            "norm3_g": jnp.ones((1, E), jnp.float32),
            "norm3_b": jnp.zeros((1, E), jnp.float32),
        })

    return {
        "nhead": nhead,
        "eps": eps,
        "emb": jax.random.normal(keys[0], (vocab, E), jnp.float32) * std,
        "pos_embedding": pe,
        "layers": layers,
        "final_norm_g": jnp.ones((1, E), jnp.float32),
        "final_norm_b": jnp.zeros((1, E), jnp.float32),
        "gen_w": w(keys[1], (E, vocab)),
        "gen_b": jnp.zeros((1, vocab), jnp.float32),
    }


# ----------------------------------------------------------------------------
# Main
# ----------------------------------------------------------------------------

if __name__ == "__main__":
    d_model, nhead, vocab, num_layers, dim_ff = 32, 4, 64, 2, 64
    T, S, B = 8, 8, 2

    key = jax.random.PRNGKey(0)
    kp, kt, ki = jax.random.split(key, 3)

    params = init_params(kp, d_model, nhead, vocab, num_layers, dim_ff)

    tgt_input = jax.random.randint(kt, (T, B), 0, vocab, dtype=jnp.int32)
    img_features = jax.random.normal(ki, (S, B, d_model), jnp.float32)
    # causal mask (like nn.Transformer.generate_square_subsequent_mask), -1e9 form
    tgt_mask = jnp.where(
        jnp.arange(T)[None, :] > jnp.arange(T)[:, None], -1e9, 0.0
    ).astype(jnp.float32)

    # no-padding path (the common case: no pad-bias DMA / add in the kernel)
    out = seq2seq_decoder_forward(params, tgt_input, img_features, tgt_mask,
                                  tgt_padding_mask=None)
    out = jax.block_until_ready(out)
    assert out.shape == (T, B, vocab), out.shape
    assert bool(jnp.all(jnp.isfinite(out)))

    # padding-mask variant (exercises the has_pad kernel)
    pad_mask = jnp.zeros((B, T), dtype=bool).at[:, T - 2:].set(True)
    out_pad = seq2seq_decoder_forward(params, tgt_input, img_features, tgt_mask,
                                      tgt_padding_mask=pad_mask)
    out_pad = jax.block_until_ready(out_pad)
    assert out_pad.shape == (T, B, vocab), out_pad.shape
    assert bool(jnp.all(jnp.isfinite(out_pad)))

    print("KERNEL_OK")
</pallas_src>

<mosaic_0001>
module attributes {stable_mosaic.version = 11 : i64} {
  func.func @_decoder_layer_kernel(%arg0: i32, %arg1: memref<1x8x32xbf16, #tpu.memory_space<vmem>>, %arg2: memref<1x8x32xbf16, #tpu.memory_space<vmem>>, %arg3: memref<8x8xf32, #tpu.memory_space<vmem>>, %arg4: memref<4x32x24xbf16, #tpu.memory_space<vmem>>, %arg5: memref<4x1x24xf32, #tpu.memory_space<vmem>>, %arg6: memref<32x32xbf16, #tpu.memory_space<vmem>>, %arg7: memref<1x32xf32, #tpu.memory_space<vmem>>, %arg8: memref<1x32xf32, #tpu.memory_space<vmem>>, %arg9: memref<1x32xf32, #tpu.memory_space<vmem>>, %arg10: memref<4x32x8xbf16, #tpu.memory_space<vmem>>, %arg11: memref<4x1x8xf32, #tpu.memory_space<vmem>>, %arg12: memref<4x32x16xbf16, #tpu.memory_space<vmem>>, %arg13: memref<4x1x16xf32, #tpu.memory_space<vmem>>, %arg14: memref<32x32xbf16, #tpu.memory_space<vmem>>, %arg15: memref<1x32xf32, #tpu.memory_space<vmem>>, %arg16: memref<1x32xf32, #tpu.memory_space<vmem>>, %arg17: memref<1x32xf32, #tpu.memory_space<vmem>>, %arg18: memref<32x64xbf16, #tpu.memory_space<vmem>>, %arg19: memref<1x64xf32, #tpu.memory_space<vmem>>, %arg20: memref<64x32xbf16, #tpu.memory_space<vmem>>, %arg21: memref<1x32xf32, #tpu.memory_space<vmem>>, %arg22: memref<1x32xf32, #tpu.memory_space<vmem>>, %arg23: memref<1x32xf32, #tpu.memory_space<vmem>>, %arg24: memref<1x8x32xbf16, #tpu.memory_space<vmem>>) attributes {dimension_semantics = [#tpu.dimension_semantics<parallel>], iteration_bounds = array<i64: 2>, scalar_prefetch = 0 : i64, scratch_operands = 0 : i64, tpu.core_type = #tpu.core_type<tc>, window_params = [{transform_indices = @transform_0, window_bounds = array<i64: 1, 8, 32>}, {transform_indices = @transform_1, window_bounds = array<i64: 1, 8, 32>}, {pipeline_mode = #tpu.pipeline_mode<synchronous>, transform_indices = @transform_2, window_bounds = array<i64: 8, 8>}, {pipeline_mode = #tpu.pipeline_mode<synchronous>, transform_indices = @transform_3, window_bounds = array<i64: 4, 32, 24>}, {pipeline_mode = #tpu.pipeline_mode<synchronous>, transform_indices = @transform_4, window_bounds = array<i64: 4, 1, 24>}, {pipeline_mode = #tpu.pipeline_mode<synchronous>, transform_indices = @transform_5, window_bounds = array<i64: 32, 32>}, {pipeline_mode = #tpu.pipeline_mode<synchronous>, transform_indices = @transform_6, window_bounds = array<i64: 1, 32>}, {pipeline_mode = #tpu.pipeline_mode<synchronous>, transform_indices = @transform_7, window_bounds = array<i64: 1, 32>}, {pipeline_mode = #tpu.pipeline_mode<synchronous>, transform_indices = @transform_8, window_bounds = array<i64: 1, 32>}, {pipeline_mode = #tpu.pipeline_mode<synchronous>, transform_indices = @transform_9, window_bounds = array<i64: 4, 32, 8>}, {pipeline_mode = #tpu.pipeline_mode<synchronous>, transform_indices = @transform_10, window_bounds = array<i64: 4, 1, 8>}, {pipeline_mode = #tpu.pipeline_mode<synchronous>, transform_indices = @transform_11, window_bounds = array<i64: 4, 32, 16>}, {pipeline_mode = #tpu.pipeline_mode<synchronous>, transform_indices = @transform_12, window_bounds = array<i64: 4, 1, 16>}, {pipeline_mode = #tpu.pipeline_mode<synchronous>, transform_indices = @transform_13, window_bounds = array<i64: 32, 32>}, {pipeline_mode = #tpu.pipeline_mode<synchronous>, transform_indices = @transform_14, window_bounds = array<i64: 1, 32>}, {pipeline_mode = #tpu.pipeline_mode<synchronous>, transform_indices = @transform_15, window_bounds = array<i64: 1, 32>}, {pipeline_mode = #tpu.pipeline_mode<synchronous>, transform_indices = @transform_16, window_bounds = array<i64: 1, 32>}, {pipeline_mode = #tpu.pipeline_mode<synchronous>, transform_indices = @transform_17, window_bounds = array<i64: 32, 64>}, {pipeline_mode = #tpu.pipeline_mode<synchronous>, transform_indices = @transform_18, window_bounds = array<i64: 1, 64>}, {pipeline_mode = #tpu.pipeline_mode<synchronous>, transform_indices = @transform_19, window_bounds = array<i64: 64, 32>}, {pipeline_mode = #tpu.pipeline_mode<synchronous>, transform_indices = @transform_20, window_bounds = array<i64: 1, 32>}, {pipeline_mode = #tpu.pipeline_mode<synchronous>, transform_indices = @transform_21, window_bounds = array<i64: 1, 32>}, {pipeline_mode = #tpu.pipeline_mode<synchronous>, transform_indices = @transform_22, window_bounds = array<i64: 1, 32>}, {transform_indices = @transform_23, window_bounds = array<i64: 1, 8, 32>}]} {
    %c0 = arith.constant 0 : index
    %c0_0 = arith.constant 0 : index
    %c0_1 = arith.constant 0 : index
    %0 = vector.load %arg1[%c0, %c0_0, %c0_1] : memref<1x8x32xbf16, #tpu.memory_space<vmem>>, vector<1x8x32xbf16>
    %1 = vector.shape_cast %0 : vector<1x8x32xbf16> to vector<8x32xbf16>
    %2 = arith.extf %1 : vector<8x32xbf16> to vector<8x32xf32>
    %c0_2 = arith.constant 0 : index
    %c0_3 = arith.constant 0 : index
    %c0_4 = arith.constant 0 : index
    %3 = vector.load %arg2[%c0_2, %c0_3, %c0_4] : memref<1x8x32xbf16, #tpu.memory_space<vmem>>, vector<1x8x32xbf16>
    %4 = vector.shape_cast %3 : vector<1x8x32xbf16> to vector<8x32xbf16>
    %c0_5 = arith.constant 0 : index
    %c0_6 = arith.constant 0 : index
    %5 = vector.load %arg3[%c0_5, %c0_6] : memref<8x8xf32, #tpu.memory_space<vmem>>, vector<8x8xf32>
    %6 = arith.truncf %2 : vector<8x32xf32> to vector<8x32xbf16>
    %7 = vector.shape_cast %6 : vector<8x32xbf16> to vector<1x8x32xbf16>
    %8 = vector.shape_cast %7 : vector<1x8x32xbf16> to vector<1x8x32xbf16>
    %9 = vector.broadcast %8 : vector<1x8x32xbf16> to vector<4x8x32xbf16>
    %c0_7 = arith.constant 0 : index
    %c0_8 = arith.constant 0 : index
    %c0_9 = arith.constant 0 : index
    %10 = vector.load %arg4[%c0_7, %c0_8, %c0_9] : memref<4x32x24xbf16, #tpu.memory_space<vmem>>, vector<4x32x24xbf16>
    %cst = arith.constant dense<0.000000e+00> : vector<4x8x24xf32>
    %11 = tpu.matmul %9, %10, %cst {dimension_numbers = #tpu.dot_dimension_numbers<[2], [1], [1], [2], [0, 0, 0, 1, 1, 2], [0], [0]>} : vector<4x8x32xbf16>, vector<4x32x24xbf16>, vector<4x8x24xf32> -> vector<4x8x24xf32>
    %c0_10 = arith.constant 0 : index
    %c0_11 = arith.constant 0 : index
    %c0_12 = arith.constant 0 : index
    %12 = vector.load %arg5[%c0_10, %c0_11, %c0_12] : memref<4x1x24xf32, #tpu.memory_space<vmem>>, vector<4x1x24xf32>
    %13 = vector.broadcast %12 : vector<4x1x24xf32> to vector<4x8x24xf32>
    %14 = arith.addf %11, %13 : vector<4x8x24xf32>
    %15 = vector.extract_strided_slice %14 {offsets = [0, 0, 0], sizes = [4, 8, 8], strides = [1, 1, 1]} : vector<4x8x24xf32> to vector<4x8x8xf32>
    %16 = arith.truncf %15 : vector<4x8x8xf32> to vector<4x8x8xbf16>
    %17 = vector.extract_strided_slice %14 {offsets = [0, 0, 8], sizes = [4, 8, 8], strides = [1, 1, 1]} : vector<4x8x24xf32> to vector<4x8x8xf32>
    %18 = arith.truncf %17 : vector<4x8x8xf32> to vector<4x8x8xbf16>
    %19 = vector.extract_strided_slice %14 {offsets = [0, 0, 16], sizes = [4, 8, 8], strides = [1, 1, 1]} : vector<4x8x24xf32> to vector<4x8x8xf32>
    %20 = arith.truncf %19 : vector<4x8x8xf32> to vector<4x8x8xbf16>
    %cst_13 = arith.constant dense<0.000000e+00> : vector<4x8x8xf32>
    %21 = tpu.matmul %16, %18, %cst_13 {dimension_numbers = #tpu.dot_dimension_numbers<[2], [2], [1], [1], [0, 0, 0, 1, 1, 1], [0], [0]>} : vector<4x8x8xbf16>, vector<4x8x8xbf16>, vector<4x8x8xf32> -> vector<4x8x8xf32>
    %cst_14 = arith.constant 0.353553385 : f32
    %22 = vector.broadcast %cst_14 : f32 to vector<4x8x8xf32>
    %23 = arith.mulf %21, %22 : vector<4x8x8xf32>
    %24 = vector.shape_cast %5 : vector<8x8xf32> to vector<1x8x8xf32>
    %25 = vector.broadcast %24 : vector<1x8x8xf32> to vector<4x8x8xf32>
    %26 = arith.addf %23, %25 : vector<4x8x8xf32>
    %cst_15 = arith.constant dense<0xFF800000> : vector<4x8xf32>
    %27 = vector.multi_reduction <maximumf>, %26, %cst_15 [2] : vector<4x8x8xf32> to vector<4x8xf32>
    %28 = vector.shape_cast %27 : vector<4x8xf32> to vector<4x8x1xf32>
    %29 = vector.broadcast %28 : vector<4x8x1xf32> to vector<4x8x8xf32>
    %30 = arith.subf %26, %29 : vector<4x8x8xf32>
    %31 = math.exp %30 : vector<4x8x8xf32>
    %cst_16 = arith.constant dense<0.000000e+00> : vector<4x8xf32>
    %32 = vector.multi_reduction <add>, %31, %cst_16 [2] : vector<4x8x8xf32> to vector<4x8xf32>
    %33 = vector.shape_cast %32 : vector<4x8xf32> to vector<4x8x1xf32>
    %34 = tpu.reciprocal %33 {approx = true} : vector<4x8x1xf32> -> vector<4x8x1xf32>
    %35 = vector.broadcast %34 : vector<4x8x1xf32> to vector<4x8x8xf32>
    %36 = arith.mulf %31, %35 : vector<4x8x8xf32>
    %37 = arith.truncf %36 : vector<4x8x8xf32> to vector<4x8x8xbf16>
    %cst_17 = arith.constant dense<0.000000e+00> : vector<4x8x8xf32>
    %38 = tpu.matmul %37, %20, %cst_17 {dimension_numbers = #tpu.dot_dimension_numbers<[2], [1], [1], [2], [0, 0, 0, 1, 1, 2], [0], [0]>} : vector<4x8x8xbf16>, vector<4x8x8xbf16>, vector<4x8x8xf32> -> vector<4x8x8xf32>
    %39 = vector.extract_strided_slice %38 {offsets = [0, 0, 0], sizes = [1, 8, 8], strides = [1, 1, 1]} : vector<4x8x8xf32> to vector<1x8x8xf32>
    %40 = vector.shape_cast %39 : vector<1x8x8xf32> to vector<8x8xf32>
    %41 = vector.extract_strided_slice %38 {offsets = [1, 0, 0], sizes = [1, 8, 8], strides = [1, 1, 1]} : vector<4x8x8xf32> to vector<1x8x8xf32>
    %42 = vector.shape_cast %41 : vector<1x8x8xf32> to vector<8x8xf32>
    %43 = vector.extract_strided_slice %38 {offsets = [2, 0, 0], sizes = [1, 8, 8], strides = [1, 1, 1]} : vector<4x8x8xf32> to vector<1x8x8xf32>
    %44 = vector.shape_cast %43 : vector<1x8x8xf32> to vector<8x8xf32>
    %45 = vector.extract_strided_slice %38 {offsets = [3, 0, 0], sizes = [1, 8, 8], strides = [1, 1, 1]} : vector<4x8x8xf32> to vector<1x8x8xf32>
    %46 = vector.shape_cast %45 : vector<1x8x8xf32> to vector<8x8xf32>
    %47 = tpu.concatenate %40, %42, %44, %46 in 1 : vector<8x8xf32>, vector<8x8xf32>, vector<8x8xf32>, vector<8x8xf32> -> vector<8x32xf32>
    %48 = arith.truncf %47 : vector<8x32xf32> to vector<8x32xbf16>
    %c0_18 = arith.constant 0 : index
    %c0_19 = arith.constant 0 : index
    %49 = vector.load %arg6[%c0_18, %c0_19] : memref<32x32xbf16, #tpu.memory_space<vmem>>, vector<32x32xbf16>
    %cst_20 = arith.constant dense<0.000000e+00> : vector<8x32xf32>
    %50 = tpu.matmul %48, %49, %cst_20 {dimension_numbers = #tpu.dot_dimension_numbers<[1], [0], [0], [1], [0, 0, 1, 1], [], []>} : vector<8x32xbf16>, vector<32x32xbf16>, vector<8x32xf32> -> vector<8x32xf32>
    %c0_21 = arith.constant 0 : index
    %c0_22 = arith.constant 0 : index
    %51 = vector.load %arg7[%c0_21, %c0_22] : memref<1x32xf32, #tpu.memory_space<vmem>>, vector<1x32xf32>
    %52 = vector.broadcast %51 : vector<1x32xf32> to vector<8x32xf32>
    %53 = arith.addf %50, %52 : vector<8x32xf32>
    %54 = arith.addf %2, %53 : vector<8x32xf32>
    %c0_23 = arith.constant 0 : index
    %c0_24 = arith.constant 0 : index
    %55 = vector.load %arg8[%c0_23, %c0_24] : memref<1x32xf32, #tpu.memory_space<vmem>>, vector<1x32xf32>
    %c0_25 = arith.constant 0 : index
    %c0_26 = arith.constant 0 : index
    %56 = vector.load %arg9[%c0_25, %c0_26] : memref<1x32xf32, #tpu.memory_space<vmem>>, vector<1x32xf32>
    %cst_27 = arith.constant dense<0.000000e+00> : vector<8xf32>
    %57 = vector.multi_reduction <add>, %54, %cst_27 [1] : vector<8x32xf32> to vector<8xf32>
    %58 = vector.shape_cast %57 : vector<8xf32> to vector<8x1xf32>
    %cst_28 = arith.constant 3.200000e+01 : f32
    %59 = vector.broadcast %cst_28 : f32 to vector<8x1xf32>
    %60 = arith.divf %58, %59 : vector<8x1xf32>
    %61 = vector.broadcast %60 : vector<8x1xf32> to vector<8x32xf32>
    %62 = arith.subf %54, %61 : vector<8x32xf32>
    %63 = arith.mulf %62, %62 : vector<8x32xf32>
    %cst_29 = arith.constant dense<0.000000e+00> : vector<8xf32>
    %64 = vector.multi_reduction <add>, %63, %cst_29 [1] : vector<8x32xf32> to vector<8xf32>
    %65 = vector.shape_cast %64 : vector<8xf32> to vector<8x1xf32>
    %cst_30 = arith.constant 3.200000e+01 : f32
    %66 = vector.broadcast %cst_30 : f32 to vector<8x1xf32>
    %67 = arith.divf %65, %66 : vector<8x1xf32>
    %cst_31 = arith.constant 9.99999974E-6 : f32
    %68 = vector.broadcast %cst_31 : f32 to vector<8x1xf32>
    %69 = arith.addf %67, %68 : vector<8x1xf32>
    %70 = math.rsqrt %69 : vector<8x1xf32>
    %71 = vector.broadcast %70 : vector<8x1xf32> to vector<8x32xf32>
    %72 = arith.mulf %62, %71 : vector<8x32xf32>
    %73 = vector.broadcast %55 : vector<1x32xf32> to vector<8x32xf32>
    %74 = arith.mulf %72, %73 : vector<8x32xf32>
    %75 = vector.broadcast %56 : vector<1x32xf32> to vector<8x32xf32>
    %76 = arith.addf %74, %75 : vector<8x32xf32>
    %77 = arith.truncf %76 : vector<8x32xf32> to vector<8x32xbf16>
    %78 = vector.shape_cast %77 : vector<8x32xbf16> to vector<1x8x32xbf16>
    %79 = vector.shape_cast %78 : vector<1x8x32xbf16> to vector<1x8x32xbf16>
    %80 = vector.broadcast %79 : vector<1x8x32xbf16> to vector<4x8x32xbf16>
    %c0_32 = arith.constant 0 : index
    %c0_33 = arith.constant 0 : index
    %c0_34 = arith.constant 0 : index
    %81 = vector.load %arg10[%c0_32, %c0_33, %c0_34] : memref<4x32x8xbf16, #tpu.memory_space<vmem>>, vector<4x32x8xbf16>
    %cst_35 = arith.constant dense<0.000000e+00> : vector<4x8x8xf32>
    %82 = tpu.matmul %80, %81, %cst_35 {dimension_numbers = #tpu.dot_dimension_numbers<[2], [1], [1], [2], [0, 0, 0, 1, 1, 2], [0], [0]>} : vector<4x8x32xbf16>, vector<4x32x8xbf16>, vector<4x8x8xf32> -> vector<4x8x8xf32>
    %c0_36 = arith.constant 0 : index
    %c0_37 = arith.constant 0 : index
    %c0_38 = arith.constant 0 : index
    %83 = vector.load %arg11[%c0_36, %c0_37, %c0_38] : memref<4x1x8xf32, #tpu.memory_space<vmem>>, vector<4x1x8xf32>
    %84 = vector.broadcast %83 : vector<4x1x8xf32> to vector<4x8x8xf32>
    %85 = arith.addf %82, %84 : vector<4x8x8xf32>
    %86 = arith.truncf %85 : vector<4x8x8xf32> to vector<4x8x8xbf16>
    %87 = vector.shape_cast %4 : vector<8x32xbf16> to vector<1x8x32xbf16>
    %88 = vector.shape_cast %87 : vector<1x8x32xbf16> to vector<1x8x32xbf16>
    %89 = vector.broadcast %88 : vector<1x8x32xbf16> to vector<4x8x32xbf16>
    %c0_39 = arith.constant 0 : index
    %c0_40 = arith.constant 0 : index
    %c0_41 = arith.constant 0 : index
    %90 = vector.load %arg12[%c0_39, %c0_40, %c0_41] : memref<4x32x16xbf16, #tpu.memory_space<vmem>>, vector<4x32x16xbf16>
    %cst_42 = arith.constant dense<0.000000e+00> : vector<4x8x16xf32>
    %91 = tpu.matmul %89, %90, %cst_42 {dimension_numbers = #tpu.dot_dimension_numbers<[2], [1], [1], [2], [0, 0, 0, 1, 1, 2], [0], [0]>} : vector<4x8x32xbf16>, vector<4x32x16xbf16>, vector<4x8x16xf32> -> vector<4x8x16xf32>
    %c0_43 = arith.constant 0 : index
    %c0_44 = arith.constant 0 : index
    %c0_45 = arith.constant 0 : index
    %92 = vector.load %arg13[%c0_43, %c0_44, %c0_45] : memref<4x1x16xf32, #tpu.memory_space<vmem>>, vector<4x1x16xf32>
    %93 = vector.broadcast %92 : vector<4x1x16xf32> to vector<4x8x16xf32>
    %94 = arith.addf %91, %93 : vector<4x8x16xf32>
    %95 = vector.extract_strided_slice %94 {offsets = [0, 0, 0], sizes = [4, 8, 8], strides = [1, 1, 1]} : vector<4x8x16xf32> to vector<4x8x8xf32>
    %96 = arith.truncf %95 : vector<4x8x8xf32> to vector<4x8x8xbf16>
    %97 = vector.extract_strided_slice %94 {offsets = [0, 0, 8], sizes = [4, 8, 8], strides = [1, 1, 1]} : vector<4x8x16xf32> to vector<4x8x8xf32>
    %98 = arith.truncf %97 : vector<4x8x8xf32> to vector<4x8x8xbf16>
    %cst_46 = arith.constant dense<0.000000e+00> : vector<4x8x8xf32>
    %99 = tpu.matmul %86, %96, %cst_46 {dimension_numbers = #tpu.dot_dimension_numbers<[2], [2], [1], [1], [0, 0, 0, 1, 1, 1], [0], [0]>} : vector<4x8x8xbf16>, vector<4x8x8xbf16>, vector<4x8x8xf32> -> vector<4x8x8xf32>
    %cst_47 = arith.constant 0.353553385 : f32
    %100 = vector.broadcast %cst_47 : f32 to vector<4x8x8xf32>
    %101 = arith.mulf %99, %100 : vector<4x8x8xf32>
    %cst_48 = arith.constant dense<0xFF800000> : vector<4x8xf32>
    %102 = vector.multi_reduction <maximumf>, %101, %cst_48 [2] : vector<4x8x8xf32> to vector<4x8xf32>
    %103 = vector.shape_cast %102 : vector<4x8xf32> to vector<4x8x1xf32>
    %104 = vector.broadcast %103 : vector<4x8x1xf32> to vector<4x8x8xf32>
    %105 = arith.subf %101, %104 : vector<4x8x8xf32>
    %106 = math.exp %105 : vector<4x8x8xf32>
    %cst_49 = arith.constant dense<0.000000e+00> : vector<4x8xf32>
    %107 = vector.multi_reduction <add>, %106, %cst_49 [2] : vector<4x8x8xf32> to vector<4x8xf32>
    %108 = vector.shape_cast %107 : vector<4x8xf32> to vector<4x8x1xf32>
    %109 = tpu.reciprocal %108 {approx = true} : vector<4x8x1xf32> -> vector<4x8x1xf32>
    %110 = vector.broadcast %109 : vector<4x8x1xf32> to vector<4x8x8xf32>
    %111 = arith.mulf %106, %110 : vector<4x8x8xf32>
    %112 = arith.truncf %111 : vector<4x8x8xf32> to vector<4x8x8xbf16>
    %cst_50 = arith.constant dense<0.000000e+00> : vector<4x8x8xf32>
    %113 = tpu.matmul %112, %98, %cst_50 {dimension_numbers = #tpu.dot_dimension_numbers<[2], [1], [1], [2], [0, 0, 0, 1, 1, 2], [0], [0]>} : vector<4x8x8xbf16>, vector<4x8x8xbf16>, vector<4x8x8xf32> -> vector<4x8x8xf32>
    %114 = vector.extract_strided_slice %113 {offsets = [0, 0, 0], sizes = [1, 8, 8], strides = [1, 1, 1]} : vector<4x8x8xf32> to vector<1x8x8xf32>
    %115 = vector.shape_cast %114 : vector<1x8x8xf32> to vector<8x8xf32>
    %116 = vector.extract_strided_slice %113 {offsets = [1, 0, 0], sizes = [1, 8, 8], strides = [1, 1, 1]} : vector<4x8x8xf32> to vector<1x8x8xf32>
    %117 = vector.shape_cast %116 : vector<1x8x8xf32> to vector<8x8xf32>
    %118 = vector.extract_strided_slice %113 {offsets = [2, 0, 0], sizes = [1, 8, 8], strides = [1, 1, 1]} : vector<4x8x8xf32> to vector<1x8x8xf32>
    %119 = vector.shape_cast %118 : vector<1x8x8xf32> to vector<8x8xf32>
    %120 = vector.extract_strided_slice %113 {offsets = [3, 0, 0], sizes = [1, 8, 8], strides = [1, 1, 1]} : vector<4x8x8xf32> to vector<1x8x8xf32>
    %121 = vector.shape_cast %120 : vector<1x8x8xf32> to vector<8x8xf32>
    %122 = tpu.concatenate %115, %117, %119, %121 in 1 : vector<8x8xf32>, vector<8x8xf32>, vector<8x8xf32>, vector<8x8xf32> -> vector<8x32xf32>
    %123 = arith.truncf %122 : vector<8x32xf32> to vector<8x32xbf16>
    %c0_51 = arith.constant 0 : index
    %c0_52 = arith.constant 0 : index
    %124 = vector.load %arg14[%c0_51, %c0_52] : memref<32x32xbf16, #tpu.memory_space<vmem>>, vector<32x32xbf16>
    %cst_53 = arith.constant dense<0.000000e+00> : vector<8x32xf32>
    %125 = tpu.matmul %123, %124, %cst_53 {dimension_numbers = #tpu.dot_dimension_numbers<[1], [0], [0], [1], [0, 0, 1, 1], [], []>} : vector<8x32xbf16>, vector<32x32xbf16>, vector<8x32xf32> -> vector<8x32xf32>
    %c0_54 = arith.constant 0 : index
    %c0_55 = arith.constant 0 : index
    %126 = vector.load %arg15[%c0_54, %c0_55] : memref<1x32xf32, #tpu.memory_space<vmem>>, vector<1x32xf32>
    %127 = vector.broadcast %126 : vector<1x32xf32> to vector<8x32xf32>
    %128 = arith.addf %125, %127 : vector<8x32xf32>
    %129 = arith.addf %76, %128 : vector<8x32xf32>
    %c0_56 = arith.constant 0 : index
    %c0_57 = arith.constant 0 : index
    %130 = vector.load %arg16[%c0_56, %c0_57] : memref<1x32xf32, #tpu.memory_space<vmem>>, vector<1x32xf32>
    %c0_58 = arith.constant 0 : index
    %c0_59 = arith.constant 0 : index
    %131 = vector.load %arg17[%c0_58, %c0_59] : memref<1x32xf32, #tpu.memory_space<vmem>>, vector<1x32xf32>
    %cst_60 = arith.constant dense<0.000000e+00> : vector<8xf32>
    %132 = vector.multi_reduction <add>, %129, %cst_60 [1] : vector<8x32xf32> to vector<8xf32>
    %133 = vector.shape_cast %132 : vector<8xf32> to vector<8x1xf32>
    %cst_61 = arith.constant 3.200000e+01 : f32
    %134 = vector.broadcast %cst_61 : f32 to vector<8x1xf32>
    %135 = arith.divf %133, %134 : vector<8x1xf32>
    %136 = vector.broadcast %135 : vector<8x1xf32> to vector<8x32xf32>
    %137 = arith.subf %129, %136 : vector<8x32xf32>
    %138 = arith.mulf %137, %137 : vector<8x32xf32>
    %cst_62 = arith.constant dense<0.000000e+00> : vector<8xf32>
    %139 = vector.multi_reduction <add>, %138, %cst_62 [1] : vector<8x32xf32> to vector<8xf32>
    %140 = vector.shape_cast %139 : vector<8xf32> to vector<8x1xf32>
    %cst_63 = arith.constant 3.200000e+01 : f32
    %141 = vector.broadcast %cst_63 : f32 to vector<8x1xf32>
    %142 = arith.divf %140, %141 : vector<8x1xf32>
    %cst_64 = arith.constant 9.99999974E-6 : f32
    %143 = vector.broadcast %cst_64 : f32 to vector<8x1xf32>
    %144 = arith.addf %142, %143 : vector<8x1xf32>
    %145 = math.rsqrt %144 : vector<8x1xf32>
    %146 = vector.broadcast %145 : vector<8x1xf32> to vector<8x32xf32>
    %147 = arith.mulf %137, %146 : vector<8x32xf32>
    %148 = vector.broadcast %130 : vector<1x32xf32> to vector<8x32xf32>
    %149 = arith.mulf %147, %148 : vector<8x32xf32>
    %150 = vector.broadcast %131 : vector<1x32xf32> to vector<8x32xf32>
    %151 = arith.addf %149, %150 : vector<8x32xf32>
    %152 = arith.truncf %151 : vector<8x32xf32> to vector<8x32xbf16>
    %c0_65 = arith.constant 0 : index
    %c0_66 = arith.constant 0 : index
    %153 = vector.load %arg18[%c0_65, %c0_66] : memref<32x64xbf16, #tpu.memory_space<vmem>>, vector<32x64xbf16>
    %cst_67 = arith.constant dense<0.000000e+00> : vector<8x64xf32>
    %154 = tpu.matmul %152, %153, %cst_67 {dimension_numbers = #tpu.dot_dimension_numbers<[1], [0], [0], [1], [0, 0, 1, 1], [], []>} : vector<8x32xbf16>, vector<32x64xbf16>, vector<8x64xf32> -> vector<8x64xf32>
    %c0_68 = arith.constant 0 : index
    %c0_69 = arith.constant 0 : index
    %155 = vector.load %arg19[%c0_68, %c0_69] : memref<1x64xf32, #tpu.memory_space<vmem>>, vector<1x64xf32>
    %156 = vector.broadcast %155 : vector<1x64xf32> to vector<8x64xf32>
    %157 = arith.addf %154, %156 : vector<8x64xf32>
    %cst_70 = arith.constant 0.000000e+00 : f32
    %158 = vector.broadcast %cst_70 : f32 to vector<8x64xf32>
    %159 = arith.maximumf %157, %158 : vector<8x64xf32>
    %160 = arith.truncf %159 : vector<8x64xf32> to vector<8x64xbf16>
    %c0_71 = arith.constant 0 : index
    %c0_72 = arith.constant 0 : index
    %161 = vector.load %arg20[%c0_71, %c0_72] : memref<64x32xbf16, #tpu.memory_space<vmem>>, vector<64x32xbf16>
    %cst_73 = arith.constant dense<0.000000e+00> : vector<8x32xf32>
    %162 = tpu.matmul %160, %161, %cst_73 {dimension_numbers = #tpu.dot_dimension_numbers<[1], [0], [0], [1], [0, 0, 1, 1], [], []>} : vector<8x64xbf16>, vector<64x32xbf16>, vector<8x32xf32> -> vector<8x32xf32>
    %c0_74 = arith.constant 0 : index
    %c0_75 = arith.constant 0 : index
    %163 = vector.load %arg21[%c0_74, %c0_75] : memref<1x32xf32, #tpu.memory_space<vmem>>, vector<1x32xf32>
    %164 = vector.broadcast %163 : vector<1x32xf32> to vector<8x32xf32>
    %165 = arith.addf %162, %164 : vector<8x32xf32>
    %166 = arith.addf %151, %165 : vector<8x32xf32>
    %c0_76 = arith.constant 0 : index
    %c0_77 = arith.constant 0 : index
    %167 = vector.load %arg22[%c0_76, %c0_77] : memref<1x32xf32, #tpu.memory_space<vmem>>, vector<1x32xf32>
    %c0_78 = arith.constant 0 : index
    %c0_79 = arith.constant 0 : index
    %168 = vector.load %arg23[%c0_78, %c0_79] : memref<1x32xf32, #tpu.memory_space<vmem>>, vector<1x32xf32>
    %cst_80 = arith.constant dense<0.000000e+00> : vector<8xf32>
    %169 = vector.multi_reduction <add>, %166, %cst_80 [1] : vector<8x32xf32> to vector<8xf32>
    %170 = vector.shape_cast %169 : vector<8xf32> to vector<8x1xf32>
    %cst_81 = arith.constant 3.200000e+01 : f32
    %171 = vector.broadcast %cst_81 : f32 to vector<8x1xf32>
    %172 = arith.divf %170, %171 : vector<8x1xf32>
    %173 = vector.broadcast %172 : vector<8x1xf32> to vector<8x32xf32>
    %174 = arith.subf %166, %173 : vector<8x32xf32>
    %175 = arith.mulf %174, %174 : vector<8x32xf32>
    %cst_82 = arith.constant dense<0.000000e+00> : vector<8xf32>
    %176 = vector.multi_reduction <add>, %175, %cst_82 [1] : vector<8x32xf32> to vector<8xf32>
    %177 = vector.shape_cast %176 : vector<8xf32> to vector<8x1xf32>
    %cst_83 = arith.constant 3.200000e+01 : f32
    %178 = vector.broadcast %cst_83 : f32 to vector<8x1xf32>
    %179 = arith.divf %177, %178 : vector<8x1xf32>
    %cst_84 = arith.constant 9.99999974E-6 : f32
    %180 = vector.broadcast %cst_84 : f32 to vector<8x1xf32>
    %181 = arith.addf %179, %180 : vector<8x1xf32>
    %182 = math.rsqrt %181 : vector<8x1xf32>
    %183 = vector.broadcast %182 : vector<8x1xf32> to vector<8x32xf32>
    %184 = arith.mulf %174, %183 : vector<8x32xf32>
    %185 = vector.broadcast %167 : vector<1x32xf32> to vector<8x32xf32>
    %186 = arith.mulf %184, %185 : vector<8x32xf32>
    %187 = vector.broadcast %168 : vector<1x32xf32> to vector<8x32xf32>
    %188 = arith.addf %186, %187 : vector<8x32xf32>
    %189 = arith.truncf %188 : vector<8x32xf32> to vector<8x32xbf16>
    %c0_85 = arith.constant 0 : index
    %c0_86 = arith.constant 0 : index
    %c0_87 = arith.constant 0 : index
    %190 = vector.load %arg24[%c0_85, %c0_86, %c0_87] : memref<1x8x32xbf16, #tpu.memory_space<vmem>>, vector<1x8x32xbf16>
    %191 = vector.shape_cast %190 : vector<1x8x32xbf16> to vector<8x32xbf16>
    %192 = vector.shape_cast %189 : vector<8x32xbf16> to vector<1x8x32xbf16>
    tpu.vector_store %arg24[%c0_85, %c0_86, %c0_87], %192 {strides = array<i32>} : memref<1x8x32xbf16, #tpu.memory_space<vmem>>, vector<1x8x32xbf16>,
    return
  }
  func.func @transform_0(%arg0: i32) -> (i32, i32, i32) {
    %c0_i32 = arith.constant 0 : i32
    %c0_i32_0 = arith.constant 0 : i32
    %c0_i32_1 = arith.constant 0 : i32
    return %arg0, %c0_i32, %c0_i32_0 : i32, i32, i32
  }
  func.func @transform_1(%arg0: i32) -> (i32, i32, i32) {
    %c0_i32 = arith.constant 0 : i32
    %c0_i32_0 = arith.constant 0 : i32
    %c0_i32_1 = arith.constant 0 : i32
    return %arg0, %c0_i32, %c0_i32_0 : i32, i32, i32
  }
  func.func @transform_2(%arg0: i32) -> (i32, i32) {
    %c0_i32 = arith.constant 0 : i32
    %c0_i32_0 = arith.constant 0 : i32
    %c0_i32_1 = arith.constant 0 : i32
    return %c0_i32, %c0_i32_0 : i32, i32
  }
  func.func @transform_3(%arg0: i32) -> (i32, i32, i32) {
    %c0_i32 = arith.constant 0 : i32
    %c0_i32_0 = arith.constant 0 : i32
    %c0_i32_1 = arith.constant 0 : i32
    %c0_i32_2 = arith.constant 0 : i32
    return %c0_i32, %c0_i32_0, %c0_i32_1 : i32, i32, i32
  }
  func.func @transform_4(%arg0: i32) -> (i32, i32, i32) {
    %c0_i32 = arith.constant 0 : i32
    %c0_i32_0 = arith.constant 0 : i32
    %c0_i32_1 = arith.constant 0 : i32
    %c0_i32_2 = arith.constant 0 : i32
    return %c0_i32, %c0_i32_0, %c0_i32_1 : i32, i32, i32
  }
  func.func @transform_5(%arg0: i32) -> (i32, i32) {
    %c0_i32 = arith.constant 0 : i32
    %c0_i32_0 = arith.constant 0 : i32
    %c0_i32_1 = arith.constant 0 : i32
    return %c0_i32, %c0_i32_0 : i32, i32
  }
  func.func @transform_6(%arg0: i32) -> (i32, i32) {
    %c0_i32 = arith.constant 0 : i32
    %c0_i32_0 = arith.constant 0 : i32
    %c0_i32_1 = arith.constant 0 : i32
    return %c0_i32, %c0_i32_0 : i32, i32
  }
  func.func @transform_7(%arg0: i32) -> (i32, i32) {
    %c0_i32 = arith.constant 0 : i32
    %c0_i32_0 = arith.constant 0 : i32
    %c0_i32_1 = arith.constant 0 : i32
    return %c0_i32, %c0_i32_0 : i32, i32
  }
  func.func @transform_8(%arg0: i32) -> (i32, i32) {
    %c0_i32 = arith.constant 0 : i32
    %c0_i32_0 = arith.constant 0 : i32
    %c0_i32_1 = arith.constant 0 : i32
    return %c0_i32, %c0_i32_0 : i32, i32
  }
  func.func @transform_9(%arg0: i32) -> (i32, i32, i32) {
    %c0_i32 = arith.constant 0 : i32
    %c0_i32_0 = arith.constant 0 : i32
    %c0_i32_1 = arith.constant 0 : i32
    %c0_i32_2 = arith.constant 0 : i32
    return %c0_i32, %c0_i32_0, %c0_i32_1 : i32, i32, i32
  }
  func.func @transform_10(%arg0: i32) -> (i32, i32, i32) {
    %c0_i32 = arith.constant 0 : i32
    %c0_i32_0 = arith.constant 0 : i32
    %c0_i32_1 = arith.constant 0 : i32
    %c0_i32_2 = arith.constant 0 : i32
    return %c0_i32, %c0_i32_0, %c0_i32_1 : i32, i32, i32
  }
  func.func @transform_11(%arg0: i32) -> (i32, i32, i32) {
    %c0_i32 = arith.constant 0 : i32
    %c0_i32_0 = arith.constant 0 : i32
    %c0_i32_1 = arith.constant 0 : i32
    %c0_i32_2 = arith.constant 0 : i32
    return %c0_i32, %c0_i32_0, %c0_i32_1 : i32, i32, i32
  }
  func.func @transform_12(%arg0: i32) -> (i32, i32, i32) {
    %c0_i32 = arith.constant 0 : i32
    %c0_i32_0 = arith.constant 0 : i32
    %c0_i32_1 = arith.constant 0 : i32
    %c0_i32_2 = arith.constant 0 : i32
    return %c0_i32, %c0_i32_0, %c0_i32_1 : i32, i32, i32
  }
  func.func @transform_13(%arg0: i32) -> (i32, i32) {
    %c0_i32 = arith.constant 0 : i32
    %c0_i32_0 = arith.constant 0 : i32
    %c0_i32_1 = arith.constant 0 : i32
    return %c0_i32, %c0_i32_0 : i32, i32
  }
  func.func @transform_14(%arg0: i32) -> (i32, i32) {
    %c0_i32 = arith.constant 0 : i32
    %c0_i32_0 = arith.constant 0 : i32
    %c0_i32_1 = arith.constant 0 : i32
    return %c0_i32, %c0_i32_0 : i32, i32
  }
  func.func @transform_15(%arg0: i32) -> (i32, i32) {
    %c0_i32 = arith.constant 0 : i32
    %c0_i32_0 = arith.constant 0 : i32
    %c0_i32_1 = arith.constant 0 : i32
    return %c0_i32, %c0_i32_0 : i32, i32
  }
  func.func @transform_16(%arg0: i32) -> (i32, i32) {
    %c0_i32 = arith.constant 0 : i32
    %c0_i32_0 = arith.constant 0 : i32
    %c0_i32_1 = arith.constant 0 : i32
    return %c0_i32, %c0_i32_0 : i32, i32
  }
  func.func @transform_17(%arg0: i32) -> (i32, i32) {
    %c0_i32 = arith.constant 0 : i32
    %c0_i32_0 = arith.constant 0 : i32
    %c0_i32_1 = arith.constant 0 : i32
    return %c0_i32, %c0_i32_0 : i32, i32
  }
  func.func @transform_18(%arg0: i32) -> (i32, i32) {
    %c0_i32 = arith.constant 0 : i32
    %c0_i32_0 = arith.constant 0 : i32
    %c0_i32_1 = arith.constant 0 : i32
    return %c0_i32, %c0_i32_0 : i32, i32
  }
  func.func @transform_19(%arg0: i32) -> (i32, i32) {
    %c0_i32 = arith.constant 0 : i32
    %c0_i32_0 = arith.constant 0 : i32
    %c0_i32_1 = arith.constant 0 : i32
    return %c0_i32, %c0_i32_0 : i32, i32
  }
  func.func @transform_20(%arg0: i32) -> (i32, i32) {
    %c0_i32 = arith.constant 0 : i32
    %c0_i32_0 = arith.constant 0 : i32
    %c0_i32_1 = arith.constant 0 : i32
    return %c0_i32, %c0_i32_0 : i32, i32
  }
  func.func @transform_21(%arg0: i32) -> (i32, i32) {
    %c0_i32 = arith.constant 0 : i32
    %c0_i32_0 = arith.constant 0 : i32
    %c0_i32_1 = arith.constant 0 : i32
    return %c0_i32, %c0_i32_0 : i32, i32
  }
  func.func @transform_22(%arg0: i32) -> (i32, i32) {
    %c0_i32 = arith.constant 0 : i32
    %c0_i32_0 = arith.constant 0 : i32
    %c0_i32_1 = arith.constant 0 : i32
    return %c0_i32, %c0_i32_0 : i32, i32
  }
  func.func @transform_23(%arg0: i32) -> (i32, i32, i32) {
    %c0_i32 = arith.constant 0 : i32
    %c0_i32_0 = arith.constant 0 : i32
    %c0_i32_1 = arith.constant 0 : i32
    return %arg0, %c0_i32, %c0_i32_0 : i32, i32, i32
  }
}

</mosaic_0001>

<llo_original>
// kernel: tpu_custom_call.1
$region0: #{tpu_custom_call.1}
  #allocation0 [shape = 'u32[]', space=smem, size = 0x4, offset = 0x4, fixed_abs, tag = 'smem constant byte address 0x4 - core index']
  #allocation1 [shape = 'u32[144,128]{1,0:T(1,128)}', space=vmem, size = 0x12000, scoped, tag = 'internal scratch']
  %s0 = inlined_call_operand.vmem [shape: bf16[2,8,32], index: 0, kind: input, shape index: {}]
  %s1 = inlined_call_operand.vmem [shape: bf16[2,8,32], index: 1, kind: input, shape index: {}]
  %s2 = inlined_call_operand.vmem [shape: f32[8,8], index: 2, kind: input, shape index: {}]
  %s3 = inlined_call_operand.vmem [shape: bf16[4,32,24], index: 3, kind: input, shape index: {}]
  %s4 = inlined_call_operand.vmem [shape: f32[4,1,24], index: 4, kind: input, shape index: {}]
  %s5 = inlined_call_operand.vmem [shape: bf16[32,32], index: 5, kind: input, shape index: {}]
  %s6 = inlined_call_operand.vmem [shape: f32[1,32], index: 6, kind: input, shape index: {}]
  %s7 = inlined_call_operand.vmem [shape: f32[1,32], index: 7, kind: input, shape index: {}]
  %s8 = inlined_call_operand.vmem [shape: f32[1,32], index: 8, kind: input, shape index: {}]
  %s9 = inlined_call_operand.vmem [shape: bf16[4,32,8], index: 9, kind: input, shape index: {}]
  %s10 = inlined_call_operand.vmem [shape: f32[4,1,8], index: 10, kind: input, shape index: {}]
  %s11 = inlined_call_operand.vmem [shape: bf16[4,32,16], index: 11, kind: input, shape index: {}]
  %s12 = inlined_call_operand.vmem [shape: f32[4,1,16], index: 12, kind: input, shape index: {}]
  %s13 = inlined_call_operand.vmem [shape: bf16[32,32], index: 13, kind: input, shape index: {}]
  %s14 = inlined_call_operand.vmem [shape: f32[1,32], index: 14, kind: input, shape index: {}]
  %s15 = inlined_call_operand.vmem [shape: f32[1,32], index: 15, kind: input, shape index: {}]
  %s16 = inlined_call_operand.vmem [shape: f32[1,32], index: 16, kind: input, shape index: {}]
  %s17 = inlined_call_operand.vmem [shape: bf16[32,64], index: 17, kind: input, shape index: {}]
  %s18 = inlined_call_operand.vmem [shape: f32[1,64], index: 18, kind: input, shape index: {}]
  %s19 = inlined_call_operand.vmem [shape: bf16[64,32], index: 19, kind: input, shape index: {}]
  %s20 = inlined_call_operand.vmem [shape: f32[1,32], index: 20, kind: input, shape index: {}]
  %s21 = inlined_call_operand.vmem [shape: f32[1,32], index: 21, kind: input, shape index: {}]
  %s22 = inlined_call_operand.vmem [shape: f32[1,32], index: 22, kind: input, shape index: {}]
  %s23 = inlined_call_operand.hbm [shape: bf16[2,8,32], index: 23, kind: output, shape index: {}]
  %s24 = sld [smem:[#allocation0]]
  $region125: #{tpu_custom_call.1} parent=0
    _
  %s26 = ssub.s32 1, %s24
  %s27 = scalar_select 0, %s26, %s24
  $region1: #{tpu_custom_call.1} parent=0
    #allocation2 [shape = 'u8[4096]{0}', space=vmem, size = 0x1000, scoped, tag = 'output window, operand 0']
    #allocation3 [shape = 's32[2]{0}', space=sflag, size = 0x8, scoped, tag = 'scoped memory for tpu_custom_call.1']
    %28 = vsyncpa [#allocation3], 0
    %s29 = scalar_lea.sflag [#allocation3], 1
    %30 = vsyncpa %s29, 0
    loop: start=0, step=1, limit=4
    $region2: #{tpu_custom_call.1} parent=1 // loop_pre_header
      _
    $region3: #{tpu_custom_call.1} parent=1 // loop_header
      %s32 = sphi 0, %s36
      %p33 = scmp.ge.s32.totalorder %s32, 4
      %s42 = sphi 0, %s44
      %s45 = sphi 0, %s42
      %s46 = sphi 0, %s45
      %s62 = sphi 0, %s46
      %s68 = sphi 0, %s70
      %s71 = sphi 0, %s68
      %s72 = sphi 0, %s71
      %s88 = sphi 0, %s72
      %s92 = sphi 0, %s92
      %s94 = sphi 0, %s92
      %s95 = sphi 0, %s94
      %s109 = sphi 0, %s95
      %s113 = sphi 0, %s113
      %s115 = sphi 0, %s113
      %s116 = sphi 0, %s115
      %s130 = sphi 0, %s116
      %s134 = sphi 0, %s134
      %s136 = sphi 0, %s134
      %s137 = sphi 0, %s136
      %s151 = sphi 0, %s137
      %s155 = sphi 0, %s155
      %s157 = sphi 0, %s155
      %s158 = sphi 0, %s157
      %s172 = sphi 0, %s158
      %s176 = sphi 0, %s176
      %s178 = sphi 0, %s176
      %s179 = sphi 0, %s178
      %s193 = sphi 0, %s179
      %s197 = sphi 0, %s197
      %s199 = sphi 0, %s197
      %s200 = sphi 0, %s199
      %s214 = sphi 0, %s200
      %s218 = sphi 0, %s218
      %s220 = sphi 0, %s218
      %s221 = sphi 0, %s220
      %s235 = sphi 0, %s221
      %s239 = sphi 0, %s239
      %s241 = sphi 0, %s239
      %s242 = sphi 0, %s241
      %s256 = sphi 0, %s242
      %s260 = sphi 0, %s260
      %s262 = sphi 0, %s260
      %s263 = sphi 0, %s262
      %s277 = sphi 0, %s263
      %s281 = sphi 0, %s281
      %s283 = sphi 0, %s281
      %s284 = sphi 0, %s283
      %s298 = sphi 0, %s284
      %s302 = sphi 0, %s302
      %s304 = sphi 0, %s302
      %s305 = sphi 0, %s304
      %s319 = sphi 0, %s305
      %s323 = sphi 0, %s323
      %s325 = sphi 0, %s323
      %s326 = sphi 0, %s325
      %s340 = sphi 0, %s326
      %s344 = sphi 0, %s344
      %s346 = sphi 0, %s344
      %s347 = sphi 0, %s346
      %s361 = sphi 0, %s347
      %s365 = sphi 0, %s365
      %s367 = sphi 0, %s365
      %s368 = sphi 0, %s367
      %s382 = sphi 0, %s368
      %s386 = sphi 0, %s386
      %s388 = sphi 0, %s386
      %s389 = sphi 0, %s388
      %s403 = sphi 0, %s389
      %s407 = sphi 0, %s407
      %s409 = sphi 0, %s407
      %s410 = sphi 0, %s409
      %s424 = sphi 0, %s410
      %s428 = sphi 0, %s428
      %s430 = sphi 0, %s428
      %s431 = sphi 0, %s430
      %s445 = sphi 0, %s431
      %s449 = sphi 0, %s449
      %s451 = sphi 0, %s449
      %s452 = sphi 0, %s451
      %s466 = sphi 0, %s452
      %s470 = sphi 0, %s470
      %s472 = sphi 0, %s470
      %s473 = sphi 0, %s472
      %s487 = sphi 0, %s473
      %s491 = sphi 0, %s491
      %s493 = sphi 0, %s491
      %s494 = sphi 0, %s493
      %s508 = sphi 0, %s494
      %s512 = sphi 0, %s512
      %s514 = sphi 0, %s512
      %s515 = sphi 0, %s514
      %s529 = sphi 0, %s515
      %s535 = sphi 0, %s537
      %s538 = sphi 0, %s535
      %s539 = sphi 0, %s538
      %s555 = sphi 0, %s539
    $region4: #{tpu_custom_call.1} parent=1 // loop_header_branch
      %35 = sbr.rel (%p33) target = $region8
    $region5: #{tpu_custom_call.1} parent=1 // loop_body
      %s37 = ssub.s32 %s32, 1
      %s38 = ssub.s32 %s32, 2
      %s39 = sadd.s32 %s32, 1
      %s40 = ssub.s32 %s32, %s39
      %p41 = scmp.eq.s32.totalorder %s40, 0
      %s43 = sadd.s32 %s42, 1
      %s44 = scalar_select %p41, %s42, %s43
      %p47 = pneg %p41
      %p48 = scmp.eq.s32.totalorder %s32, 1
      %p49 = por %p47, %p48
      %p50 = scmp.ne.s32.totalorder %s42, %s45
      %p51 = scmp.eq.s32.totalorder %s32, 0
      %p52 = por %p50, %p51
      %p53 = scmp.ne.s32.totalorder %s42, %s45
      %p54 = scmp.eq.s32.totalorder %s37, 1
      %p55 = por %p53, %p54
      %p56 = scmp.ne.s32.totalorder %s45, %s46
      %p57 = scmp.eq.s32.totalorder %s37, 0
      %p58 = por %p56, %p57
      %p59 = scmp.ne.s32.totalorder %s45, %s46
      %p60 = scmp.eq.s32.totalorder %s38, 1
      %p61 = por %p59, %p60
      %p63 = scmp.ne.s32.totalorder %s46, %s62
      %p64 = scmp.eq.s32.totalorder %s38, 0
      %p65 = por %p63, %p64
      %s66 = ssub.s32 %s32, %s39
      %p67 = scmp.eq.s32.totalorder %s66, 0
      %s69 = sadd.s32 %s68, 1
      %s70 = scalar_select %p67, %s68, %s69
      %p73 = pneg %p67
      %p74 = scmp.eq.s32.totalorder %s32, 1
      %p75 = por %p73, %p74
      %p76 = scmp.ne.s32.totalorder %s68, %s71
      %p77 = scmp.eq.s32.totalorder %s32, 0
      %p78 = por %p76, %p77
      %p79 = scmp.ne.s32.totalorder %s68, %s71
      %p80 = scmp.eq.s32.totalorder %s37, 1
      %p81 = por %p79, %p80
      %p82 = scmp.ne.s32.totalorder %s71, %s72
      %p83 = scmp.eq.s32.totalorder %s37, 0
      %p84 = por %p82, %p83
      %p85 = scmp.ne.s32.totalorder %s71, %s72
      %p86 = scmp.eq.s32.totalorder %s38, 1
      %p87 = por %p85, %p86
      %p89 = scmp.ne.s32.totalorder %s72, %s88
      %p90 = scmp.eq.s32.totalorder %s38, 0
      %p91 = por %p89, %p90
      %s93 = sadd.s32 %s92, 1
      %p96 = scmp.eq.s32.totalorder %s32, 1
      %p97 = scmp.ne.s32.totalorder %s92, %s94
      %p98 = scmp.eq.s32.totalorder %s32, 0
      %p99 = por %p97, %p98
      %p100 = scmp.ne.s32.totalorder %s92, %s94
      %p101 = scmp.eq.s32.totalorder %s37, 1
      %p102 = por %p100, %p101
      %p103 = scmp.ne.s32.totalorder %s94, %s95
      %p104 = scmp.eq.s32.totalorder %s37, 0
      %p105 = por %p103, %p104
      %p106 = scmp.ne.s32.totalorder %s94, %s95
      %p107 = scmp.eq.s32.totalorder %s38, 1
      %p108 = por %p106, %p107
      %p110 = scmp.ne.s32.totalorder %s95, %s109
      %p111 = scmp.eq.s32.totalorder %s38, 0
      %p112 = por %p110, %p111
      %s114 = sadd.s32 %s113, 1
      %p117 = scmp.eq.s32.totalorder %s32, 1
      %p118 = scmp.ne.s32.totalorder %s113, %s115
      %p119 = scmp.eq.s32.totalorder %s32, 0
      %p120 = por %p118, %p119
      %p121 = scmp.ne.s32.totalorder %s113, %s115
      %p122 = scmp.eq.s32.totalorder %s37, 1
      %p123 = por %p121, %p122
      %p124 = scmp.ne.s32.totalorder %s115, %s116
      %p125 = scmp.eq.s32.totalorder %s37, 0
      %p126 = por %p124, %p125
      %p127 = scmp.ne.s32.totalorder %s115, %s116
      %p128 = scmp.eq.s32.totalorder %s38, 1
      %p129 = por %p127, %p128
      %p131 = scmp.ne.s32.totalorder %s116, %s130
      %p132 = scmp.eq.s32.totalorder %s38, 0
      %p133 = por %p131, %p132
      %s135 = sadd.s32 %s134, 1
      %p138 = scmp.eq.s32.totalorder %s32, 1
      %p139 = scmp.ne.s32.totalorder %s134, %s136
      %p140 = scmp.eq.s32.totalorder %s32, 0
      %p141 = por %p139, %p140
      %p142 = scmp.ne.s32.totalorder %s134, %s136
      %p143 = scmp.eq.s32.totalorder %s37, 1
      %p144 = por %p142, %p143
      %p145 = scmp.ne.s32.totalorder %s136, %s137
      %p146 = scmp.eq.s32.totalorder %s37, 0
      %p147 = por %p145, %p146
      %p148 = scmp.ne.s32.totalorder %s136, %s137
      %p149 = scmp.eq.s32.totalorder %s38, 1
      %p150 = por %p148, %p149
      %p152 = scmp.ne.s32.totalorder %s137, %s151
      %p153 = scmp.eq.s32.totalorder %s38, 0
      %p154 = por %p152, %p153
      %s156 = sadd.s32 %s155, 1
      %p159 = scmp.eq.s32.totalorder %s32, 1
      %p160 = scmp.ne.s32.totalorder %s155, %s157
      %p161 = scmp.eq.s32.totalorder %s32, 0
      %p162 = por %p160, %p161
      %p163 = scmp.ne.s32.totalorder %s155, %s157
      %p164 = scmp.eq.s32.totalorder %s37, 1
      %p165 = por %p163, %p164
      %p166 = scmp.ne.s32.totalorder %s157, %s158
      %p167 = scmp.eq.s32.totalorder %s37, 0
      %p168 = por %p166, %p167
      %p169 = scmp.ne.s32.totalorder %s157, %s158
      %p170 = scmp.eq.s32.totalorder %s38, 1
      %p171 = por %p169, %p170
      %p173 = scmp.ne.s32.totalorder %s158, %s172
      %p174 = scmp.eq.s32.totalorder %s38, 0
      %p175 = por %p173, %p174
      %s177 = sadd.s32 %s176, 1
      %p180 = scmp.eq.s32.totalorder %s32, 1
      %p181 = scmp.ne.s32.totalorder %s176, %s178
      %p182 = scmp.eq.s32.totalorder %s32, 0
      %p183 = por %p181, %p182
      %p184 = scmp.ne.s32.totalorder %s176, %s178
      %p185 = scmp.eq.s32.totalorder %s37, 1
      %p186 = por %p184, %p185
      %p187 = scmp.ne.s32.totalorder %s178, %s179
      %p188 = scmp.eq.s32.totalorder %s37, 0
      %p189 = por %p187, %p188
      %p190 = scmp.ne.s32.totalorder %s178, %s179
      %p191 = scmp.eq.s32.totalorder %s38, 1
      %p192 = por %p190, %p191
      %p194 = scmp.ne.s32.totalorder %s179, %s193
      %p195 = scmp.eq.s32.totalorder %s38, 0
      %p196 = por %p194, %p195
      %s198 = sadd.s32 %s197, 1
      %p201 = scmp.eq.s32.totalorder %s32, 1
      %p202 = scmp.ne.s32.totalorder %s197, %s199
      %p203 = scmp.eq.s32.totalorder %s32, 0
      %p204 = por %p202, %p203
      %p205 = scmp.ne.s32.totalorder %s197, %s199
      %p206 = scmp.eq.s32.totalorder %s37, 1
      %p207 = por %p205, %p206
      %p208 = scmp.ne.s32.totalorder %s199, %s200
      %p209 = scmp.eq.s32.totalorder %s37, 0
      %p210 = por %p208, %p209
      %p211 = scmp.ne.s32.totalorder %s199, %s200
      %p212 = scmp.eq.s32.totalorder %s38, 1
      %p213 = por %p211, %p212
      %p215 = scmp.ne.s32.totalorder %s200, %s214
      %p216 = scmp.eq.s32.totalorder %s38, 0
      %p217 = por %p215, %p216
      %s219 = sadd.s32 %s218, 1
      %p222 = scmp.eq.s32.totalorder %s32, 1
      %p223 = scmp.ne.s32.totalorder %s218, %s220
      %p224 = scmp.eq.s32.totalorder %s32, 0
      %p225 = por %p223, %p224
      %p226 = scmp.ne.s32.totalorder %s218, %s220
      %p227 = scmp.eq.s32.totalorder %s37, 1
      %p228 = por %p226, %p227
      %p229 = scmp.ne.s32.totalorder %s220, %s221
      %p230 = scmp.eq.s32.totalorder %s37, 0
      %p231 = por %p229, %p230
      %p232 = scmp.ne.s32.totalorder %s220, %s221
      %p233 = scmp.eq.s32.totalorder %s38, 1
      %p234 = por %p232, %p233
      %p236 = scmp.ne.s32.totalorder %s221, %s235
      %p237 = scmp.eq.s32.totalorder %s38, 0
      %p238 = por %p236, %p237
      %s240 = sadd.s32 %s239, 1
      %p243 = scmp.eq.s32.totalorder %s32, 1
      %p244 = scmp.ne.s32.totalorder %s239, %s241
      %p245 = scmp.eq.s32.totalorder %s32, 0
      %p246 = por %p244, %p245
      %p247 = scmp.ne.s32.totalorder %s239, %s241
      %p248 = scmp.eq.s32.totalorder %s37, 1
      %p249 = por %p247, %p248
      %p250 = scmp.ne.s32.totalorder %s241, %s242
      %p251 = scmp.eq.s32.totalorder %s37, 0
      %p252 = por %p250, %p251
      %p253 = scmp.ne.s32.totalorder %s241, %s242
      %p254 = scmp.eq.s32.totalorder %s38, 1
      %p255 = por %p253, %p254
      %p257 = scmp.ne.s32.totalorder %s242, %s256
      %p258 = scmp.eq.s32.totalorder %s38, 0
      %p259 = por %p257, %p258
      %s261 = sadd.s32 %s260, 1
      %p264 = scmp.eq.s32.totalorder %s32, 1
      %p265 = scmp.ne.s32.totalorder %s260, %s262
      %p266 = scmp.eq.s32.totalorder %s32, 0
      %p267 = por %p265, %p266
      %p268 = scmp.ne.s32.totalorder %s260, %s262
      %p269 = scmp.eq.s32.totalorder %s37, 1
      %p270 = por %p268, %p269
      %p271 = scmp.ne.s32.totalorder %s262, %s263
      %p272 = scmp.eq.s32.totalorder %s37, 0
      %p273 = por %p271, %p272
      %p274 = scmp.ne.s32.totalorder %s262, %s263
      %p275 = scmp.eq.s32.totalorder %s38, 1
      %p276 = por %p274, %p275
      %p278 = scmp.ne.s32.totalorder %s263, %s277
      %p279 = scmp.eq.s32.totalorder %s38, 0
      %p280 = por %p278, %p279
      %s282 = sadd.s32 %s281, 1
      %p285 = scmp.eq.s32.totalorder %s32, 1
      %p286 = scmp.ne.s32.totalorder %s281, %s283
      %p287 = scmp.eq.s32.totalorder %s32, 0
      %p288 = por %p286, %p287
      %p289 = scmp.ne.s32.totalorder %s281, %s283
      %p290 = scmp.eq.s32.totalorder %s37, 1
      %p291 = por %p289, %p290
      %p292 = scmp.ne.s32.totalorder %s283, %s284
      %p293 = scmp.eq.s32.totalorder %s37, 0
      %p294 = por %p292, %p293
      %p295 = scmp.ne.s32.totalorder %s283, %s284
      %p296 = scmp.eq.s32.totalorder %s38, 1
      %p297 = por %p295, %p296
      %p299 = scmp.ne.s32.totalorder %s284, %s298
      %p300 = scmp.eq.s32.totalorder %s38, 0
      %p301 = por %p299, %p300
      %s303 = sadd.s32 %s302, 1
      %p306 = scmp.eq.s32.totalorder %s32, 1
      %p307 = scmp.ne.s32.totalorder %s302, %s304
      %p308 = scmp.eq.s32.totalorder %s32, 0
      %p309 = por %p307, %p308
      %p310 = scmp.ne.s32.totalorder %s302, %s304
      %p311 = scmp.eq.s32.totalorder %s37, 1
      %p312 = por %p310, %p311
      %p313 = scmp.ne.s32.totalorder %s304, %s305
      %p314 = scmp.eq.s32.totalorder %s37, 0
      %p315 = por %p313, %p314
      %p316 = scmp.ne.s32.totalorder %s304, %s305
      %p317 = scmp.eq.s32.totalorder %s38, 1
      %p318 = por %p316, %p317
      %p320 = scmp.ne.s32.totalorder %s305, %s319
      %p321 = scmp.eq.s32.totalorder %s38, 0
      %p322 = por %p320, %p321
      %s324 = sadd.s32 %s323, 1
      %p327 = scmp.eq.s32.totalorder %s32, 1
      %p328 = scmp.ne.s32.totalorder %s323, %s325
      %p329 = scmp.eq.s32.totalorder %s32, 0
      %p330 = por %p328, %p329
      %p331 = scmp.ne.s32.totalorder %s323, %s325
      %p332 = scmp.eq.s32.totalorder %s37, 1
      %p333 = por %p331, %p332
      %p334 = scmp.ne.s32.totalorder %s325, %s326
      %p335 = scmp.eq.s32.totalorder %s37, 0
      %p336 = por %p334, %p335
      %p337 = scmp.ne.s32.totalorder %s325, %s326
      %p338 = scmp.eq.s32.totalorder %s38, 1
      %p339 = por %p337, %p338
      %p341 = scmp.ne.s32.totalorder %s326, %s340
      %p342 = scmp.eq.s32.totalorder %s38, 0
      %p343 = por %p341, %p342
      %s345 = sadd.s32 %s344, 1
      %p348 = scmp.eq.s32.totalorder %s32, 1
      %p349 = scmp.ne.s32.totalorder %s344, %s346
      %p350 = scmp.eq.s32.totalorder %s32, 0
      %p351 = por %p349, %p350
      %p352 = scmp.ne.s32.totalorder %s344, %s346
      %p353 = scmp.eq.s32.totalorder %s37, 1
      %p354 = por %p352, %p353
      %p355 = scmp.ne.s32.totalorder %s346, %s347
      %p356 = scmp.eq.s32.totalorder %s37, 0
      %p357 = por %p355, %p356
      %p358 = scmp.ne.s32.totalorder %s346, %s347
      %p359 = scmp.eq.s32.totalorder %s38, 1
      %p360 = por %p358, %p359
      %p362 = scmp.ne.s32.totalorder %s347, %s361
      %p363 = scmp.eq.s32.totalorder %s38, 0
      %p364 = por %p362, %p363
      %s366 = sadd.s32 %s365, 1
      %p369 = scmp.eq.s32.totalorder %s32, 1
      %p370 = scmp.ne.s32.totalorder %s365, %s367
      %p371 = scmp.eq.s32.totalorder %s32, 0
      %p372 = por %p370, %p371
      %p373 = scmp.ne.s32.totalorder %s365, %s367
      %p374 = scmp.eq.s32.totalorder %s37, 1
      %p375 = por %p373, %p374
      %p376 = scmp.ne.s32.totalorder %s367, %s368
      %p377 = scmp.eq.s32.totalorder %s37, 0
      %p378 = por %p376, %p377
      %p379 = scmp.ne.s32.totalorder %s367, %s368
      %p380 = scmp.eq.s32.totalorder %s38, 1
      %p381 = por %p379, %p380
      %p383 = scmp.ne.s32.totalorder %s368, %s382
      %p384 = scmp.eq.s32.totalorder %s38, 0
      %p385 = por %p383, %p384
      %s387 = sadd.s32 %s386, 1
      %p390 = scmp.eq.s32.totalorder %s32, 1
      %p391 = scmp.ne.s32.totalorder %s386, %s388
      %p392 = scmp.eq.s32.totalorder %s32, 0
      %p393 = por %p391, %p392
      %p394 = scmp.ne.s32.totalorder %s386, %s388
      %p395 = scmp.eq.s32.totalorder %s37, 1
      %p396 = por %p394, %p395
      %p397 = scmp.ne.s32.totalorder %s388, %s389
      %p398 = scmp.eq.s32.totalorder %s37, 0
      %p399 = por %p397, %p398
      %p400 = scmp.ne.s32.totalorder %s388, %s389
      %p401 = scmp.eq.s32.totalorder %s38, 1
      %p402 = por %p400, %p401
      %p404 = scmp.ne.s32.totalorder %s389, %s403
      %p405 = scmp.eq.s32.totalorder %s38, 0
      %p406 = por %p404, %p405
      %s408 = sadd.s32 %s407, 1
      %p411 = scmp.eq.s32.totalorder %s32, 1
      %p412 = scmp.ne.s32.totalorder %s407, %s409
      %p413 = scmp.eq.s32.totalorder %s32, 0
      %p414 = por %p412, %p413
      %p415 = scmp.ne.s32.totalorder %s407, %s409
      %p416 = scmp.eq.s32.totalorder %s37, 1
      %p417 = por %p415, %p416
      %p418 = scmp.ne.s32.totalorder %s409, %s410
      %p419 = scmp.eq.s32.totalorder %s37, 0
      %p420 = por %p418, %p419
      %p421 = scmp.ne.s32.totalorder %s409, %s410
      %p422 = scmp.eq.s32.totalorder %s38, 1
      %p423 = por %p421, %p422
      %p425 = scmp.ne.s32.totalorder %s410, %s424
      %p426 = scmp.eq.s32.totalorder %s38, 0
      %p427 = por %p425, %p426
      %s429 = sadd.s32 %s428, 1
      %p432 = scmp.eq.s32.totalorder %s32, 1
      %p433 = scmp.ne.s32.totalorder %s428, %s430
      %p434 = scmp.eq.s32.totalorder %s32, 0
      %p435 = por %p433, %p434
      %p436 = scmp.ne.s32.totalorder %s428, %s430
      %p437 = scmp.eq.s32.totalorder %s37, 1
      %p438 = por %p436, %p437
      %p439 = scmp.ne.s32.totalorder %s430, %s431
      %p440 = scmp.eq.s32.totalorder %s37, 0
      %p441 = por %p439, %p440
      %p442 = scmp.ne.s32.totalorder %s430, %s431
      %p443 = scmp.eq.s32.totalorder %s38, 1
      %p444 = por %p442, %p443
      %p446 = scmp.ne.s32.totalorder %s431, %s445
      %p447 = scmp.eq.s32.totalorder %s38, 0
      %p448 = por %p446, %p447
      %s450 = sadd.s32 %s449, 1
      %p453 = scmp.eq.s32.totalorder %s32, 1
      %p454 = scmp.ne.s32.totalorder %s449, %s451
      %p455 = scmp.eq.s32.totalorder %s32, 0
      %p456 = por %p454, %p455
      %p457 = scmp.ne.s32.totalorder %s449, %s451
      %p458 = scmp.eq.s32.totalorder %s37, 1
      %p459 = por %p457, %p458
      %p460 = scmp.ne.s32.totalorder %s451, %s452
      %p461 = scmp.eq.s32.totalorder %s37, 0
      %p462 = por %p460, %p461
      %p463 = scmp.ne.s32.totalorder %s451, %s452
      %p464 = scmp.eq.s32.totalorder %s38, 1
      %p465 = por %p463, %p464
      %p467 = scmp.ne.s32.totalorder %s452, %s466
      %p468 = scmp.eq.s32.totalorder %s38, 0
      %p469 = por %p467, %p468
      %s471 = sadd.s32 %s470, 1
      %p474 = scmp.eq.s32.totalorder %s32, 1
      %p475 = scmp.ne.s32.totalorder %s470, %s472
      %p476 = scmp.eq.s32.totalorder %s32, 0
      %p477 = por %p475, %p476
      %p478 = scmp.ne.s32.totalorder %s470, %s472
      %p479 = scmp.eq.s32.totalorder %s37, 1
      %p480 = por %p478, %p479
      %p481 = scmp.ne.s32.totalorder %s472, %s473
      %p482 = scmp.eq.s32.totalorder %s37, 0
      %p483 = por %p481, %p482
      %p484 = scmp.ne.s32.totalorder %s472, %s473
      %p485 = scmp.eq.s32.totalorder %s38, 1
      %p486 = por %p484, %p485
      %p488 = scmp.ne.s32.totalorder %s473, %s487
      %p489 = scmp.eq.s32.totalorder %s38, 0
      %p490 = por %p488, %p489
      %s492 = sadd.s32 %s491, 1
      %p495 = scmp.eq.s32.totalorder %s32, 1
      %p496 = scmp.ne.s32.totalorder %s491, %s493
      %p497 = scmp.eq.s32.totalorder %s32, 0
      %p498 = por %p496, %p497
      %p499 = scmp.ne.s32.totalorder %s491, %s493
      %p500 = scmp.eq.s32.totalorder %s37, 1
      %p501 = por %p499, %p500
      %p502 = scmp.ne.s32.totalorder %s493, %s494
      %p503 = scmp.eq.s32.totalorder %s37, 0
      %p504 = por %p502, %p503
      %p505 = scmp.ne.s32.totalorder %s493, %s494
      %p506 = scmp.eq.s32.totalorder %s38, 1
      %p507 = por %p505, %p506
      %p509 = scmp.ne.s32.totalorder %s494, %s508
      %p510 = scmp.eq.s32.totalorder %s38, 0
      %p511 = por %p509, %p510
      %s513 = sadd.s32 %s512, 1
      %p516 = scmp.eq.s32.totalorder %s32, 1
      %p517 = scmp.ne.s32.totalorder %s512, %s514
      %p518 = scmp.eq.s32.totalorder %s32, 0
      %p519 = por %p517, %p518
      %p520 = scmp.ne.s32.totalorder %s512, %s514
      %p521 = scmp.eq.s32.totalorder %s37, 1
      %p522 = por %p520, %p521
      %p523 = scmp.ne.s32.totalorder %s514, %s515
      %p524 = scmp.eq.s32.totalorder %s37, 0
      %p525 = por %p523, %p524
      %p526 = scmp.ne.s32.totalorder %s514, %s515
      %p527 = scmp.eq.s32.totalorder %s38, 1
      %p528 = por %p526, %p527
      %p530 = scmp.ne.s32.totalorder %s515, %s529
      %p531 = scmp.eq.s32.totalorder %s38, 0
      %p532 = por %p530, %p531
      %s533 = ssub.s32 %s32, %s39
      %p534 = scmp.eq.s32.totalorder %s533, 0
      %s536 = sadd.s32 %s535, 1
      %s537 = scalar_select %p534, %s535, %s536
      %p540 = pneg %p534
      %p541 = scmp.eq.s32.totalorder %s32, 1
      %p542 = por %p540, %p541
      %p543 = scmp.ne.s32.totalorder %s535, %s538
      %p544 = scmp.eq.s32.totalorder %s32, 0
      %p545 = por %p543, %p544
      %p546 = scmp.ne.s32.totalorder %s535, %s538
      %p547 = scmp.eq.s32.totalorder %s37, 1
      %p548 = por %p546, %p547
      %p549 = scmp.ne.s32.totalorder %s538, %s539
      %p550 = scmp.eq.s32.totalorder %s37, 0
      %p551 = por %p549, %p550
      %p552 = scmp.ne.s32.totalorder %s538, %s539
      %p553 = scmp.eq.s32.totalorder %s38, 1
      %p554 = por %p552, %p553
      %p556 = scmp.ne.s32.totalorder %s539, %s555
      %p557 = scmp.eq.s32.totalorder %s38, 0
      %p558 = por %p556, %p557
      %p559 = scmp.le.s32.totalorder 1, %s32
      %p560 = scmp.lt.s32.totalorder %s32, 3
      %p561 = pnand %p559, %p560
      %p562 = pneg %p561
      // Predicated region
      $region9: #{tpu_custom_call.1} parent=5 // pred_check
        _
      $region10: #{tpu_custom_call.1} parent=5 // pred_check_branch
        %564 = sbr.rel (%p561) target = $region12
      $region11: #{tpu_custom_call.1} parent=5 // pred_region
        %s565 = ssub.s32 %s32, 1
        // Predicated region
        $region13: #{tpu_custom_call.1} parent=11 // pred_check
          %p566 = pneg %p105
        $region14: #{tpu_custom_call.1} parent=11 // pred_check_branch
          %568 = sbr.rel (%p566) target = $region16
        $region15: #{tpu_custom_call.1} parent=11 // pred_region
          _
        $region16: #{tpu_custom_call.1} parent=11 // pred_fallthru
          _
        // Predicated region
        $region17: #{tpu_custom_call.1} parent=11 // pred_check
          %p569 = pneg %p126
        $region18: #{tpu_custom_call.1} parent=11 // pred_check_branch
          %571 = sbr.rel (%p569) target = $region20
        $region19: #{tpu_custom_call.1} parent=11 // pred_region
          _
        $region20: #{tpu_custom_call.1} parent=11 // pred_fallthru
          _
        // Predicated region
        $region21: #{tpu_custom_call.1} parent=11 // pred_check
          %p572 = pneg %p147
        $region22: #{tpu_custom_call.1} parent=11 // pred_check_branch
          %574 = sbr.rel (%p572) target = $region24
        $region23: #{tpu_custom_call.1} parent=11 // pred_region
          _
        $region24: #{tpu_custom_call.1} parent=11 // pred_fallthru
          _
        // Predicated region
        $region25: #{tpu_custom_call.1} parent=11 // pred_check
          %p575 = pneg %p168
        $region26: #{tpu_custom_call.1} parent=11 // pred_check_branch
          %577 = sbr.rel (%p575) target = $region28
        $region27: #{tpu_custom_call.1} parent=11 // pred_region
          _
        $region28: #{tpu_custom_call.1} parent=11 // pred_fallthru
          _
        // Predicated region
        $region29: #{tpu_custom_call.1} parent=11 // pred_check
          %p578 = pneg %p189
        $region30: #{tpu_custom_call.1} parent=11 // pred_check_branch
          %580 = sbr.rel (%p578) target = $region32
        $region31: #{tpu_custom_call.1} parent=11 // pred_region
          _
        $region32: #{tpu_custom_call.1} parent=11 // pred_fallthru
          _
        // Predicated region
        $region33: #{tpu_custom_call.1} parent=11 // pred_check
          %p581 = pneg %p210
        $region34: #{tpu_custom_call.1} parent=11 // pred_check_branch
          %583 = sbr.rel (%p581) target = $region36
        $region35: #{tpu_custom_call.1} parent=11 // pred_region
          _
        $region36: #{tpu_custom_call.1} parent=11 // pred_fallthru
          _
        // Predicated region
        $region37: #{tpu_custom_call.1} parent=11 // pred_check
          %p584 = pneg %p231
        $region38: #{tpu_custom_call.1} parent=11 // pred_check_branch
          %586 = sbr.rel (%p584) target = $region40
        $region39: #{tpu_custom_call.1} parent=11 // pred_region
          _
        $region40: #{tpu_custom_call.1} parent=11 // pred_fallthru
          _
        // Predicated region
        $region41: #{tpu_custom_call.1} parent=11 // pred_check
          %p587 = pneg %p252
        $region42: #{tpu_custom_call.1} parent=11 // pred_check_branch
          %589 = sbr.rel (%p587) target = $region44
        $region43: #{tpu_custom_call.1} parent=11 // pred_region
          _
        $region44: #{tpu_custom_call.1} parent=11 // pred_fallthru
          _
        // Predicated region
        $region45: #{tpu_custom_call.1} parent=11 // pred_check
          %p590 = pneg %p273
        $region46: #{tpu_custom_call.1} parent=11 // pred_check_branch
          %592 = sbr.rel (%p590) target = $region48
        $region47: #{tpu_custom_call.1} parent=11 // pred_region
          _
        $region48: #{tpu_custom_call.1} parent=11 // pred_fallthru
          _
        // Predicated region
        $region49: #{tpu_custom_call.1} parent=11 // pred_check
          %p593 = pneg %p294
        $region50: #{tpu_custom_call.1} parent=11 // pred_check_branch
          %595 = sbr.rel (%p593) target = $region52
        $region51: #{tpu_custom_call.1} parent=11 // pred_region
          _
        $region52: #{tpu_custom_call.1} parent=11 // pred_fallthru
          _
        // Predicated region
        $region53: #{tpu_custom_call.1} parent=11 // pred_check
          %p596 = pneg %p315
        $region54: #{tpu_custom_call.1} parent=11 // pred_check_branch
          %598 = sbr.rel (%p596) target = $region56
        $region55: #{tpu_custom_call.1} parent=11 // pred_region
          _
        $region56: #{tpu_custom_call.1} parent=11 // pred_fallthru
          _
        // Predicated region
        $region57: #{tpu_custom_call.1} parent=11 // pred_check
          %p599 = pneg %p336
        $region58: #{tpu_custom_call.1} parent=11 // pred_check_branch
          %601 = sbr.rel (%p599) target = $region60
        $region59: #{tpu_custom_call.1} parent=11 // pred_region
          _
        $region60: #{tpu_custom_call.1} parent=11 // pred_fallthru
          _
        // Predicated region
        $region61: #{tpu_custom_call.1} parent=11 // pred_check
          %p602 = pneg %p357
        $region62: #{tpu_custom_call.1} parent=11 // pred_check_branch
          %604 = sbr.rel (%p602) target = $region64
        $region63: #{tpu_custom_call.1} parent=11 // pred_region
          _
        $region64: #{tpu_custom_call.1} parent=11 // pred_fallthru
          _
        // Predicated region
        $region65: #{tpu_custom_call.1} parent=11 // pred_check
          %p605 = pneg %p378
        $region66: #{tpu_custom_call.1} parent=11 // pred_check_branch
          %607 = sbr.rel (%p605) target = $region68
        $region67: #{tpu_custom_call.1} parent=11 // pred_region
          _
        $region68: #{tpu_custom_call.1} parent=11 // pred_fallthru
          _
        // Predicated region
        $region69: #{tpu_custom_call.1} parent=11 // pred_check
          %p608 = pneg %p399
        $region70: #{tpu_custom_call.1} parent=11 // pred_check_branch
          %610 = sbr.rel (%p608) target = $region72
        $region71: #{tpu_custom_call.1} parent=11 // pred_region
          _
        $region72: #{tpu_custom_call.1} parent=11 // pred_fallthru
          _
        // Predicated region
        $region73: #{tpu_custom_call.1} parent=11 // pred_check
          %p611 = pneg %p420
        $region74: #{tpu_custom_call.1} parent=11 // pred_check_branch
          %613 = sbr.rel (%p611) target = $region76
        $region75: #{tpu_custom_call.1} parent=11 // pred_region
          _
        $region76: #{tpu_custom_call.1} parent=11 // pred_fallthru
          _
        // Predicated region
        $region77: #{tpu_custom_call.1} parent=11 // pred_check
          %p614 = pneg %p441
        $region78: #{tpu_custom_call.1} parent=11 // pred_check_branch
          %616 = sbr.rel (%p614) target = $region80
        $region79: #{tpu_custom_call.1} parent=11 // pred_region
          _
        $region80: #{tpu_custom_call.1} parent=11 // pred_fallthru
          _
        // Predicated region
        $region81: #{tpu_custom_call.1} parent=11 // pred_check
          %p617 = pneg %p462
        $region82: #{tpu_custom_call.1} parent=11 // pred_check_branch
          %619 = sbr.rel (%p617) target = $region84
        $region83: #{tpu_custom_call.1} parent=11 // pred_region
          _
        $region84: #{tpu_custom_call.1} parent=11 // pred_fallthru
          _
        // Predicated region
        $region85: #{tpu_custom_call.1} parent=11 // pred_check
          %p620 = pneg %p483
        $region86: #{tpu_custom_call.1} parent=11 // pred_check_branch
          %622 = sbr.rel (%p620) target = $region88
        $region87: #{tpu_custom_call.1} parent=11 // pred_region
          _
        $region88: #{tpu_custom_call.1} parent=11 // pred_fallthru
          _
        // Predicated region
        $region89: #{tpu_custom_call.1} parent=11 // pred_check
          %p623 = pneg %p504
        $region90: #{tpu_custom_call.1} parent=11 // pred_check_branch
          %625 = sbr.rel (%p623) target = $region92
        $region91: #{tpu_custom_call.1} parent=11 // pred_region
          _
        $region92: #{tpu_custom_call.1} parent=11 // pred_fallthru
          _
        // Predicated region
        $region93: #{tpu_custom_call.1} parent=11 // pred_check
          %p626 = pneg %p525
        $region94: #{tpu_custom_call.1} parent=11 // pred_check_branch
          %628 = sbr.rel (%p626) target = $region96
        $region95: #{tpu_custom_call.1} parent=11 // pred_region
          _
        $region96: #{tpu_custom_call.1} parent=11 // pred_fallthru
          _
      $region12: #{tpu_custom_call.1} parent=5 // pred_fallthru
        _
      %p629 = scmp.lt.s32.totalorder %s32, 2
      // Predicated region
      $region97: #{tpu_custom_call.1} parent=5 // pred_check
        %p630 = pneg %p629
      $region98: #{tpu_custom_call.1} parent=5 // pred_check_branch
        %632 = sbr.rel (%p630) target = $region100
      $region99: #{tpu_custom_call.1} parent=5 // pred_region
        // Predicated region
        $region101: #{tpu_custom_call.1} parent=99 // pred_check
          %p633 = pneg %p52
        $region102: #{tpu_custom_call.1} parent=99 // pred_check_branch
          %635 = sbr.rel (%p633) target = $region104
        $region103: #{tpu_custom_call.1} parent=99 // pred_region
          %p636 = scmp.lt.s32.totalorder %s32, 1
          %s637 = scalar_select %p636, %s32, 1
          %s638 = smul.addr %s637, 4
          %s639 = scalar_lea.vmem %s0, %s638
        $region104: #{tpu_custom_call.1} parent=99 // pred_fallthru
          _
        // Predicated region
        $region105: #{tpu_custom_call.1} parent=99 // pred_check
          %p640 = pneg %p78
        $region106: #{tpu_custom_call.1} parent=99 // pred_check_branch
          %642 = sbr.rel (%p640) target = $region108
        $region107: #{tpu_custom_call.1} parent=99 // pred_region
          %p643 = scmp.lt.s32.totalorder %s32, 1
          %s644 = scalar_select %p643, %s32, 1
          %s645 = smul.addr %s644, 4
          %s646 = scalar_lea.vmem %s1, %s645
        $region108: #{tpu_custom_call.1} parent=99 // pred_fallthru
          _
      $region100: #{tpu_custom_call.1} parent=5 // pred_fallthru
        _
      %p647 = scmp.le.s32.totalorder 1, %s32
      %p648 = scmp.lt.s32.totalorder %s32, 3
      %p649 = pnand %p647, %p648
      %p650 = pneg %p649
      // Predicated region
      $region109: #{tpu_custom_call.1} parent=5 // pred_check
        _
      $region110: #{tpu_custom_call.1} parent=5 // pred_check_branch
        %652 = sbr.rel (%p649) target = $region112
      $region111: #{tpu_custom_call.1} parent=5 // pred_region
        %s653 = ssub.s32 %s32, 1
        %p654 = scmp.lt.s32.totalorder %s37, 1
        %s655 = scalar_select %p654, %s37, 1
        %s656 = smul.addr %s655, 4
        %s657 = scalar_lea.vmem %s0, %s656
        %p658 = pneg %p58
        %p659 = pneg %p55
        %p660 = scmp.lt.s32.totalorder %s37, 1
        %s661 = scalar_select %p660, %s37, 1
        %s662 = smul.addr %s661, 4
        %s663 = scalar_lea.vmem %s1, %s662
        %p664 = pneg %p84
        %p665 = pneg %p81
        %p666 = pneg %p105
        %p667 = pneg %p102
        %p668 = pneg %p126
        %p669 = pneg %p123
        %p670 = pneg %p147
        %p671 = pneg %p144
        %p672 = pneg %p168
        %p673 = pneg %p165
        %p674 = pneg %p189
        %p675 = pneg %p186
        %p676 = pneg %p210
        %p677 = pneg %p207
        %p678 = pneg %p231
        %p679 = pneg %p228
        %p680 = pneg %p252
        %p681 = pneg %p249
        %p682 = pneg %p273
        %p683 = pneg %p270
        %p684 = pneg %p294
        %p685 = pneg %p291
        %p686 = pneg %p315
        %p687 = pneg %p312
        %p688 = pneg %p336
        %p689 = pneg %p333
        %p690 = pneg %p357
        %p691 = pneg %p354
        %p692 = pneg %p378
        %p693 = pneg %p375
        %p694 = pneg %p399
        %p695 = pneg %p396
        %p696 = pneg %p420
        %p697 = pneg %p417
        %p698 = pneg %p441
        %p699 = pneg %p438
        %p700 = pneg %p462
        %p701 = pneg %p459
        %p702 = pneg %p483
        %p703 = pneg %p480
        %p704 = pneg %p504
        %p705 = pneg %p501
        %p706 = pneg %p525
        %p707 = pneg %p522
        %p708 = pneg %p551
        %p709 = pneg %p548
        %s710 = sand.u32 %s538, 1
        %s711 = scalar_lea.sflag [#allocation3], %s710
        %s712 = sand.u32 %s538, 1
        %s713 = smul.addr %s712, 4
        %s714 = scalar_lea.vmem [#allocation2], %s713
        %p715 = scmp.lt.s32.totalorder %s37, 1
        %s716 = scalar_select %p715, %s37, 1
        %s717 = smul.addr %s716, 4
        %s718 = scalar_lea.vmem %s0, %s717
        %p719 = scmp.lt.s32.totalorder %s37, 1
        %s720 = scalar_select %p719, %s37, 1
        %s721 = smul.addr %s720, 4
        %s722 = scalar_lea.vmem %s1, %s721
        %v724 = vld [vmem:[%s718] sm:$0xf]
        %v725 = vunpack.c.l.bf16 %v724
        %v726 = vld [vmem:[%s722] sm:$0xf]
        %v727 = vld [vmem:[%s2] sm:$0xff]
        %v728 = vld [vmem:[%s3] sm:$0xf]
        %v729 = vld [vmem:[%s3 + $0x4] sm:$0xf]
        %v730 = vld [vmem:[%s3 + $0x8] sm:$0xf]
        %v731 = vld [vmem:[%s3 + $0xc] sm:$0xf]
        %v732 = vld [vmem:[%s3 + $0x10] sm:$0xf]
        %v733 = vld [vmem:[%s3 + $0x14] sm:$0xf]
        %v734 = vld [vmem:[%s3 + $0x18] sm:$0xf]
        %v735 = vld [vmem:[%s3 + $0x1c] sm:$0xf]
        %v736 = vld [vmem:[%s3 + $0x20] sm:$0xf]
        %v737 = vld [vmem:[%s3 + $0x24] sm:$0xf]
        %v738 = vld [vmem:[%s3 + $0x28] sm:$0xf]
        %v739 = vld [vmem:[%s3 + $0x2c] sm:$0xf]
        %v740 = vld [vmem:[%s3 + $0x30] sm:$0xf]
        %v741 = vld [vmem:[%s3 + $0x34] sm:$0xf]
        %v742 = vld [vmem:[%s3 + $0x38] sm:$0xf]
        %v743 = vld [vmem:[%s3 + $0x3c] sm:$0xf]
        %v744 = vld [vmem:[%s4] sm:$0x1]
        %v745 = vld [vmem:[%s4 + $0x1] sm:$0x1]
        %v746 = vld [vmem:[%s4 + $0x2] sm:$0x1]
        %v747 = vld [vmem:[%s4 + $0x3] sm:$0x1]
        %v752 = vlaneseq
        %v753 = vshrl.u32 %v752, 7
        %v754 = vsub.s32 0, %v753
        %v755 = vrot.slane %v744, %v754
        %v756 = vlaneseq
        %v757 = vshrl.u32 %v756, 7
        %v758 = vsub.s32 0, %v757
        %v759 = vrot.slane %v745, %v758
        %v760 = vlaneseq
        %v761 = vshrl.u32 %v760, 7
        %v762 = vsub.s32 0, %v761
        %v763 = vrot.slane %v746, %v762
        %v764 = vlaneseq
        %v765 = vshrl.u32 %v764, 7
        %v766 = vsub.s32 0, %v765
        %v767 = vrot.slane %v747, %v766
        %v776 = vunpack.c.l.b16 %v728
        %v777 = vunpack.c.l.b16 %v729
        %v778 = vunpack.c.l.b16 %v730
        %v779 = vunpack.c.l.b16 %v731
        %v780 = vpack.c.b16 %v777, %v776
        %v781 = vpack.c.b16 %v779, %v778
        %vm784 = vcmask 261120
        %v786 = vsel %vm784, %v724, 0
        %788 = vmatprep.subr.bf16.mxu0 0
        %789 = vmatpush1.bf16.msra.mxu0 %v780
        %790 = vmatprep.subr.bf16.mxu0 0
        %791 = vmatpush1.bf16.msra.mxu0 %v781
        %792 = vmatprep.subr.bf16.mxu0 0
        %793 = vmatpush1.bf16.msra.mxu0 0
        %794 = vmatprep.subr.bf16.mxu0 0
        %795 = vmatpush1.bf16.msra.mxu0 0
        %796 = vmatprep.subr.bf16.mxu0 0
        %797 = vmatpush1.bf16.msra.mxu0 0
        %798 = vmatprep.subr.bf16.mxu0 0
        %799 = vmatpush1.bf16.msra.mxu0 0
        %800 = vmatprep.subr.bf16.mxu0 0
        %801 = vmatpush1.bf16.msra.mxu0 0
        %802 = vmatprep.subr.bf16.mxu0 0
        %803 = vmatpush1.bf16.msra.mxu0 0
        %804 = vmatprep.subr.bf16.mxu0 0
        %805 = vmatpush1.bf16.msra.mxu0 0
        %806 = vmatprep.subr.bf16.mxu0 0
        %807 = vmatpush1.bf16.msra.mxu0 0
        %808 = vmatprep.subr.bf16.mxu0 0
        %809 = vmatpush1.bf16.msra.mxu0 0
        %810 = vmatprep.subr.bf16.mxu0 0
        %811 = vmatpush1.bf16.msra.mxu0 0
        %812 = vmatprep.subr.bf16.mxu0 0
        %813 = vmatpush1.bf16.msra.mxu0 0
        %814 = vmatprep.subr.bf16.mxu0 0
        %815 = vmatpush1.bf16.msra.mxu0 0
        %816 = vmatprep.subr.bf16.mxu0 0
        %817 = vmatpush1.bf16.msra.mxu0 0
        %818 = vmatprep.subr.bf16.mxu0 0
        %819 = vmatpush1.bf16.msra.mxu0 0
        %820 = vmatprep.mubr.bf16.mxu0 0
        %821 = vmatmul.mubr.bf16.gmra.mrb[0].mxu0 %v786
        %v822 = vpop.f32.mrb[0].mxu0
        %v823 = vadd.f32 %v755, %v822
        %v824 = vpop.f32.mrb[0].mxu0
        %v825 = vpop.f32.mrb[0].mxu0
        %v826 = vpop.f32.mrb[0].mxu0
        %827 = vdwg.mxu0
        %v832 = vunpack.c.l.b16 %v732
        %v833 = vunpack.c.l.b16 %v733
        %v834 = vunpack.c.l.b16 %v734
        %v835 = vunpack.c.l.b16 %v735
        %v836 = vpack.c.b16 %v833, %v832
        %v837 = vpack.c.b16 %v835, %v834
        %840 = vmatprep.subr.bf16.mxu0 0
        %841 = vmatpush1.bf16.msra.mxu0 %v836
        %842 = vmatprep.subr.bf16.mxu0 0
        %843 = vmatpush1.bf16.msra.mxu0 %v837
        %844 = vmatprep.subr.bf16.mxu0 0
        %845 = vmatpush1.bf16.msra.mxu0 0
        %846 = vmatprep.subr.bf16.mxu0 0
        %847 = vmatpush1.bf16.msra.mxu0 0
        %848 = vmatprep.subr.bf16.mxu0 0
        %849 = vmatpush1.bf16.msra.mxu0 0
        %850 = vmatprep.subr.bf16.mxu0 0
        %851 = vmatpush1.bf16.msra.mxu0 0
        %852 = vmatprep.subr.bf16.mxu0 0
        %853 = vmatpush1.bf16.msra.mxu0 0
        %854 = vmatprep.subr.bf16.mxu0 0
        %855 = vmatpush1.bf16.msra.mxu0 0
        %856 = vmatprep.subr.bf16.mxu0 0
        %857 = vmatpush1.bf16.msra.mxu0 0
        %858 = vmatprep.subr.bf16.mxu0 0
        %859 = vmatpush1.bf16.msra.mxu0 0
        %860 = vmatprep.subr.bf16.mxu0 0
        %861 = vmatpush1.bf16.msra.mxu0 0
        %862 = vmatprep.subr.bf16.mxu0 0
        %863 = vmatpush1.bf16.msra.mxu0 0
        %864 = vmatprep.subr.bf16.mxu0 0
        %865 = vmatpush1.bf16.msra.mxu0 0
        %866 = vmatprep.subr.bf16.mxu0 0
        %867 = vmatpush1.bf16.msra.mxu0 0
        %868 = vmatprep.subr.bf16.mxu0 0
        %869 = vmatpush1.bf16.msra.mxu0 0
        %870 = vmatprep.subr.bf16.mxu0 0
        %871 = vmatpush1.bf16.msra.mxu0 0
        %872 = vmatprep.mubr.bf16.mxu0 0
        %873 = vmatmul.mubr.bf16.gmra.mrb[0].mxu0 %v786
        %v874 = vpop.f32.mrb[0].mxu0
        %v875 = vadd.f32 %v759, %v874
        %v876 = vpop.f32.mrb[0].mxu0
        %v877 = vpop.f32.mrb[0].mxu0
        %v878 = vpop.f32.mrb[0].mxu0
        %879 = vdwg.mxu0
        %v884 = vunpack.c.l.b16 %v736
        %v885 = vunpack.c.l.b16 %v737
        %v886 = vunpack.c.l.b16 %v738
        %v887 = vunpack.c.l.b16 %v739
        %v888 = vpack.c.b16 %v885, %v884
        %v889 = vpack.c.b16 %v887, %v886
        %892 = vmatprep.subr.bf16.mxu0 0
        %893 = vmatpush1.bf16.msra.mxu0 %v888
        %894 = vmatprep.subr.bf16.mxu0 0
        %895 = vmatpush1.bf16.msra.mxu0 %v889
        %896 = vmatprep.subr.bf16.mxu0 0
        %897 = vmatpush1.bf16.msra.mxu0 0
        %898 = vmatprep.subr.bf16.mxu0 0
        %899 = vmatpush1.bf16.msra.mxu0 0
        %900 = vmatprep.subr.bf16.mxu0 0
        %901 = vmatpush1.bf16.msra.mxu0 0
        %902 = vmatprep.subr.bf16.mxu0 0
        %903 = vmatpush1.bf16.msra.mxu0 0
        %904 = vmatprep.subr.bf16.mxu0 0
        %905 = vmatpush1.bf16.msra.mxu0 0
        %906 = vmatprep.subr.bf16.mxu0 0
        %907 = vmatpush1.bf16.msra.mxu0 0
        %908 = vmatprep.subr.bf16.mxu0 0
        %909 = vmatpush1.bf16.msra.mxu0 0
        %910 = vmatprep.subr.bf16.mxu0 0
        %911 = vmatpush1.bf16.msra.mxu0 0
        %912 = vmatprep.subr.bf16.mxu0 0
        %913 = vmatpush1.bf16.msra.mxu0 0
        %914 = vmatprep.subr.bf16.mxu0 0
        %915 = vmatpush1.bf16.msra.mxu0 0
        %916 = vmatprep.subr.bf16.mxu0 0
        %917 = vmatpush1.bf16.msra.mxu0 0
        %918 = vmatprep.subr.bf16.mxu0 0
        %919 = vmatpush1.bf16.msra.mxu0 0
        %920 = vmatprep.subr.bf16.mxu0 0
        %921 = vmatpush1.bf16.msra.mxu0 0
        %922 = vmatprep.subr.bf16.mxu0 0
        %923 = vmatpush1.bf16.msra.mxu0 0
        %924 = vmatprep.mubr.bf16.mxu0 0
        %925 = vmatmul.mubr.bf16.gmra.mrb[0].mxu0 %v786
        %v926 = vpop.f32.mrb[0].mxu0
        %v927 = vadd.f32 %v763, %v926
        %v928 = vpop.f32.mrb[0].mxu0
        %v929 = vpop.f32.mrb[0].mxu0
        %v930 = vpop.f32.mrb[0].mxu0
        %931 = vdwg.mxu0
        %v936 = vunpack.c.l.b16 %v740
        %v937 = vunpack.c.l.b16 %v741
        %v938 = vunpack.c.l.b16 %v742
        %v939 = vunpack.c.l.b16 %v743
        %v940 = vpack.c.b16 %v937, %v936
        %v941 = vpack.c.b16 %v939, %v938
        %944 = vmatprep.subr.bf16.mxu0 0
        %945 = vmatpush1.bf16.msra.mxu0 %v940
        %946 = vmatprep.subr.bf16.mxu0 0
        %947 = vmatpush1.bf16.msra.mxu0 %v941
        %948 = vmatprep.subr.bf16.mxu0 0
        %949 = vmatpush1.bf16.msra.mxu0 0
        %950 = vmatprep.subr.bf16.mxu0 0
        %951 = vmatpush1.bf16.msra.mxu0 0
        %952 = vmatprep.subr.bf16.mxu0 0
        %953 = vmatpush1.bf16.msra.mxu0 0
        %954 = vmatprep.subr.bf16.mxu0 0
        %955 = vmatpush1.bf16.msra.mxu0 0
        %956 = vmatprep.subr.bf16.mxu0 0
        %957 = vmatpush1.bf16.msra.mxu0 0
        %958 = vmatprep.subr.bf16.mxu0 0
        %959 = vmatpush1.bf16.msra.mxu0 0
        %960 = vmatprep.subr.bf16.mxu0 0
        %961 = vmatpush1.bf16.msra.mxu0 0
        %962 = vmatprep.subr.bf16.mxu0 0
        %963 = vmatpush1.bf16.msra.mxu0 0
        %964 = vmatprep.subr.bf16.mxu0 0
        %965 = vmatpush1.bf16.msra.mxu0 0
        %966 = vmatprep.subr.bf16.mxu0 0
        %967 = vmatpush1.bf16.msra.mxu0 0
        %968 = vmatprep.subr.bf16.mxu0 0
        %969 = vmatpush1.bf16.msra.mxu0 0
        %970 = vmatprep.subr.bf16.mxu0 0
        %971 = vmatpush1.bf16.msra.mxu0 0
        %972 = vmatprep.subr.bf16.mxu0 0
        %973 = vmatpush1.bf16.msra.mxu0 0
        %974 = vmatprep.subr.bf16.mxu0 0
        %975 = vmatpush1.bf16.msra.mxu0 0
        %976 = vmatprep.mubr.bf16.mxu0 0
        %977 = vmatmul.mubr.bf16.gmra.mrb[0].mxu0 %v786
        %v978 = vpop.f32.mrb[0].mxu0
        %v979 = vadd.f32 %v767, %v978
        %v980 = vpop.f32.mrb[0].mxu0
        %v981 = vpop.f32.mrb[0].mxu0
        %v982 = vpop.f32.mrb[0].mxu0
        %983 = vdwg.mxu0
        %v984 = vpack.c.bf16 %v823, %v823
        %v985 = vpack.c.bf16 %v875, %v875
        %v986 = vpack.c.bf16 %v927, %v927
        %v987 = vpack.c.bf16 %v979, %v979
        %989 = vrot.lane.b32.xlu0 %v984, 120
        %v990 = vpop.permute.xlu0 %989
        %vm991 = vcmask 64512
        %v993 = vsel %vm991, %v984, 0
        %v996 = vsel %vm991, %v990, 0
        %998 = vmatprep.subr.bf16.mxu0 0
        %999 = vmatpush1.bf16.xpose.msra.mxu0 %v996
        %1000 = vmatprep.subr.bf16.mxu0 0
        %1001 = vmatpush1.bf16.xpose.msra.mxu0 0
        %1002 = vmatprep.subr.bf16.mxu0 0
        %1003 = vmatpush1.bf16.xpose.msra.mxu0 0
        %1004 = vmatprep.subr.bf16.mxu0 0
        %1005 = vmatpush1.bf16.xpose.msra.mxu0 0
        %1006 = vmatprep.subr.bf16.mxu0 0
        %1007 = vmatpush1.bf16.xpose.msra.mxu0 0
        %1008 = vmatprep.subr.bf16.mxu0 0
        %1009 = vmatpush1.bf16.xpose.msra.mxu0 0
        %1010 = vmatprep.subr.bf16.mxu0 0
        %1011 = vmatpush1.bf16.xpose.msra.mxu0 0
        %1012 = vmatprep.subr.bf16.mxu0 0
        %1013 = vmatpush1.bf16.xpose.msra.mxu0 0
        %1014 = vmatprep.subr.bf16.mxu0 0
        %1015 = vmatpush1.bf16.xpose.msra.mxu0 0
        %1016 = vmatprep.subr.bf16.mxu0 0
        %1017 = vmatpush1.bf16.xpose.msra.mxu0 0
        %1018 = vmatprep.subr.bf16.mxu0 0
        %1019 = vmatpush1.bf16.xpose.msra.mxu0 0
        %1020 = vmatprep.subr.bf16.mxu0 0
        %1021 = vmatpush1.bf16.xpose.msra.mxu0 0
        %1022 = vmatprep.subr.bf16.mxu0 0
        %1023 = vmatpush1.bf16.xpose.msra.mxu0 0
        %1024 = vmatprep.subr.bf16.mxu0 0
        %1025 = vmatpush1.bf16.xpose.msra.mxu0 0
        %1026 = vmatprep.subr.bf16.mxu0 0
        %1027 = vmatpush1.bf16.xpose.msra.mxu0 0
        %1028 = vmatprep.subr.bf16.mxu0 0
        %1029 = vmatpush1.bf16.xpose.msra.mxu0 0
        %1030 = vmatprep.mubr.bf16.mxu0 0
        %1031 = vmatmul.mubr.bf16.gmra.mrb[0].mxu0 %v993
        %v1032 = vpop.f32.mrb[0].mxu0
        %v1033 = vadd.f32 0.0, %v1032
        %v1034 = vpop.f32.mrb[0].mxu0
        %v1035 = vpop.f32.mrb[0].mxu0
        %v1036 = vpop.f32.mrb[0].mxu0
        %1037 = vdwg.mxu0
        %1039 = vrot.lane.b32.xlu0 %v985, 120
        %v1040 = vpop.permute.xlu0 %1039
        %v1042 = vsel %vm991, %v985, 0
        %v1045 = vsel %vm991, %v1040, 0
        %1047 = vmatprep.subr.bf16.mxu0 0
        %1048 = vmatpush1.bf16.xpose.msra.mxu0 %v1045
        %1049 = vmatprep.subr.bf16.mxu0 0
        %1050 = vmatpush1.bf16.xpose.msra.mxu0 0
        %1051 = vmatprep.subr.bf16.mxu0 0
        %1052 = vmatpush1.bf16.xpose.msra.mxu0 0
        %1053 = vmatprep.subr.bf16.mxu0 0
        %1054 = vmatpush1.bf16.xpose.msra.mxu0 0
        %1055 = vmatprep.subr.bf16.mxu0 0
        %1056 = vmatpush1.bf16.xpose.msra.mxu0 0
        %1057 = vmatprep.subr.bf16.mxu0 0
        %1058 = vmatpush1.bf16.xpose.msra.mxu0 0
        %1059 = vmatprep.subr.bf16.mxu0 0
        %1060 = vmatpush1.bf16.xpose.msra.mxu0 0
        %1061 = vmatprep.subr.bf16.mxu0 0
        %1062 = vmatpush1.bf16.xpose.msra.mxu0 0
        %1063 = vmatprep.subr.bf16.mxu0 0
        %1064 = vmatpush1.bf16.xpose.msra.mxu0 0
        %1065 = vmatprep.subr.bf16.mxu0 0
        %1066 = vmatpush1.bf16.xpose.msra.mxu0 0
        %1067 = vmatprep.subr.bf16.mxu0 0
        %1068 = vmatpush1.bf16.xpose.msra.mxu0 0
        %1069 = vmatprep.subr.bf16.mxu0 0
        %1070 = vmatpush1.bf16.xpose.msra.mxu0 0
        %1071 = vmatprep.subr.bf16.mxu0 0
        %1072 = vmatpush1.bf16.xpose.msra.mxu0 0
        %1073 = vmatprep.subr.bf16.mxu0 0
        %1074 = vmatpush1.bf16.xpose.msra.mxu0 0
        %1075 = vmatprep.subr.bf16.mxu0 0
        %1076 = vmatpush1.bf16.xpose.msra.mxu0 0
        %1077 = vmatprep.subr.bf16.mxu0 0
        %1078 = vmatpush1.bf16.xpose.msra.mxu0 0
        %1079 = vmatprep.mubr.bf16.mxu0 0
        %1080 = vmatmul.mubr.bf16.gmra.mrb[0].mxu0 %v1042
        %v1081 = vpop.f32.mrb[0].mxu0
        %v1082 = vadd.f32 0.0, %v1081
        %v1083 = vpop.f32.mrb[0].mxu0
        %v1084 = vpop.f32.mrb[0].mxu0
        %v1085 = vpop.f32.mrb[0].mxu0
        %1086 = vdwg.mxu0
        %1088 = vrot.lane.b32.xlu0 %v986, 120
        %v1089 = vpop.permute.xlu0 %1088
        %v1091 = vsel %vm991, %v986, 0
        %v1094 = vsel %vm991, %v1089, 0
        %1096 = vmatprep.subr.bf16.mxu0 0
        %1097 = vmatpush1.bf16.xpose.msra.mxu0 %v1094
        %1098 = vmatprep.subr.bf16.mxu0 0
        %1099 = vmatpush1.bf16.xpose.msra.mxu0 0
        %1100 = vmatprep.subr.bf16.mxu0 0
        %1101 = vmatpush1.bf16.xpose.msra.mxu0 0
        %1102 = vmatprep.subr.bf16.mxu0 0
        %1103 = vmatpush1.bf16.xpose.msra.mxu0 0
        %1104 = vmatprep.subr.bf16.mxu0 0
        %1105 = vmatpush1.bf16.xpose.msra.mxu0 0
        %1106 = vmatprep.subr.bf16.mxu0 0
        %1107 = vmatpush1.bf16.xpose.msra.mxu0 0
        %1108 = vmatprep.subr.bf16.mxu0 0
        %1109 = vmatpush1.bf16.xpose.msra.mxu0 0
        %1110 = vmatprep.subr.bf16.mxu0 0
        %1111 = vmatpush1.bf16.xpose.msra.mxu0 0
        %1112 = vmatprep.subr.bf16.mxu0 0
        %1113 = vmatpush1.bf16.xpose.msra.mxu0 0
        %1114 = vmatprep.subr.bf16.mxu0 0
        %1115 = vmatpush1.bf16.xpose.msra.mxu0 0
        %1116 = vmatprep.subr.bf16.mxu0 0
        %1117 = vmatpush1.bf16.xpose.msra.mxu0 0
        %1118 = vmatprep.subr.bf16.mxu0 0
        %1119 = vmatpush1.bf16.xpose.msra.mxu0 0
        %1120 = vmatprep.subr.bf16.mxu0 0
        %1121 = vmatpush1.bf16.xpose.msra.mxu0 0
        %1122 = vmatprep.subr.bf16.mxu0 0
        %1123 = vmatpush1.bf16.xpose.msra.mxu0 0
        %1124 = vmatprep.subr.bf16.mxu0 0
        %1125 = vmatpush1.bf16.xpose.msra.mxu0 0
        %1126 = vmatprep.subr.bf16.mxu0 0
        %1127 = vmatpush1.bf16.xpose.msra.mxu0 0
        %1128 = vmatprep.mubr.bf16.mxu0 0
        %1129 = vmatmul.mubr.bf16.gmra.mrb[0].mxu0 %v1091
        %v1130 = vpop.f32.mrb[0].mxu0
        %v1131 = vadd.f32 0.0, %v1130
        %v1132 = vpop.f32.mrb[0].mxu0
        %v1133 = vpop.f32.mrb[0].mxu0
        %v1134 = vpop.f32.mrb[0].mxu0
        %1135 = vdwg.mxu0
        %1137 = vrot.lane.b32.xlu0 %v987, 120
        %v1138 = vpop.permute.xlu0 %1137
        %v1140 = vsel %vm991, %v987, 0
        %v1143 = vsel %vm991, %v1138, 0
        %1145 = vmatprep.subr.bf16.mxu0 0
        %1146 = vmatpush1.bf16.xpose.msra.mxu0 %v1143
        %1147 = vmatprep.subr.bf16.mxu0 0
        %1148 = vmatpush1.bf16.xpose.msra.mxu0 0
        %1149 = vmatprep.subr.bf16.mxu0 0
        %1150 = vmatpush1.bf16.xpose.msra.mxu0 0
        %1151 = vmatprep.subr.bf16.mxu0 0
        %1152 = vmatpush1.bf16.xpose.msra.mxu0 0
        %1153 = vmatprep.subr.bf16.mxu0 0
        %1154 = vmatpush1.bf16.xpose.msra.mxu0 0
        %1155 = vmatprep.subr.bf16.mxu0 0
        %1156 = vmatpush1.bf16.xpose.msra.mxu0 0
        %1157 = vmatprep.subr.bf16.mxu0 0
        %1158 = vmatpush1.bf16.xpose.msra.mxu0 0
        %1159 = vmatprep.subr.bf16.mxu0 0
        %1160 = vmatpush1.bf16.xpose.msra.mxu0 0
        %1161 = vmatprep.subr.bf16.mxu0 0
        %1162 = vmatpush1.bf16.xpose.msra.mxu0 0
        %1163 = vmatprep.subr.bf16.mxu0 0
        %1164 = vmatpush1.bf16.xpose.msra.mxu0 0
        %1165 = vmatprep.subr.bf16.mxu0 0
        %1166 = vmatpush1.bf16.xpose.msra.mxu0 0
        %1167 = vmatprep.subr.bf16.mxu0 0
        %1168 = vmatpush1.bf16.xpose.msra.mxu0 0
        %1169 = vmatprep.subr.bf16.mxu0 0
        %1170 = vmatpush1.bf16.xpose.msra.mxu0 0
        %1171 = vmatprep.subr.bf16.mxu0 0
        %1172 = vmatpush1.bf16.xpose.msra.mxu0 0
        %1173 = vmatprep.subr.bf16.mxu0 0
        %1174 = vmatpush1.bf16.xpose.msra.mxu0 0
        %1175 = vmatprep.subr.bf16.mxu0 0
        %1176 = vmatpush1.bf16.xpose.msra.mxu0 0
        %1177 = vmatprep.mubr.bf16.mxu0 0
        %1178 = vmatmul.mubr.bf16.gmra.mrb[0].mxu0 %v1140
        %v1179 = vpop.f32.mrb[0].mxu0
        %v1180 = vadd.f32 0.0, %v1179
        %v1181 = vpop.f32.mrb[0].mxu0
        %v1182 = vpop.f32.mrb[0].mxu0
        %v1183 = vpop.f32.mrb[0].mxu0
        %1184 = vdwg.mxu0
        %v1185 = vmul.f32 %v1033, 0.35355338
        %v1186 = vmul.f32 %v1082, 0.35355338
        %v1187 = vmul.f32 %v1131, 0.35355338
        %v1188 = vmul.f32 %v1180, 0.35355338
        %v1189 = vadd.f32 %v1185, %v727
        %v1190 = vadd.f32 %v1186, %v727
        %v1191 = vadd.f32 %v1187, %v727
        %v1192 = vadd.f32 %v1188, %v727
        %v1193 = vsel %vm991, %v1189, -inf
        %1194 = vmax.xlane.f32.xlu0 %v1193
        %v1195 = vpop.xlane.xlu0 %1194
        %v1196 = vsel %vm991, %v1190, -inf
        %1197 = vmax.xlane.f32.xlu0 %v1196
        %v1198 = vpop.xlane.xlu0 %1197
        %v1199 = vsel %vm991, %v1191, -inf
        %1200 = vmax.xlane.f32.xlu0 %v1199
        %v1201 = vpop.xlane.xlu0 %1200
        %v1202 = vsel %vm991, %v1192, -inf
        %1203 = vmax.xlane.f32.xlu0 %v1202
        %v1204 = vpop.xlane.xlu0 %1203
        %v1205 = vsub.f32 %v1189, %v1195
        %v1206 = vsub.f32 %v1190, %v1198
        %v1207 = vsub.f32 %v1191, %v1201
        %v1208 = vsub.f32 %v1192, %v1204
        %v1209 = vmul.f32 %v1205, 1.442695
        %v1210 = vpow.pop %v1209
        %v1211 = vmul.f32 %v1206, 1.442695
        %v1212 = vpow.pop %v1211
        %v1213 = vmul.f32 %v1207, 1.442695
        %v1214 = vpow.pop %v1213
        %v1215 = vmul.f32 %v1208, 1.442695
        %v1216 = vpow.pop %v1215
        %v1217 = vsel %vm991, %v1210, 0.0
        %1218 = vadd.xlane.f32.xlu0 %v1217
        %v1219 = vpop.xlane.xlu0 %1218
        %v1220 = vsel %vm991, %v1212, 0.0
        %1221 = vadd.xlane.f32.xlu0 %v1220
        %v1222 = vpop.xlane.xlu0 %1221
        %v1223 = vsel %vm991, %v1214, 0.0
        %1224 = vadd.xlane.f32.xlu0 %v1223
        %v1225 = vpop.xlane.xlu0 %1224
        %v1226 = vsel %vm991, %v1216, 0.0
        %1227 = vadd.xlane.f32.xlu0 %v1226
        %v1228 = vpop.xlane.xlu0 %1227
        %v1229 = vrcp.pop %v1219
        %v1230 = vrcp.pop %v1222
        %v1231 = vrcp.pop %v1225
        %v1232 = vrcp.pop %v1228
        %v1233 = vmul.f32 %v1210, %v1229
        %v1234 = vmul.f32 %v1212, %v1230
        %v1235 = vmul.f32 %v1214, %v1231
        %v1236 = vmul.f32 %v1216, %v1232
        %v1237 = vpack.c.bf16 %v1233, %v1233
        %v1238 = vpack.c.bf16 %v1234, %v1234
        %v1239 = vpack.c.bf16 %v1235, %v1235
        %v1240 = vpack.c.bf16 %v1236, %v1236
        %1241 = vrot.lane.b32.xlu0 %v984, 112
        %v1242 = vpop.permute.xlu0 %1241
        %v1244 = vsel %vm991, %v1237, 0
        %vm1246 = vcmask 1043456
        %v1248 = vsel %vm1246, %v1242, 0
        %1250 = vmatprep.subr.bf16.mxu0 0
        %1251 = vmatpush1.bf16.msra.mxu0 %v1248
        %1252 = vmatprep.subr.bf16.mxu0 0
        %1253 = vmatpush1.bf16.msra.mxu0 0
        %1254 = vmatprep.subr.bf16.mxu0 0
        %1255 = vmatpush1.bf16.msra.mxu0 0
        %1256 = vmatprep.subr.bf16.mxu0 0
        %1257 = vmatpush1.bf16.msra.mxu0 0
        %1258 = vmatprep.subr.bf16.mxu0 0
        %1259 = vmatpush1.bf16.msra.mxu0 0
        %1260 = vmatprep.subr.bf16.mxu0 0
        %1261 = vmatpush1.bf16.msra.mxu0 0
        %1262 = vmatprep.subr.bf16.mxu0 0
        %1263 = vmatpush1.bf16.msra.mxu0 0
        %1264 = vmatprep.subr.bf16.mxu0 0
        %1265 = vmatpush1.bf16.msra.mxu0 0
        %1266 = vmatprep.subr.bf16.mxu0 0
        %1267 = vmatpush1.bf16.msra.mxu0 0
        %1268 = vmatprep.subr.bf16.mxu0 0
        %1269 = vmatpush1.bf16.msra.mxu0 0
        %1270 = vmatprep.subr.bf16.mxu0 0
        %1271 = vmatpush1.bf16.msra.mxu0 0
        %1272 = vmatprep.subr.bf16.mxu0 0
        %1273 = vmatpush1.bf16.msra.mxu0 0
        %1274 = vmatprep.subr.bf16.mxu0 0
        %1275 = vmatpush1.bf16.msra.mxu0 0
        %1276 = vmatprep.subr.bf16.mxu0 0
        %1277 = vmatpush1.bf16.msra.mxu0 0
        %1278 = vmatprep.subr.bf16.mxu0 0
        %1279 = vmatpush1.bf16.msra.mxu0 0
        %1280 = vmatprep.subr.bf16.mxu0 0
        %1281 = vmatpush1.bf16.msra.mxu0 0
        %1282 = vmatprep.mubr.bf16.mxu0 0
        %1283 = vmatmul.mubr.bf16.gmra.mrb[0].mxu0 %v1244
        %v1284 = vpop.f32.mrb[0].mxu0
        %v1285 = vadd.f32 0.0, %v1284
        %v1286 = vpop.f32.mrb[0].mxu0
        %v1287 = vpop.f32.mrb[0].mxu0
        %v1288 = vpop.f32.mrb[0].mxu0
        %1289 = vdwg.mxu0
        %1290 = vrot.lane.b32.xlu0 %v985, 112
        %v1291 = vpop.permute.xlu0 %1290
        %v1293 = vsel %vm991, %v1238, 0
        %v1296 = vsel %vm1246, %v1291, 0
        %1298 = vmatprep.subr.bf16.mxu0 0
        %1299 = vmatpush1.bf16.msra.mxu0 %v1296
        %1300 = vmatprep.subr.bf16.mxu0 0
        %1301 = vmatpush1.bf16.msra.mxu0 0
        %1302 = vmatprep.subr.bf16.mxu0 0
        %1303 = vmatpush1.bf16.msra.mxu0 0
        %1304 = vmatprep.subr.bf16.mxu0 0
        %1305 = vmatpush1.bf16.msra.mxu0 0
        %1306 = vmatprep.subr.bf16.mxu0 0
        %1307 = vmatpush1.bf16.msra.mxu0 0
        %1308 = vmatprep.subr.bf16.mxu0 0
        %1309 = vmatpush1.bf16.msra.mxu0 0
        %1310 = vmatprep.subr.bf16.mxu0 0
        %1311 = vmatpush1.bf16.msra.mxu0 0
        %1312 = vmatprep.subr.bf16.mxu0 0
        %1313 = vmatpush1.bf16.msra.mxu0 0
        %1314 = vmatprep.subr.bf16.mxu0 0
        %1315 = vmatpush1.bf16.msra.mxu0 0
        %1316 = vmatprep.subr.bf16.mxu0 0
        %1317 = vmatpush1.bf16.msra.mxu0 0
        %1318 = vmatprep.subr.bf16.mxu0 0
        %1319 = vmatpush1.bf16.msra.mxu0 0
        %1320 = vmatprep.subr.bf16.mxu0 0
        %1321 = vmatpush1.bf16.msra.mxu0 0
        %1322 = vmatprep.subr.bf16.mxu0 0
        %1323 = vmatpush1.bf16.msra.mxu0 0
        %1324 = vmatprep.subr.bf16.mxu0 0
        %1325 = vmatpush1.bf16.msra.mxu0 0
        %1326 = vmatprep.subr.bf16.mxu0 0
        %1327 = vmatpush1.bf16.msra.mxu0 0
        %1328 = vmatprep.subr.bf16.mxu0 0
        %1329 = vmatpush1.bf16.msra.mxu0 0
        %1330 = vmatprep.mubr.bf16.mxu0 0
        %1331 = vmatmul.mubr.bf16.gmra.mrb[0].mxu0 %v1293
        %v1332 = vpop.f32.mrb[0].mxu0
        %v1333 = vadd.f32 0.0, %v1332
        %v1334 = vpop.f32.mrb[0].mxu0
        %v1335 = vpop.f32.mrb[0].mxu0
        %v1336 = vpop.f32.mrb[0].mxu0
        %1337 = vdwg.mxu0
        %1338 = vrot.lane.b32.xlu0 %v986, 112
        %v1339 = vpop.permute.xlu0 %1338
        %v1341 = vsel %vm991, %v1239, 0
        %v1344 = vsel %vm1246, %v1339, 0
        %1346 = vmatprep.subr.bf16.mxu0 0
        %1347 = vmatpush1.bf16.msra.mxu0 %v1344
        %1348 = vmatprep.subr.bf16.mxu0 0
        %1349 = vmatpush1.bf16.msra.mxu0 0
        %1350 = vmatprep.subr.bf16.mxu0 0
        %1351 = vmatpush1.bf16.msra.mxu0 0
        %1352 = vmatprep.subr.bf16.mxu0 0
        %1353 = vmatpush1.bf16.msra.mxu0 0
        %1354 = vmatprep.subr.bf16.mxu0 0
        %1355 = vmatpush1.bf16.msra.mxu0 0
        %1356 = vmatprep.subr.bf16.mxu0 0
        %1357 = vmatpush1.bf16.msra.mxu0 0
        %1358 = vmatprep.subr.bf16.mxu0 0
        %1359 = vmatpush1.bf16.msra.mxu0 0
        %1360 = vmatprep.subr.bf16.mxu0 0
        %1361 = vmatpush1.bf16.msra.mxu0 0
        %1362 = vmatprep.subr.bf16.mxu0 0
        %1363 = vmatpush1.bf16.msra.mxu0 0
        %1364 = vmatprep.subr.bf16.mxu0 0
        %1365 = vmatpush1.bf16.msra.mxu0 0
        %1366 = vmatprep.subr.bf16.mxu0 0
        %1367 = vmatpush1.bf16.msra.mxu0 0
        %1368 = vmatprep.subr.bf16.mxu0 0
        %1369 = vmatpush1.bf16.msra.mxu0 0
        %1370 = vmatprep.subr.bf16.mxu0 0
        %1371 = vmatpush1.bf16.msra.mxu0 0
        %1372 = vmatprep.subr.bf16.mxu0 0
        %1373 = vmatpush1.bf16.msra.mxu0 0
        %1374 = vmatprep.subr.bf16.mxu0 0
        %1375 = vmatpush1.bf16.msra.mxu0 0
        %1376 = vmatprep.subr.bf16.mxu0 0
        %1377 = vmatpush1.bf16.msra.mxu0 0
        %1378 = vmatprep.mubr.bf16.mxu0 0
        %1379 = vmatmul.mubr.bf16.gmra.mrb[0].mxu0 %v1341
        %v1380 = vpop.f32.mrb[0].mxu0
        %v1381 = vadd.f32 0.0, %v1380
        %v1382 = vpop.f32.mrb[0].mxu0
        %v1383 = vpop.f32.mrb[0].mxu0
        %v1384 = vpop.f32.mrb[0].mxu0
        %1385 = vdwg.mxu0
        %1386 = vrot.lane.b32.xlu0 %v987, 112
        %v1387 = vpop.permute.xlu0 %1386
        %v1389 = vsel %vm991, %v1240, 0
        %v1392 = vsel %vm1246, %v1387, 0
        %1394 = vmatprep.subr.bf16.mxu0 0
        %1395 = vmatpush1.bf16.msra.mxu0 %v1392
        %1396 = vmatprep.subr.bf16.mxu0 0
        %1397 = vmatpush1.bf16.msra.mxu0 0
        %1398 = vmatprep.subr.bf16.mxu0 0
        %1399 = vmatpush1.bf16.msra.mxu0 0
        %1400 = vmatprep.subr.bf16.mxu0 0
        %1401 = vmatpush1.bf16.msra.mxu0 0
        %1402 = vmatprep.subr.bf16.mxu0 0
        %1403 = vmatpush1.bf16.msra.mxu0 0
        %1404 = vmatprep.subr.bf16.mxu0 0
        %1405 = vmatpush1.bf16.msra.mxu0 0
        %1406 = vmatprep.subr.bf16.mxu0 0
        %1407 = vmatpush1.bf16.msra.mxu0 0
        %1408 = vmatprep.subr.bf16.mxu0 0
        %1409 = vmatpush1.bf16.msra.mxu0 0
        %1410 = vmatprep.subr.bf16.mxu0 0
        %1411 = vmatpush1.bf16.msra.mxu0 0
        %1412 = vmatprep.subr.bf16.mxu0 0
        %1413 = vmatpush1.bf16.msra.mxu0 0
        %1414 = vmatprep.subr.bf16.mxu0 0
        %1415 = vmatpush1.bf16.msra.mxu0 0
        %1416 = vmatprep.subr.bf16.mxu0 0
        %1417 = vmatpush1.bf16.msra.mxu0 0
        %1418 = vmatprep.subr.bf16.mxu0 0
        %1419 = vmatpush1.bf16.msra.mxu0 0
        %1420 = vmatprep.subr.bf16.mxu0 0
        %1421 = vmatpush1.bf16.msra.mxu0 0
        %1422 = vmatprep.subr.bf16.mxu0 0
        %1423 = vmatpush1.bf16.msra.mxu0 0
        %1424 = vmatprep.subr.bf16.mxu0 0
        %1425 = vmatpush1.bf16.msra.mxu0 0
        %1426 = vmatprep.mubr.bf16.mxu0 0
        %1427 = vmatmul.mubr.bf16.gmra.mrb[0].mxu0 %v1389
        %v1428 = vpop.f32.mrb[0].mxu0
        %v1429 = vadd.f32 0.0, %v1428
        %v1430 = vpop.f32.mrb[0].mxu0
        %v1431 = vpop.f32.mrb[0].mxu0
        %v1432 = vpop.f32.mrb[0].mxu0
        %1433 = vdwg.mxu0
        %1435 = vrot.lane.b32.xlu0 %v1333, 8
        %v1436 = vpop.permute.xlu0 %1435
        %1439 = vrot.lane.b32.xlu0 %v1381, 16
        %v1440 = vpop.permute.xlu0 %1439
        %1443 = vrot.lane.b32.xlu0 %v1429, 24
        %v1444 = vpop.permute.xlu0 %1443
        %v1446 = vsel %vm991, %v1285, %v1436
        %vm1447 = vcmask 130048
        %v1448 = vsel %vm1447, %v1446, %v1440
        %vm1449 = vcmask 195584
        %v1450 = vsel %vm1449, %v1448, %v1444
        %v1451 = vpack.c.bf16 %v1450, %v1450
        %v1452 = vld [vmem:[%s5] sm:$0xf]
        %v1453 = vld [vmem:[%s5 + $0x4] sm:$0xf]
        %v1454 = vld [vmem:[%s5 + $0x8] sm:$0xf]
        %v1455 = vld [vmem:[%s5 + $0xc] sm:$0xf]
        %v1456 = vld [vmem:[%s6] sm:$0x1]
        %v1458 = vlaneseq
        %v1459 = vshrl.u32 %v1458, 7
        %v1460 = vsub.s32 0, %v1459
        %v1461 = vrot.slane %v1456, %v1460
        %v1467 = vunpack.c.l.b16 %v1452
        %v1468 = vunpack.c.l.b16 %v1453
        %v1469 = vunpack.c.l.b16 %v1454
        %v1470 = vunpack.c.l.b16 %v1455
        %v1471 = vpack.c.b16 %v1468, %v1467
        %v1472 = vpack.c.b16 %v1470, %v1469
        %v1476 = vsel %vm784, %v1451, 0
        %1478 = vmatprep.subr.bf16.mxu0 0
        %1479 = vmatpush1.bf16.msra.mxu0 %v1471
        %1480 = vmatprep.subr.bf16.mxu0 0
        %1481 = vmatpush1.bf16.msra.mxu0 %v1472
        %1482 = vmatprep.subr.bf16.mxu0 0
        %1483 = vmatpush1.bf16.msra.mxu0 0
        %1484 = vmatprep.subr.bf16.mxu0 0
        %1485 = vmatpush1.bf16.msra.mxu0 0
        %1486 = vmatprep.subr.bf16.mxu0 0
        %1487 = vmatpush1.bf16.msra.mxu0 0
        %1488 = vmatprep.subr.bf16.mxu0 0
        %1489 = vmatpush1.bf16.msra.mxu0 0
        %1490 = vmatprep.subr.bf16.mxu0 0
        %1491 = vmatpush1.bf16.msra.mxu0 0
        %1492 = vmatprep.subr.bf16.mxu0 0
        %1493 = vmatpush1.bf16.msra.mxu0 0
        %1494 = vmatprep.subr.bf16.mxu0 0
        %1495 = vmatpush1.bf16.msra.mxu0 0
        %1496 = vmatprep.subr.bf16.mxu0 0
        %1497 = vmatpush1.bf16.msra.mxu0 0
        %1498 = vmatprep.subr.bf16.mxu0 0
        %1499 = vmatpush1.bf16.msra.mxu0 0
        %1500 = vmatprep.subr.bf16.mxu0 0
        %1501 = vmatpush1.bf16.msra.mxu0 0
        %1502 = vmatprep.subr.bf16.mxu0 0
        %1503 = vmatpush1.bf16.msra.mxu0 0
        %1504 = vmatprep.subr.bf16.mxu0 0
        %1505 = vmatpush1.bf16.msra.mxu0 0
        %1506 = vmatprep.subr.bf16.mxu0 0
        %1507 = vmatpush1.bf16.msra.mxu0 0
        %1508 = vmatprep.subr.bf16.mxu0 0
        %1509 = vmatpush1.bf16.msra.mxu0 0
        %1510 = vmatprep.mubr.bf16.mxu0 0
        %1511 = vmatmul.mubr.bf16.gmra.mrb[0].mxu0 %v1476
        %v1512 = vpop.f32.mrb[0].mxu0
        %v1513 = vadd.f32 %v1461, %v1512
        %v1514 = vpop.f32.mrb[0].mxu0
        %v1515 = vpop.f32.mrb[0].mxu0
        %v1516 = vpop.f32.mrb[0].mxu0
        %1517 = vdwg.mxu0
        %v1518 = vadd.f32 %v725, %v1513
        %v1519 = vld [vmem:[%s7] sm:$0x1]
        %v1520 = vld [vmem:[%s8] sm:$0x1]
        %v1521 = vsel %vm784, %v1518, 0.0
        %1522 = vadd.xlane.f32.xlu0 %v1521
        %v1523 = vpop.xlane.xlu0 %1522
        %v1524 = vrcp.pop 32.0
        %v1525 = vmul.f32 %v1523, %v1524
        %v1526 = vsub.f32 %v1518, %v1525
        %v1527 = vmul.f32 %v1526, %v1526
        %v1528 = vsel %vm784, %v1527, 0.0
        %1529 = vadd.xlane.f32.xlu0 %v1528
        %v1530 = vpop.xlane.xlu0 %1529
        %v1531 = vmul.f32 %v1530, %v1524
        %v1532 = vadd.f32 %v1531, 1e-05
        %v1533 = vrsqrt.pop %v1532
        %v1534 = vmul.f32 %v1526, %v1533
        %v1536 = vlaneseq
        %v1537 = vshrl.u32 %v1536, 7
        %v1538 = vsub.s32 0, %v1537
        %v1539 = vrot.slane %v1519, %v1538
        %v1541 = vmul.f32 %v1534, %v1539
        %v1543 = vlaneseq
        %v1544 = vshrl.u32 %v1543, 7
        %v1545 = vsub.s32 0, %v1544
        %v1546 = vrot.slane %v1520, %v1545
        %v1548 = vadd.f32 %v1541, %v1546
        %v1549 = vpack.c.bf16 %v1548, %v1548
        %v1550 = vld [vmem:[%s9] sm:$0xf]
        %v1551 = vld [vmem:[%s9 + $0x4] sm:$0xf]
        %v1552 = vld [vmem:[%s9 + $0x8] sm:$0xf]
        %v1553 = vld [vmem:[%s9 + $0xc] sm:$0xf]
        %v1554 = vld [vmem:[%s9 + $0x10] sm:$0xf]
        %v1555 = vld [vmem:[%s9 + $0x14] sm:$0xf]
        %v1556 = vld [vmem:[%s9 + $0x18] sm:$0xf]
        %v1557 = vld [vmem:[%s9 + $0x1c] sm:$0xf]
        %v1558 = vld [vmem:[%s9 + $0x20] sm:$0xf]
        %v1559 = vld [vmem:[%s9 + $0x24] sm:$0xf]
        %v1560 = vld [vmem:[%s9 + $0x28] sm:$0xf]
        %v1561 = vld [vmem:[%s9 + $0x2c] sm:$0xf]
        %v1562 = vld [vmem:[%s9 + $0x30] sm:$0xf]
        %v1563 = vld [vmem:[%s9 + $0x34] sm:$0xf]
        %v1564 = vld [vmem:[%s9 + $0x38] sm:$0xf]
        %v1565 = vld [vmem:[%s9 + $0x3c] sm:$0xf]
        %v1566 = vld [vmem:[%s10] sm:$0x1]
        %v1567 = vld [vmem:[%s10 + $0x1] sm:$0x1]
        %v1568 = vld [vmem:[%s10 + $0x2] sm:$0x1]
        %v1569 = vld [vmem:[%s10 + $0x3] sm:$0x1]
        %v1574 = vlaneseq
        %v1575 = vshrl.u32 %v1574, 7
        %v1576 = vsub.s32 0, %v1575
        %v1577 = vrot.slane %v1566, %v1576
        %v1578 = vlaneseq
        %v1579 = vshrl.u32 %v1578, 7
        %v1580 = vsub.s32 0, %v1579
        %v1581 = vrot.slane %v1567, %v1580
        %v1582 = vlaneseq
        %v1583 = vshrl.u32 %v1582, 7
        %v1584 = vsub.s32 0, %v1583
        %v1585 = vrot.slane %v1568, %v1584
        %v1586 = vlaneseq
        %v1587 = vshrl.u32 %v1586, 7
        %v1588 = vsub.s32 0, %v1587
        %v1589 = vrot.slane %v1569, %v1588
        %v1598 = vunpack.c.l.b16 %v1550
        %v1599 = vunpack.c.l.b16 %v1551
        %v1600 = vunpack.c.l.b16 %v1552
        %v1601 = vunpack.c.l.b16 %v1553
        %v1602 = vpack.c.b16 %v1599, %v1598
        %v1603 = vpack.c.b16 %v1601, %v1600
        %v1607 = vsel %vm784, %v1549, 0
        %1609 = vmatprep.subr.bf16.mxu0 0
        %1610 = vmatpush1.bf16.msra.mxu0 %v1602
        %1611 = vmatprep.subr.bf16.mxu0 0
        %1612 = vmatpush1.bf16.msra.mxu0 %v1603
        %1613 = vmatprep.subr.bf16.mxu0 0
        %1614 = vmatpush1.bf16.msra.mxu0 0
        %1615 = vmatprep.subr.bf16.mxu0 0
        %1616 = vmatpush1.bf16.msra.mxu0 0
        %1617 = vmatprep.subr.bf16.mxu0 0
        %1618 = vmatpush1.bf16.msra.mxu0 0
        %1619 = vmatprep.subr.bf16.mxu0 0
        %1620 = vmatpush1.bf16.msra.mxu0 0
        %1621 = vmatprep.subr.bf16.mxu0 0
        %1622 = vmatpush1.bf16.msra.mxu0 0
        %1623 = vmatprep.subr.bf16.mxu0 0
        %1624 = vmatpush1.bf16.msra.mxu0 0
        %1625 = vmatprep.subr.bf16.mxu0 0
        %1626 = vmatpush1.bf16.msra.mxu0 0
        %1627 = vmatprep.subr.bf16.mxu0 0
        %1628 = vmatpush1.bf16.msra.mxu0 0
        %1629 = vmatprep.subr.bf16.mxu0 0
        %1630 = vmatpush1.bf16.msra.mxu0 0
        %1631 = vmatprep.subr.bf16.mxu0 0
        %1632 = vmatpush1.bf16.msra.mxu0 0
        %1633 = vmatprep.subr.bf16.mxu0 0
        %1634 = vmatpush1.bf16.msra.mxu0 0
        %1635 = vmatprep.subr.bf16.mxu0 0
        %1636 = vmatpush1.bf16.msra.mxu0 0
        %1637 = vmatprep.subr.bf16.mxu0 0
        %1638 = vmatpush1.bf16.msra.mxu0 0
        %1639 = vmatprep.subr.bf16.mxu0 0
        %1640 = vmatpush1.bf16.msra.mxu0 0
        %1641 = vmatprep.mubr.bf16.mxu0 0
        %1642 = vmatmul.mubr.bf16.gmra.mrb[0].mxu0 %v1607
        %v1643 = vpop.f32.mrb[0].mxu0
        %v1644 = vadd.f32 %v1577, %v1643
        %v1645 = vpop.f32.mrb[0].mxu0
        %v1646 = vpop.f32.mrb[0].mxu0
        %v1647 = vpop.f32.mrb[0].mxu0
        %1648 = vdwg.mxu0
        %v1653 = vunpack.c.l.b16 %v1554
        %v1654 = vunpack.c.l.b16 %v1555
        %v1655 = vunpack.c.l.b16 %v1556
        %v1656 = vunpack.c.l.b16 %v1557
        %v1657 = vpack.c.b16 %v1654, %v1653
        %v1658 = vpack.c.b16 %v1656, %v1655
        %1661 = vmatprep.subr.bf16.mxu0 0
        %1662 = vmatpush1.bf16.msra.mxu0 %v1657
        %1663 = vmatprep.subr.bf16.mxu0 0
        %1664 = vmatpush1.bf16.msra.mxu0 %v1658
        %1665 = vmatprep.subr.bf16.mxu0 0
        %1666 = vmatpush1.bf16.msra.mxu0 0
        %1667 = vmatprep.subr.bf16.mxu0 0
        %1668 = vmatpush1.bf16.msra.mxu0 0
        %1669 = vmatprep.subr.bf16.mxu0 0
        %1670 = vmatpush1.bf16.msra.mxu0 0
        %1671 = vmatprep.subr.bf16.mxu0 0
        %1672 = vmatpush1.bf16.msra.mxu0 0
        %1673 = vmatprep.subr.bf16.mxu0 0
        %1674 = vmatpush1.bf16.msra.mxu0 0
        %1675 = vmatprep.subr.bf16.mxu0 0
        %1676 = vmatpush1.bf16.msra.mxu0 0
        %1677 = vmatprep.subr.bf16.mxu0 0
        %1678 = vmatpush1.bf16.msra.mxu0 0
        %1679 = vmatprep.subr.bf16.mxu0 0
        %1680 = vmatpush1.bf16.msra.mxu0 0
        %1681 = vmatprep.subr.bf16.mxu0 0
        %1682 = vmatpush1.bf16.msra.mxu0 0
        %1683 = vmatprep.subr.bf16.mxu0 0
        %1684 = vmatpush1.bf16.msra.mxu0 0
        %1685 = vmatprep.subr.bf16.mxu0 0
        %1686 = vmatpush1.bf16.msra.mxu0 0
        %1687 = vmatprep.subr.bf16.mxu0 0
        %1688 = vmatpush1.bf16.msra.mxu0 0
        %1689 = vmatprep.subr.bf16.mxu0 0
        %1690 = vmatpush1.bf16.msra.mxu0 0
        %1691 = vmatprep.subr.bf16.mxu0 0
        %1692 = vmatpush1.bf16.msra.mxu0 0
        %1693 = vmatprep.mubr.bf16.mxu0 0
        %1694 = vmatmul.mubr.bf16.gmra.mrb[0].mxu0 %v1607
        %v1695 = vpop.f32.mrb[0].mxu0
        %v1696 = vadd.f32 %v1581, %v1695
        %v1697 = vpop.f32.mrb[0].mxu0
        %v1698 = vpop.f32.mrb[0].mxu0
        %v1699 = vpop.f32.mrb[0].mxu0
        %1700 = vdwg.mxu0
        %v1705 = vunpack.c.l.b16 %v1558
        %v1706 = vunpack.c.l.b16 %v1559
        %v1707 = vunpack.c.l.b16 %v1560
        %v1708 = vunpack.c.l.b16 %v1561
        %v1709 = vpack.c.b16 %v1706, %v1705
        %v1710 = vpack.c.b16 %v1708, %v1707
        %1713 = vmatprep.subr.bf16.mxu0 0
        %1714 = vmatpush1.bf16.msra.mxu0 %v1709
        %1715 = vmatprep.subr.bf16.mxu0 0
        %1716 = vmatpush1.bf16.msra.mxu0 %v1710
        %1717 = vmatprep.subr.bf16.mxu0 0
        %1718 = vmatpush1.bf16.msra.mxu0 0
        %1719 = vmatprep.subr.bf16.mxu0 0
        %1720 = vmatpush1.bf16.msra.mxu0 0
        %1721 = vmatprep.subr.bf16.mxu0 0
        %1722 = vmatpush1.bf16.msra.mxu0 0
        %1723 = vmatprep.subr.bf16.mxu0 0
        %1724 = vmatpush1.bf16.msra.mxu0 0
        %1725 = vmatprep.subr.bf16.mxu0 0
        %1726 = vmatpush1.bf16.msra.mxu0 0
        %1727 = vmatprep.subr.bf16.mxu0 0
        %1728 = vmatpush1.bf16.msra.mxu0 0
        %1729 = vmatprep.subr.bf16.mxu0 0
        %1730 = vmatpush1.bf16.msra.mxu0 0
        %1731 = vmatprep.subr.bf16.mxu0 0
        %1732 = vmatpush1.bf16.msra.mxu0 0
        %1733 = vmatprep.subr.bf16.mxu0 0
        %1734 = vmatpush1.bf16.msra.mxu0 0
        %1735 = vmatprep.subr.bf16.mxu0 0
        %1736 = vmatpush1.bf16.msra.mxu0 0
        %1737 = vmatprep.subr.bf16.mxu0 0
        %1738 = vmatpush1.bf16.msra.mxu0 0
        %1739 = vmatprep.subr.bf16.mxu0 0
        %1740 = vmatpush1.bf16.msra.mxu0 0
        %1741 = vmatprep.subr.bf16.mxu0 0
        %1742 = vmatpush1.bf16.msra.mxu0 0
        %1743 = vmatprep.subr.bf16.mxu0 0
        %1744 = vmatpush1.bf16.msra.mxu0 0
        %1745 = vmatprep.mubr.bf16.mxu0 0
        %1746 = vmatmul.mubr.bf16.gmra.mrb[0].mxu0 %v1607
        %v1747 = vpop.f32.mrb[0].mxu0
        %v1748 = vadd.f32 %v1585, %v1747
        %v1749 = vpop.f32.mrb[0].mxu0
        %v1750 = vpop.f32.mrb[0].mxu0
        %v1751 = vpop.f32.mrb[0].mxu0
        %1752 = vdwg.mxu0
        %v1757 = vunpack.c.l.b16 %v1562
        %v1758 = vunpack.c.l.b16 %v1563
        %v1759 = vunpack.c.l.b16 %v1564
        %v1760 = vunpack.c.l.b16 %v1565
        %v1761 = vpack.c.b16 %v1758, %v1757
        %v1762 = vpack.c.b16 %v1760, %v1759
        %1765 = vmatprep.subr.bf16.mxu0 0
        %1766 = vmatpush1.bf16.msra.mxu0 %v1761
        %1767 = vmatprep.subr.bf16.mxu0 0
        %1768 = vmatpush1.bf16.msra.mxu0 %v1762
        %1769 = vmatprep.subr.bf16.mxu0 0
        %1770 = vmatpush1.bf16.msra.mxu0 0
        %1771 = vmatprep.subr.bf16.mxu0 0
        %1772 = vmatpush1.bf16.msra.mxu0 0
        %1773 = vmatprep.subr.bf16.mxu0 0
        %1774 = vmatpush1.bf16.msra.mxu0 0
        %1775 = vmatprep.subr.bf16.mxu0 0
        %1776 = vmatpush1.bf16.msra.mxu0 0
        %1777 = vmatprep.subr.bf16.mxu0 0
        %1778 = vmatpush1.bf16.msra.mxu0 0
        %1779 = vmatprep.subr.bf16.mxu0 0
        %1780 = vmatpush1.bf16.msra.mxu0 0
        %1781 = vmatprep.subr.bf16.mxu0 0
        %1782 = vmatpush1.bf16.msra.mxu0 0
        %1783 = vmatprep.subr.bf16.mxu0 0
        %1784 = vmatpush1.bf16.msra.mxu0 0
        %1785 = vmatprep.subr.bf16.mxu0 0
        %1786 = vmatpush1.bf16.msra.mxu0 0
        %1787 = vmatprep.subr.bf16.mxu0 0
        %1788 = vmatpush1.bf16.msra.mxu0 0
        %1789 = vmatprep.subr.bf16.mxu0 0
        %1790 = vmatpush1.bf16.msra.mxu0 0
        %1791 = vmatprep.subr.bf16.mxu0 0
        %1792 = vmatpush1.bf16.msra.mxu0 0
        %1793 = vmatprep.subr.bf16.mxu0 0
        %1794 = vmatpush1.bf16.msra.mxu0 0
        %1795 = vmatprep.subr.bf16.mxu0 0
        %1796 = vmatpush1.bf16.msra.mxu0 0
        %1797 = vmatprep.mubr.bf16.mxu0 0
        %1798 = vmatmul.mubr.bf16.gmra.mrb[0].mxu0 %v1607
        %v1799 = vpop.f32.mrb[0].mxu0
        %v1800 = vadd.f32 %v1589, %v1799
        %v1801 = vpop.f32.mrb[0].mxu0
        %v1802 = vpop.f32.mrb[0].mxu0
        %v1803 = vpop.f32.mrb[0].mxu0
        %1804 = vdwg.mxu0
        %v1805 = vpack.c.bf16 %v1644, %v1644
        %v1806 = vpack.c.bf16 %v1696, %v1696
        %v1807 = vpack.c.bf16 %v1748, %v1748
        %v1808 = vpack.c.bf16 %v1800, %v1800
        %v1809 = vld [vmem:[%s11] sm:$0xf]
        %v1810 = vld [vmem:[%s11 + $0x4] sm:$0xf]
        %v1811 = vld [vmem:[%s11 + $0x8] sm:$0xf]
        %v1812 = vld [vmem:[%s11 + $0xc] sm:$0xf]
        %v1813 = vld [vmem:[%s11 + $0x10] sm:$0xf]
        %v1814 = vld [vmem:[%s11 + $0x14] sm:$0xf]
        %v1815 = vld [vmem:[%s11 + $0x18] sm:$0xf]
        %v1816 = vld [vmem:[%s11 + $0x1c] sm:$0xf]
        %v1817 = vld [vmem:[%s11 + $0x20] sm:$0xf]
        %v1818 = vld [vmem:[%s11 + $0x24] sm:$0xf]
        %v1819 = vld [vmem:[%s11 + $0x28] sm:$0xf]
        %v1820 = vld [vmem:[%s11 + $0x2c] sm:$0xf]
        %v1821 = vld [vmem:[%s11 + $0x30] sm:$0xf]
        %v1822 = vld [vmem:[%s11 + $0x34] sm:$0xf]
        %v1823 = vld [vmem:[%s11 + $0x38] sm:$0xf]
        %v1824 = vld [vmem:[%s11 + $0x3c] sm:$0xf]
        %v1825 = vld [vmem:[%s12] sm:$0x1]
        %v1826 = vld [vmem:[%s12 + $0x1] sm:$0x1]
        %v1827 = vld [vmem:[%s12 + $0x2] sm:$0x1]
        %v1828 = vld [vmem:[%s12 + $0x3] sm:$0x1]
        %v1833 = vlaneseq
        %v1834 = vshrl.u32 %v1833, 7
        %v1835 = vsub.s32 0, %v1834
        %v1836 = vrot.slane %v1825, %v1835
        %v1837 = vlaneseq
        %v1838 = vshrl.u32 %v1837, 7
        %v1839 = vsub.s32 0, %v1838
        %v1840 = vrot.slane %v1826, %v1839
        %v1841 = vlaneseq
        %v1842 = vshrl.u32 %v1841, 7
        %v1843 = vsub.s32 0, %v1842
        %v1844 = vrot.slane %v1827, %v1843
        %v1845 = vlaneseq
        %v1846 = vshrl.u32 %v1845, 7
        %v1847 = vsub.s32 0, %v1846
        %v1848 = vrot.slane %v1828, %v1847
        %v1857 = vunpack.c.l.b16 %v1809
        %v1858 = vunpack.c.l.b16 %v1810
        %v1859 = vunpack.c.l.b16 %v1811
        %v1860 = vunpack.c.l.b16 %v1812
        %v1861 = vpack.c.b16 %v1858, %v1857
        %v1862 = vpack.c.b16 %v1860, %v1859
        %v1866 = vsel %vm784, %v726, 0
        %1868 = vmatprep.subr.bf16.mxu0 0
        %1869 = vmatpush1.bf16.msra.mxu0 %v1861
        %1870 = vmatprep.subr.bf16.mxu0 0
        %1871 = vmatpush1.bf16.msra.mxu0 %v1862
        %1872 = vmatprep.subr.bf16.mxu0 0
        %1873 = vmatpush1.bf16.msra.mxu0 0
        %1874 = vmatprep.subr.bf16.mxu0 0
        %1875 = vmatpush1.bf16.msra.mxu0 0
        %1876 = vmatprep.subr.bf16.mxu0 0
        %1877 = vmatpush1.bf16.msra.mxu0 0
        %1878 = vmatprep.subr.bf16.mxu0 0
        %1879 = vmatpush1.bf16.msra.mxu0 0
        %1880 = vmatprep.subr.bf16.mxu0 0
        %1881 = vmatpush1.bf16.msra.mxu0 0
        %1882 = vmatprep.subr.bf16.mxu0 0
        %1883 = vmatpush1.bf16.msra.mxu0 0
        %1884 = vmatprep.subr.bf16.mxu0 0
        %1885 = vmatpush1.bf16.msra.mxu0 0
        %1886 = vmatprep.subr.bf16.mxu0 0
        %1887 = vmatpush1.bf16.msra.mxu0 0
        %1888 = vmatprep.subr.bf16.mxu0 0
        %1889 = vmatpush1.bf16.msra.mxu0 0
        %1890 = vmatprep.subr.bf16.mxu0 0
        %1891 = vmatpush1.bf16.msra.mxu0 0
        %1892 = vmatprep.subr.bf16.mxu0 0
        %1893 = vmatpush1.bf16.msra.mxu0 0
        %1894 = vmatprep.subr.bf16.mxu0 0
        %1895 = vmatpush1.bf16.msra.mxu0 0
        %1896 = vmatprep.subr.bf16.mxu0 0
        %1897 = vmatpush1.bf16.msra.mxu0 0
        %1898 = vmatprep.subr.bf16.mxu0 0
        %1899 = vmatpush1.bf16.msra.mxu0 0
        %1900 = vmatprep.mubr.bf16.mxu0 0
        %1901 = vmatmul.mubr.bf16.gmra.mrb[0].mxu0 %v1866
        %v1902 = vpop.f32.mrb[0].mxu0
        %v1903 = vadd.f32 %v1836, %v1902
        %v1904 = vpop.f32.mrb[0].mxu0
        %v1905 = vpop.f32.mrb[0].mxu0
        %v1906 = vpop.f32.mrb[0].mxu0
        %1907 = vdwg.mxu0
        %v1912 = vunpack.c.l.b16 %v1813
        %v1913 = vunpack.c.l.b16 %v1814
        %v1914 = vunpack.c.l.b16 %v1815
        %v1915 = vunpack.c.l.b16 %v1816
        %v1916 = vpack.c.b16 %v1913, %v1912
        %v1917 = vpack.c.b16 %v1915, %v1914
        %1920 = vmatprep.subr.bf16.mxu0 0
        %1921 = vmatpush1.bf16.msra.mxu0 %v1916
        %1922 = vmatprep.subr.bf16.mxu0 0
        %1923 = vmatpush1.bf16.msra.mxu0 %v1917
        %1924 = vmatprep.subr.bf16.mxu0 0
        %1925 = vmatpush1.bf16.msra.mxu0 0
        %1926 = vmatprep.subr.bf16.mxu0 0
        %1927 = vmatpush1.bf16.msra.mxu0 0
        %1928 = vmatprep.subr.bf16.mxu0 0
        %1929 = vmatpush1.bf16.msra.mxu0 0
        %1930 = vmatprep.subr.bf16.mxu0 0
        %1931 = vmatpush1.bf16.msra.mxu0 0
        %1932 = vmatprep.subr.bf16.mxu0 0
        %1933 = vmatpush1.bf16.msra.mxu0 0
        %1934 = vmatprep.subr.bf16.mxu0 0
        %1935 = vmatpush1.bf16.msra.mxu0 0
        %1936 = vmatprep.subr.bf16.mxu0 0
        %1937 = vmatpush1.bf16.msra.mxu0 0
        %1938 = vmatprep.subr.bf16.mxu0 0
        %1939 = vmatpush1.bf16.msra.mxu0 0
        %1940 = vmatprep.subr.bf16.mxu0 0
        %1941 = vmatpush1.bf16.msra.mxu0 0
        %1942 = vmatprep.subr.bf16.mxu0 0
        %1943 = vmatpush1.bf16.msra.mxu0 0
        %1944 = vmatprep.subr.bf16.mxu0 0
        %1945 = vmatpush1.bf16.msra.mxu0 0
        %1946 = vmatprep.subr.bf16.mxu0 0
        %1947 = vmatpush1.bf16.msra.mxu0 0
        %1948 = vmatprep.subr.bf16.mxu0 0
        %1949 = vmatpush1.bf16.msra.mxu0 0
        %1950 = vmatprep.subr.bf16.mxu0 0
        %1951 = vmatpush1.bf16.msra.mxu0 0
        %1952 = vmatprep.mubr.bf16.mxu0 0
        %1953 = vmatmul.mubr.bf16.gmra.mrb[0].mxu0 %v1866
        %v1954 = vpop.f32.mrb[0].mxu0
        %v1955 = vadd.f32 %v1840, %v1954
        %v1956 = vpop.f32.mrb[0].mxu0
        %v1957 = vpop.f32.mrb[0].mxu0
        %v1958 = vpop.f32.mrb[0].mxu0
        %1959 = vdwg.mxu0
        %v1964 = vunpack.c.l.b16 %v1817
        %v1965 = vunpack.c.l.b16 %v1818
        %v1966 = vunpack.c.l.b16 %v1819
        %v1967 = vunpack.c.l.b16 %v1820
        %v1968 = vpack.c.b16 %v1965, %v1964
        %v1969 = vpack.c.b16 %v1967, %v1966
        %1972 = vmatprep.subr.bf16.mxu0 0
        %1973 = vmatpush1.bf16.msra.mxu0 %v1968
        %1974 = vmatprep.subr.bf16.mxu0 0
        %1975 = vmatpush1.bf16.msra.mxu0 %v1969
        %1976 = vmatprep.subr.bf16.mxu0 0
        %1977 = vmatpush1.bf16.msra.mxu0 0
        %1978 = vmatprep.subr.bf16.mxu0 0
        %1979 = vmatpush1.bf16.msra.mxu0 0
        %1980 = vmatprep.subr.bf16.mxu0 0
        %1981 = vmatpush1.bf16.msra.mxu0 0
        %1982 = vmatprep.subr.bf16.mxu0 0
        %1983 = vmatpush1.bf16.msra.mxu0 0
        %1984 = vmatprep.subr.bf16.mxu0 0
        %1985 = vmatpush1.bf16.msra.mxu0 0
        %1986 = vmatprep.subr.bf16.mxu0 0
        %1987 = vmatpush1.bf16.msra.mxu0 0
        %1988 = vmatprep.subr.bf16.mxu0 0
        %1989 = vmatpush1.bf16.msra.mxu0 0
        %1990 = vmatprep.subr.bf16.mxu0 0
        %1991 = vmatpush1.bf16.msra.mxu0 0
        %1992 = vmatprep.subr.bf16.mxu0 0
        %1993 = vmatpush1.bf16.msra.mxu0 0
        %1994 = vmatprep.subr.bf16.mxu0 0
        %1995 = vmatpush1.bf16.msra.mxu0 0
        %1996 = vmatprep.subr.bf16.mxu0 0
        %1997 = vmatpush1.bf16.msra.mxu0 0
        %1998 = vmatprep.subr.bf16.mxu0 0
        %1999 = vmatpush1.bf16.msra.mxu0 0
        %2000 = vmatprep.subr.bf16.mxu0 0
        %2001 = vmatpush1.bf16.msra.mxu0 0
        %2002 = vmatprep.subr.bf16.mxu0 0
        %2003 = vmatpush1.bf16.msra.mxu0 0
        %2004 = vmatprep.mubr.bf16.mxu0 0
        %2005 = vmatmul.mubr.bf16.gmra.mrb[0].mxu0 %v1866
        %v2006 = vpop.f32.mrb[0].mxu0
        %v2007 = vadd.f32 %v1844, %v2006
        %v2008 = vpop.f32.mrb[0].mxu0
        %v2009 = vpop.f32.mrb[0].mxu0
        %v2010 = vpop.f32.mrb[0].mxu0
        %2011 = vdwg.mxu0
        %v2016 = vunpack.c.l.b16 %v1821
        %v2017 = vunpack.c.l.b16 %v1822
        %v2018 = vunpack.c.l.b16 %v1823
        %v2019 = vunpack.c.l.b16 %v1824
        %v2020 = vpack.c.b16 %v2017, %v2016
        %v2021 = vpack.c.b16 %v2019, %v2018
        %2024 = vmatprep.subr.bf16.mxu0 0
        %2025 = vmatpush1.bf16.msra.mxu0 %v2020
        %2026 = vmatprep.subr.bf16.mxu0 0
        %2027 = vmatpush1.bf16.msra.mxu0 %v2021
        %2028 = vmatprep.subr.bf16.mxu0 0
        %2029 = vmatpush1.bf16.msra.mxu0 0
        %2030 = vmatprep.subr.bf16.mxu0 0
        %2031 = vmatpush1.bf16.msra.mxu0 0
        %2032 = vmatprep.subr.bf16.mxu0 0
        %2033 = vmatpush1.bf16.msra.mxu0 0
        %2034 = vmatprep.subr.bf16.mxu0 0
        %2035 = vmatpush1.bf16.msra.mxu0 0
        %2036 = vmatprep.subr.bf16.mxu0 0
        %2037 = vmatpush1.bf16.msra.mxu0 0
        %2038 = vmatprep.subr.bf16.mxu0 0
        %2039 = vmatpush1.bf16.msra.mxu0 0
        %2040 = vmatprep.subr.bf16.mxu0 0
        %2041 = vmatpush1.bf16.msra.mxu0 0
        %2042 = vmatprep.subr.bf16.mxu0 0
        %2043 = vmatpush1.bf16.msra.mxu0 0
        %2044 = vmatprep.subr.bf16.mxu0 0
        %2045 = vmatpush1.bf16.msra.mxu0 0
        %2046 = vmatprep.subr.bf16.mxu0 0
        %2047 = vmatpush1.bf16.msra.mxu0 0
        %2048 = vmatprep.subr.bf16.mxu0 0
        %2049 = vmatpush1.bf16.msra.mxu0 0
        %2050 = vmatprep.subr.bf16.mxu0 0
        %2051 = vmatpush1.bf16.msra.mxu0 0
        %2052 = vmatprep.subr.bf16.mxu0 0
        %2053 = vmatpush1.bf16.msra.mxu0 0
        %2054 = vmatprep.subr.bf16.mxu0 0
        %2055 = vmatpush1.bf16.msra.mxu0 0
        %2056 = vmatprep.mubr.bf16.mxu0 0
        %2057 = vmatmul.mubr.bf16.gmra.mrb[0].mxu0 %v1866
        %v2058 = vpop.f32.mrb[0].mxu0
        %v2059 = vadd.f32 %v1848, %v2058
        %v2060 = vpop.f32.mrb[0].mxu0
        %v2061 = vpop.f32.mrb[0].mxu0
        %v2062 = vpop.f32.mrb[0].mxu0
        %2063 = vdwg.mxu0
        %v2064 = vpack.c.bf16 %v1903, %v1903
        %v2065 = vpack.c.bf16 %v1955, %v1955
        %v2066 = vpack.c.bf16 %v2007, %v2007
        %v2067 = vpack.c.bf16 %v2059, %v2059
        %v2069 = vsel %vm991, %v1805, 0
        %v2072 = vsel %vm991, %v2064, 0
        %2074 = vmatprep.subr.bf16.mxu0 0
        %2075 = vmatpush1.bf16.xpose.msra.mxu0 %v2072
        %2076 = vmatprep.subr.bf16.mxu0 0
        %2077 = vmatpush1.bf16.xpose.msra.mxu0 0
        %2078 = vmatprep.subr.bf16.mxu0 0
        %2079 = vmatpush1.bf16.xpose.msra.mxu0 0
        %2080 = vmatprep.subr.bf16.mxu0 0
        %2081 = vmatpush1.bf16.xpose.msra.mxu0 0
        %2082 = vmatprep.subr.bf16.mxu0 0
        %2083 = vmatpush1.bf16.xpose.msra.mxu0 0
        %2084 = vmatprep.subr.bf16.mxu0 0
        %2085 = vmatpush1.bf16.xpose.msra.mxu0 0
        %2086 = vmatprep.subr.bf16.mxu0 0
        %2087 = vmatpush1.bf16.xpose.msra.mxu0 0
        %2088 = vmatprep.subr.bf16.mxu0 0
        %2089 = vmatpush1.bf16.xpose.msra.mxu0 0
        %2090 = vmatprep.subr.bf16.mxu0 0
        %2091 = vmatpush1.bf16.xpose.msra.mxu0 0
        %2092 = vmatprep.subr.bf16.mxu0 0
        %2093 = vmatpush1.bf16.xpose.msra.mxu0 0
        %2094 = vmatprep.subr.bf16.mxu0 0
        %2095 = vmatpush1.bf16.xpose.msra.mxu0 0
        %2096 = vmatprep.subr.bf16.mxu0 0
        %2097 = vmatpush1.bf16.xpose.msra.mxu0 0
        %2098 = vmatprep.subr.bf16.mxu0 0
        %2099 = vmatpush1.bf16.xpose.msra.mxu0 0
        %2100 = vmatprep.subr.bf16.mxu0 0
        %2101 = vmatpush1.bf16.xpose.msra.mxu0 0
        %2102 = vmatprep.subr.bf16.mxu0 0
        %2103 = vmatpush1.bf16.xpose.msra.mxu0 0
        %2104 = vmatprep.subr.bf16.mxu0 0
        %2105 = vmatpush1.bf16.xpose.msra.mxu0 0
        %2106 = vmatprep.mubr.bf16.mxu0 0
        %2107 = vmatmul.mubr.bf16.gmra.mrb[0].mxu0 %v2069
        %v2108 = vpop.f32.mrb[0].mxu0
        %v2109 = vadd.f32 0.0, %v2108
        %v2110 = vpop.f32.mrb[0].mxu0
        %v2111 = vpop.f32.mrb[0].mxu0
        %v2112 = vpop.f32.mrb[0].mxu0
        %2113 = vdwg.mxu0
        %v2115 = vsel %vm991, %v1806, 0
        %v2118 = vsel %vm991, %v2065, 0
        %2120 = vmatprep.subr.bf16.mxu0 0
        %2121 = vmatpush1.bf16.xpose.msra.mxu0 %v2118
        %2122 = vmatprep.subr.bf16.mxu0 0
        %2123 = vmatpush1.bf16.xpose.msra.mxu0 0
        %2124 = vmatprep.subr.bf16.mxu0 0
        %2125 = vmatpush1.bf16.xpose.msra.mxu0 0
        %2126 = vmatprep.subr.bf16.mxu0 0
        %2127 = vmatpush1.bf16.xpose.msra.mxu0 0
        %2128 = vmatprep.subr.bf16.mxu0 0
        %2129 = vmatpush1.bf16.xpose.msra.mxu0 0
        %2130 = vmatprep.subr.bf16.mxu0 0
        %2131 = vmatpush1.bf16.xpose.msra.mxu0 0
        %2132 = vmatprep.subr.bf16.mxu0 0
        %2133 = vmatpush1.bf16.xpose.msra.mxu0 0
        %2134 = vmatprep.subr.bf16.mxu0 0
        %2135 = vmatpush1.bf16.xpose.msra.mxu0 0
        %2136 = vmatprep.subr.bf16.mxu0 0
        %2137 = vmatpush1.bf16.xpose.msra.mxu0 0
        %2138 = vmatprep.subr.bf16.mxu0 0
        %2139 = vmatpush1.bf16.xpose.msra.mxu0 0
        %2140 = vmatprep.subr.bf16.mxu0 0
        %2141 = vmatpush1.bf16.xpose.msra.mxu0 0
        %2142 = vmatprep.subr.bf16.mxu0 0
        %2143 = vmatpush1.bf16.xpose.msra.mxu0 0
        %2144 = vmatprep.subr.bf16.mxu0 0
        %2145 = vmatpush1.bf16.xpose.msra.mxu0 0
        %2146 = vmatprep.subr.bf16.mxu0 0
        %2147 = vmatpush1.bf16.xpose.msra.mxu0 0
        %2148 = vmatprep.subr.bf16.mxu0 0
        %2149 = vmatpush1.bf16.xpose.msra.mxu0 0
        %2150 = vmatprep.subr.bf16.mxu0 0
        %2151 = vmatpush1.bf16.xpose.msra.mxu0 0
        %2152 = vmatprep.mubr.bf16.mxu0 0
        %2153 = vmatmul.mubr.bf16.gmra.mrb[0].mxu0 %v2115
        %v2154 = vpop.f32.mrb[0].mxu0
        %v2155 = vadd.f32 0.0, %v2154
        %v2156 = vpop.f32.mrb[0].mxu0
        %v2157 = vpop.f32.mrb[0].mxu0
        %v2158 = vpop.f32.mrb[0].mxu0
        %2159 = vdwg.mxu0
        %v2161 = vsel %vm991, %v1807, 0
        %v2164 = vsel %vm991, %v2066, 0
        %2166 = vmatprep.subr.bf16.mxu0 0
        %2167 = vmatpush1.bf16.xpose.msra.mxu0 %v2164
        %2168 = vmatprep.subr.bf16.mxu0 0
        %2169 = vmatpush1.bf16.xpose.msra.mxu0 0
        %2170 = vmatprep.subr.bf16.mxu0 0
        %2171 = vmatpush1.bf16.xpose.msra.mxu0 0
        %2172 = vmatprep.subr.bf16.mxu0 0
        %2173 = vmatpush1.bf16.xpose.msra.mxu0 0
        %2174 = vmatprep.subr.bf16.mxu0 0
        %2175 = vmatpush1.bf16.xpose.msra.mxu0 0
        %2176 = vmatprep.subr.bf16.mxu0 0
        %2177 = vmatpush1.bf16.xpose.msra.mxu0 0
        %2178 = vmatprep.subr.bf16.mxu0 0
        %2179 = vmatpush1.bf16.xpose.msra.mxu0 0
        %2180 = vmatprep.subr.bf16.mxu0 0
        %2181 = vmatpush1.bf16.xpose.msra.mxu0 0
        %2182 = vmatprep.subr.bf16.mxu0 0
        %2183 = vmatpush1.bf16.xpose.msra.mxu0 0
        %2184 = vmatprep.subr.bf16.mxu0 0
        %2185 = vmatpush1.bf16.xpose.msra.mxu0 0
        %2186 = vmatprep.subr.bf16.mxu0 0
        %2187 = vmatpush1.bf16.xpose.msra.mxu0 0
        %2188 = vmatprep.subr.bf16.mxu0 0
        %2189 = vmatpush1.bf16.xpose.msra.mxu0 0
        %2190 = vmatprep.subr.bf16.mxu0 0
        %2191 = vmatpush1.bf16.xpose.msra.mxu0 0
        %2192 = vmatprep.subr.bf16.mxu0 0
        %2193 = vmatpush1.bf16.xpose.msra.mxu0 0
        %2194 = vmatprep.subr.bf16.mxu0 0
        %2195 = vmatpush1.bf16.xpose.msra.mxu0 0
        %2196 = vmatprep.subr.bf16.mxu0 0
        %2197 = vmatpush1.bf16.xpose.msra.mxu0 0
        %2198 = vmatprep.mubr.bf16.mxu0 0
        %2199 = vmatmul.mubr.bf16.gmra.mrb[0].mxu0 %v2161
        %v2200 = vpop.f32.mrb[0].mxu0
        %v2201 = vadd.f32 0.0, %v2200
        %v2202 = vpop.f32.mrb[0].mxu0
        %v2203 = vpop.f32.mrb[0].mxu0
        %v2204 = vpop.f32.mrb[0].mxu0
        %2205 = vdwg.mxu0
        %v2207 = vsel %vm991, %v1808, 0
        %v2210 = vsel %vm991, %v2067, 0
        %2212 = vmatprep.subr.bf16.mxu0 0
        %2213 = vmatpush1.bf16.xpose.msra.mxu0 %v2210
        %2214 = vmatprep.subr.bf16.mxu0 0
        %2215 = vmatpush1.bf16.xpose.msra.mxu0 0
        %2216 = vmatprep.subr.bf16.mxu0 0
        %2217 = vmatpush1.bf16.xpose.msra.mxu0 0
        %2218 = vmatprep.subr.bf16.mxu0 0
        %2219 = vmatpush1.bf16.xpose.msra.mxu0 0
        %2220 = vmatprep.subr.bf16.mxu0 0
        %2221 = vmatpush1.bf16.xpose.msra.mxu0 0
        %2222 = vmatprep.subr.bf16.mxu0 0
        %2223 = vmatpush1.bf16.xpose.msra.mxu0 0
        %2224 = vmatprep.subr.bf16.mxu0 0
        %2225 = vmatpush1.bf16.xpose.msra.mxu0 0
        %2226 = vmatprep.subr.bf16.mxu0 0
        %2227 = vmatpush1.bf16.xpose.msra.mxu0 0
        %2228 = vmatprep.subr.bf16.mxu0 0
        %2229 = vmatpush1.bf16.xpose.msra.mxu0 0
        %2230 = vmatprep.subr.bf16.mxu0 0
        %2231 = vmatpush1.bf16.xpose.msra.mxu0 0
        %2232 = vmatprep.subr.bf16.mxu0 0
        %2233 = vmatpush1.bf16.xpose.msra.mxu0 0
        %2234 = vmatprep.subr.bf16.mxu0 0
        %2235 = vmatpush1.bf16.xpose.msra.mxu0 0
        %2236 = vmatprep.subr.bf16.mxu0 0
        %2237 = vmatpush1.bf16.xpose.msra.mxu0 0
        %2238 = vmatprep.subr.bf16.mxu0 0
        %2239 = vmatpush1.bf16.xpose.msra.mxu0 0
        %2240 = vmatprep.subr.bf16.mxu0 0
        %2241 = vmatpush1.bf16.xpose.msra.mxu0 0
        %2242 = vmatprep.subr.bf16.mxu0 0
        %2243 = vmatpush1.bf16.xpose.msra.mxu0 0
        %2244 = vmatprep.mubr.bf16.mxu0 0
        %2245 = vmatmul.mubr.bf16.gmra.mrb[0].mxu0 %v2207
        %v2246 = vpop.f32.mrb[0].mxu0
        %v2247 = vadd.f32 0.0, %v2246
        %v2248 = vpop.f32.mrb[0].mxu0
        %v2249 = vpop.f32.mrb[0].mxu0
        %v2250 = vpop.f32.mrb[0].mxu0
        %2251 = vdwg.mxu0
        %v2252 = vmul.f32 %v2109, 0.35355338
        %v2253 = vmul.f32 %v2155, 0.35355338
        %v2254 = vmul.f32 %v2201, 0.35355338
        %v2255 = vmul.f32 %v2247, 0.35355338
        %v2256 = vsel %vm991, %v2252, -inf
        %2257 = vmax.xlane.f32.xlu0 %v2256
        %v2258 = vpop.xlane.xlu0 %2257
        %v2259 = vsel %vm991, %v2253, -inf
        %2260 = vmax.xlane.f32.xlu0 %v2259
        %v2261 = vpop.xlane.xlu0 %2260
        %v2262 = vsel %vm991, %v2254, -inf
        %2263 = vmax.xlane.f32.xlu0 %v2262
        %v2264 = vpop.xlane.xlu0 %2263
        %v2265 = vsel %vm991, %v2255, -inf
        %2266 = vmax.xlane.f32.xlu0 %v2265
        %v2267 = vpop.xlane.xlu0 %2266
        %v2268 = vsub.f32 %v2252, %v2258
        %v2269 = vsub.f32 %v2253, %v2261
        %v2270 = vsub.f32 %v2254, %v2264
        %v2271 = vsub.f32 %v2255, %v2267
        %v2272 = vmul.f32 %v2268, 1.442695
        %v2273 = vpow.pop %v2272
        %v2274 = vmul.f32 %v2269, 1.442695
        %v2275 = vpow.pop %v2274
        %v2276 = vmul.f32 %v2270, 1.442695
        %v2277 = vpow.pop %v2276
        %v2278 = vmul.f32 %v2271, 1.442695
        %v2279 = vpow.pop %v2278
        %v2280 = vsel %vm991, %v2273, 0.0
        %2281 = vadd.xlane.f32.xlu0 %v2280
        %v2282 = vpop.xlane.xlu0 %2281
        %v2283 = vsel %vm991, %v2275, 0.0
        %2284 = vadd.xlane.f32.xlu0 %v2283
        %v2285 = vpop.xlane.xlu0 %2284
        %v2286 = vsel %vm991, %v2277, 0.0
        %2287 = vadd.xlane.f32.xlu0 %v2286
        %v2288 = vpop.xlane.xlu0 %2287
        %v2289 = vsel %vm991, %v2279, 0.0
        %2290 = vadd.xlane.f32.xlu0 %v2289
        %v2291 = vpop.xlane.xlu0 %2290
        %v2292 = vrcp.pop %v2282
        %v2293 = vrcp.pop %v2285
        %v2294 = vrcp.pop %v2288
        %v2295 = vrcp.pop %v2291
        %v2296 = vmul.f32 %v2273, %v2292
        %v2297 = vmul.f32 %v2275, %v2293
        %v2298 = vmul.f32 %v2277, %v2294
        %v2299 = vmul.f32 %v2279, %v2295
        %v2300 = vpack.c.bf16 %v2296, %v2296
        %v2301 = vpack.c.bf16 %v2297, %v2297
        %v2302 = vpack.c.bf16 %v2298, %v2298
        %v2303 = vpack.c.bf16 %v2299, %v2299
        %2305 = vrot.lane.b32.xlu0 %v2064, 120
        %v2306 = vpop.permute.xlu0 %2305
        %v2308 = vsel %vm991, %v2300, 0
        %v2311 = vsel %vm1246, %v2306, 0
        %2313 = vmatprep.subr.bf16.mxu0 0
        %2314 = vmatpush1.bf16.msra.mxu0 %v2311
        %2315 = vmatprep.subr.bf16.mxu0 0
        %2316 = vmatpush1.bf16.msra.mxu0 0
        %2317 = vmatprep.subr.bf16.mxu0 0
        %2318 = vmatpush1.bf16.msra.mxu0 0
        %2319 = vmatprep.subr.bf16.mxu0 0
        %2320 = vmatpush1.bf16.msra.mxu0 0
        %2321 = vmatprep.subr.bf16.mxu0 0
        %2322 = vmatpush1.bf16.msra.mxu0 0
        %2323 = vmatprep.subr.bf16.mxu0 0
        %2324 = vmatpush1.bf16.msra.mxu0 0
        %2325 = vmatprep.subr.bf16.mxu0 0
        %2326 = vmatpush1.bf16.msra.mxu0 0
        %2327 = vmatprep.subr.bf16.mxu0 0
        %2328 = vmatpush1.bf16.msra.mxu0 0
        %2329 = vmatprep.subr.bf16.mxu0 0
        %2330 = vmatpush1.bf16.msra.mxu0 0
        %2331 = vmatprep.subr.bf16.mxu0 0
        %2332 = vmatpush1.bf16.msra.mxu0 0
        %2333 = vmatprep.subr.bf16.mxu0 0
        %2334 = vmatpush1.bf16.msra.mxu0 0
        %2335 = vmatprep.subr.bf16.mxu0 0
        %2336 = vmatpush1.bf16.msra.mxu0 0
        %2337 = vmatprep.subr.bf16.mxu0 0
        %2338 = vmatpush1.bf16.msra.mxu0 0
        %2339 = vmatprep.subr.bf16.mxu0 0
        %2340 = vmatpush1.bf16.msra.mxu0 0
        %2341 = vmatprep.subr.bf16.mxu0 0
        %2342 = vmatpush1.bf16.msra.mxu0 0
        %2343 = vmatprep.subr.bf16.mxu0 0
        %2344 = vmatpush1.bf16.msra.mxu0 0
        %2345 = vmatprep.mubr.bf16.mxu0 0
        %2346 = vmatmul.mubr.bf16.gmra.mrb[0].mxu0 %v2308
        %v2347 = vpop.f32.mrb[0].mxu0
        %v2348 = vadd.f32 0.0, %v2347
        %v2349 = vpop.f32.mrb[0].mxu0
        %v2350 = vpop.f32.mrb[0].mxu0
        %v2351 = vpop.f32.mrb[0].mxu0
        %2352 = vdwg.mxu0
        %2354 = vrot.lane.b32.xlu0 %v2065, 120
        %v2355 = vpop.permute.xlu0 %2354
        %v2357 = vsel %vm991, %v2301, 0
        %v2360 = vsel %vm1246, %v2355, 0
        %2362 = vmatprep.subr.bf16.mxu0 0
        %2363 = vmatpush1.bf16.msra.mxu0 %v2360
        %2364 = vmatprep.subr.bf16.mxu0 0
        %2365 = vmatpush1.bf16.msra.mxu0 0
        %2366 = vmatprep.subr.bf16.mxu0 0
        %2367 = vmatpush1.bf16.msra.mxu0 0
        %2368 = vmatprep.subr.bf16.mxu0 0
        %2369 = vmatpush1.bf16.msra.mxu0 0
        %2370 = vmatprep.subr.bf16.mxu0 0
        %2371 = vmatpush1.bf16.msra.mxu0 0
        %2372 = vmatprep.subr.bf16.mxu0 0
        %2373 = vmatpush1.bf16.msra.mxu0 0
        %2374 = vmatprep.subr.bf16.mxu0 0
        %2375 = vmatpush1.bf16.msra.mxu0 0
        %2376 = vmatprep.subr.bf16.mxu0 0
        %2377 = vmatpush1.bf16.msra.mxu0 0
        %2378 = vmatprep.subr.bf16.mxu0 0
        %2379 = vmatpush1.bf16.msra.mxu0 0
        %2380 = vmatprep.subr.bf16.mxu0 0
        %2381 = vmatpush1.bf16.msra.mxu0 0
        %2382 = vmatprep.subr.bf16.mxu0 0
        %2383 = vmatpush1.bf16.msra.mxu0 0
        %2384 = vmatprep.subr.bf16.mxu0 0
        %2385 = vmatpush1.bf16.msra.mxu0 0
        %2386 = vmatprep.subr.bf16.mxu0 0
        %2387 = vmatpush1.bf16.msra.mxu0 0
        %2388 = vmatprep.subr.bf16.mxu0 0
        %2389 = vmatpush1.bf16.msra.mxu0 0
        %2390 = vmatprep.subr.bf16.mxu0 0
        %2391 = vmatpush1.bf16.msra.mxu0 0
        %2392 = vmatprep.subr.bf16.mxu0 0
        %2393 = vmatpush1.bf16.msra.mxu0 0
        %2394 = vmatprep.mubr.bf16.mxu0 0
        %2395 = vmatmul.mubr.bf16.gmra.mrb[0].mxu0 %v2357
        %v2396 = vpop.f32.mrb[0].mxu0
        %v2397 = vadd.f32 0.0, %v2396
        %v2398 = vpop.f32.mrb[0].mxu0
        %v2399 = vpop.f32.mrb[0].mxu0
        %v2400 = vpop.f32.mrb[0].mxu0
        %2401 = vdwg.mxu0
        %2403 = vrot.lane.b32.xlu0 %v2066, 120
        %v2404 = vpop.permute.xlu0 %2403
        %v2406 = vsel %vm991, %v2302, 0
        %v2409 = vsel %vm1246, %v2404, 0
        %2411 = vmatprep.subr.bf16.mxu0 0
        %2412 = vmatpush1.bf16.msra.mxu0 %v2409
        %2413 = vmatprep.subr.bf16.mxu0 0
        %2414 = vmatpush1.bf16.msra.mxu0 0
        %2415 = vmatprep.subr.bf16.mxu0 0
        %2416 = vmatpush1.bf16.msra.mxu0 0
        %2417 = vmatprep.subr.bf16.mxu0 0
        %2418 = vmatpush1.bf16.msra.mxu0 0
        %2419 = vmatprep.subr.bf16.mxu0 0
        %2420 = vmatpush1.bf16.msra.mxu0 0
        %2421 = vmatprep.subr.bf16.mxu0 0
        %2422 = vmatpush1.bf16.msra.mxu0 0
        %2423 = vmatprep.subr.bf16.mxu0 0
        %2424 = vmatpush1.bf16.msra.mxu0 0
        %2425 = vmatprep.subr.bf16.mxu0 0
        %2426 = vmatpush1.bf16.msra.mxu0 0
        %2427 = vmatprep.subr.bf16.mxu0 0
        %2428 = vmatpush1.bf16.msra.mxu0 0
        %2429 = vmatprep.subr.bf16.mxu0 0
        %2430 = vmatpush1.bf16.msra.mxu0 0
        %2431 = vmatprep.subr.bf16.mxu0 0
        %2432 = vmatpush1.bf16.msra.mxu0 0
        %2433 = vmatprep.subr.bf16.mxu0 0
        %2434 = vmatpush1.bf16.msra.mxu0 0
        %2435 = vmatprep.subr.bf16.mxu0 0
        %2436 = vmatpush1.bf16.msra.mxu0 0
        %2437 = vmatprep.subr.bf16.mxu0 0
        %2438 = vmatpush1.bf16.msra.mxu0 0
        %2439 = vmatprep.subr.bf16.mxu0 0
        %2440 = vmatpush1.bf16.msra.mxu0 0
        %2441 = vmatprep.subr.bf16.mxu0 0
        %2442 = vmatpush1.bf16.msra.mxu0 0
        %2443 = vmatprep.mubr.bf16.mxu0 0
        %2444 = vmatmul.mubr.bf16.gmra.mrb[0].mxu0 %v2406
        %v2445 = vpop.f32.mrb[0].mxu0
        %v2446 = vadd.f32 0.0, %v2445
        %v2447 = vpop.f32.mrb[0].mxu0
        %v2448 = vpop.f32.mrb[0].mxu0
        %v2449 = vpop.f32.mrb[0].mxu0
        %2450 = vdwg.mxu0
        %2452 = vrot.lane.b32.xlu0 %v2067, 120
        %v2453 = vpop.permute.xlu0 %2452
        %v2455 = vsel %vm991, %v2303, 0
        %v2458 = vsel %vm1246, %v2453, 0
        %2460 = vmatprep.subr.bf16.mxu0 0
        %2461 = vmatpush1.bf16.msra.mxu0 %v2458
        %2462 = vmatprep.subr.bf16.mxu0 0
        %2463 = vmatpush1.bf16.msra.mxu0 0
        %2464 = vmatprep.subr.bf16.mxu0 0
        %2465 = vmatpush1.bf16.msra.mxu0 0
        %2466 = vmatprep.subr.bf16.mxu0 0
        %2467 = vmatpush1.bf16.msra.mxu0 0
        %2468 = vmatprep.subr.bf16.mxu0 0
        %2469 = vmatpush1.bf16.msra.mxu0 0
        %2470 = vmatprep.subr.bf16.mxu0 0
        %2471 = vmatpush1.bf16.msra.mxu0 0
        %2472 = vmatprep.subr.bf16.mxu0 0
        %2473 = vmatpush1.bf16.msra.mxu0 0
        %2474 = vmatprep.subr.bf16.mxu0 0
        %2475 = vmatpush1.bf16.msra.mxu0 0
        %2476 = vmatprep.subr.bf16.mxu0 0
        %2477 = vmatpush1.bf16.msra.mxu0 0
        %2478 = vmatprep.subr.bf16.mxu0 0
        %2479 = vmatpush1.bf16.msra.mxu0 0
        %2480 = vmatprep.subr.bf16.mxu0 0
        %2481 = vmatpush1.bf16.msra.mxu0 0
        %2482 = vmatprep.subr.bf16.mxu0 0
        %2483 = vmatpush1.bf16.msra.mxu0 0
        %2484 = vmatprep.subr.bf16.mxu0 0
        %2485 = vmatpush1.bf16.msra.mxu0 0
        %2486 = vmatprep.subr.bf16.mxu0 0
        %2487 = vmatpush1.bf16.msra.mxu0 0
        %2488 = vmatprep.subr.bf16.mxu0 0
        %2489 = vmatpush1.bf16.msra.mxu0 0
        %2490 = vmatprep.subr.bf16.mxu0 0
        %2491 = vmatpush1.bf16.msra.mxu0 0
        %2492 = vmatprep.mubr.bf16.mxu0 0
        %2493 = vmatmul.mubr.bf16.gmra.mrb[0].mxu0 %v2455
        %v2494 = vpop.f32.mrb[0].mxu0
        %v2495 = vadd.f32 0.0, %v2494
        %v2496 = vpop.f32.mrb[0].mxu0
        %v2497 = vpop.f32.mrb[0].mxu0
        %v2498 = vpop.f32.mrb[0].mxu0
        %2499 = vdwg.mxu0
        %2501 = vrot.lane.b32.xlu0 %v2397, 8
        %v2502 = vpop.permute.xlu0 %2501
        %2505 = vrot.lane.b32.xlu0 %v2446, 16
        %v2506 = vpop.permute.xlu0 %2505
        %2509 = vrot.lane.b32.xlu0 %v2495, 24
        %v2510 = vpop.permute.xlu0 %2509
        %v2512 = vsel %vm991, %v2348, %v2502
        %v2513 = vsel %vm1447, %v2512, %v2506
        %v2514 = vsel %vm1449, %v2513, %v2510
        %v2515 = vpack.c.bf16 %v2514, %v2514
        %v2516 = vld [vmem:[%s13] sm:$0xf]
        %v2517 = vld [vmem:[%s13 + $0x4] sm:$0xf]
        %v2518 = vld [vmem:[%s13 + $0x8] sm:$0xf]
        %v2519 = vld [vmem:[%s13 + $0xc] sm:$0xf]
        %v2520 = vld [vmem:[%s14] sm:$0x1]
        %v2522 = vlaneseq
        %v2523 = vshrl.u32 %v2522, 7
        %v2524 = vsub.s32 0, %v2523
        %v2525 = vrot.slane %v2520, %v2524
        %v2531 = vunpack.c.l.b16 %v2516
        %v2532 = vunpack.c.l.b16 %v2517
        %v2533 = vunpack.c.l.b16 %v2518
        %v2534 = vunpack.c.l.b16 %v2519
        %v2535 = vpack.c.b16 %v2532, %v2531
        %v2536 = vpack.c.b16 %v2534, %v2533
        %v2540 = vsel %vm784, %v2515, 0
        %2542 = vmatprep.subr.bf16.mxu0 0
        %2543 = vmatpush1.bf16.msra.mxu0 %v2535
        %2544 = vmatprep.subr.bf16.mxu0 0
        %2545 = vmatpush1.bf16.msra.mxu0 %v2536
        %2546 = vmatprep.subr.bf16.mxu0 0
        %2547 = vmatpush1.bf16.msra.mxu0 0
        %2548 = vmatprep.subr.bf16.mxu0 0
        %2549 = vmatpush1.bf16.msra.mxu0 0
        %2550 = vmatprep.subr.bf16.mxu0 0
        %2551 = vmatpush1.bf16.msra.mxu0 0
        %2552 = vmatprep.subr.bf16.mxu0 0
        %2553 = vmatpush1.bf16.msra.mxu0 0
        %2554 = vmatprep.subr.bf16.mxu0 0
        %2555 = vmatpush1.bf16.msra.mxu0 0
        %2556 = vmatprep.subr.bf16.mxu0 0
        %2557 = vmatpush1.bf16.msra.mxu0 0
        %2558 = vmatprep.subr.bf16.mxu0 0
        %2559 = vmatpush1.bf16.msra.mxu0 0
        %2560 = vmatprep.subr.bf16.mxu0 0
        %2561 = vmatpush1.bf16.msra.mxu0 0
        %2562 = vmatprep.subr.bf16.mxu0 0
        %2563 = vmatpush1.bf16.msra.mxu0 0
        %2564 = vmatprep.subr.bf16.mxu0 0
        %2565 = vmatpush1.bf16.msra.mxu0 0
        %2566 = vmatprep.subr.bf16.mxu0 0
        %2567 = vmatpush1.bf16.msra.mxu0 0
        %2568 = vmatprep.subr.bf16.mxu0 0
        %2569 = vmatpush1.bf16.msra.mxu0 0
        %2570 = vmatprep.subr.bf16.mxu0 0
        %2571 = vmatpush1.bf16.msra.mxu0 0
        %2572 = vmatprep.subr.bf16.mxu0 0
        %2573 = vmatpush1.bf16.msra.mxu0 0
        %2574 = vmatprep.mubr.bf16.mxu0 0
        %2575 = vmatmul.mubr.bf16.gmra.mrb[0].mxu0 %v2540
        %v2576 = vpop.f32.mrb[0].mxu0
        %v2577 = vadd.f32 %v2525, %v2576
        %v2578 = vpop.f32.mrb[0].mxu0
        %v2579 = vpop.f32.mrb[0].mxu0
        %v2580 = vpop.f32.mrb[0].mxu0
        %2581 = vdwg.mxu0
        %v2582 = vadd.f32 %v1548, %v2577
        %v2583 = vld [vmem:[%s15] sm:$0x1]
        %v2584 = vld [vmem:[%s16] sm:$0x1]
        %v2585 = vsel %vm784, %v2582, 0.0
        %2586 = vadd.xlane.f32.xlu0 %v2585
        %v2587 = vpop.xlane.xlu0 %2586
        %v2588 = vmul.f32 %v2587, %v1524
        %v2589 = vsub.f32 %v2582, %v2588
        %v2590 = vmul.f32 %v2589, %v2589
        %v2591 = vsel %vm784, %v2590, 0.0
        %2592 = vadd.xlane.f32.xlu0 %v2591
        %v2593 = vpop.xlane.xlu0 %2592
        %v2594 = vmul.f32 %v2593, %v1524
        %v2595 = vadd.f32 %v2594, 1e-05
        %v2596 = vrsqrt.pop %v2595
        %v2597 = vmul.f32 %v2589, %v2596
        %v2599 = vlaneseq
        %v2600 = vshrl.u32 %v2599, 7
        %v2601 = vsub.s32 0, %v2600
        %v2602 = vrot.slane %v2583, %v2601
        %v2604 = vmul.f32 %v2597, %v2602
        %v2606 = vlaneseq
        %v2607 = vshrl.u32 %v2606, 7
        %v2608 = vsub.s32 0, %v2607
        %v2609 = vrot.slane %v2584, %v2608
        %v2611 = vadd.f32 %v2604, %v2609
        %v2612 = vpack.c.bf16 %v2611, %v2611
        %v2613 = vld [vmem:[%s17] sm:$0xf]
        %v2614 = vld [vmem:[%s17 + $0x4] sm:$0xf]
        %v2615 = vld [vmem:[%s17 + $0x8] sm:$0xf]
        %v2616 = vld [vmem:[%s17 + $0xc] sm:$0xf]
        %v2617 = vld [vmem:[%s18] sm:$0x1]
        %v2619 = vlaneseq
        %v2620 = vshrl.u32 %v2619, 7
        %v2621 = vsub.s32 0, %v2620
        %v2622 = vrot.slane %v2617, %v2621
        %v2628 = vunpack.c.l.b16 %v2613
        %v2629 = vunpack.c.l.b16 %v2614
        %v2630 = vunpack.c.l.b16 %v2615
        %v2631 = vunpack.c.l.b16 %v2616
        %v2632 = vpack.c.b16 %v2629, %v2628
        %v2633 = vpack.c.b16 %v2631, %v2630
        %v2637 = vsel %vm784, %v2612, 0
        %2639 = vmatprep.subr.bf16.mxu0 0
        %2640 = vmatpush1.bf16.msra.mxu0 %v2632
        %2641 = vmatprep.subr.bf16.mxu0 0
        %2642 = vmatpush1.bf16.msra.mxu0 %v2633
        %2643 = vmatprep.subr.bf16.mxu0 0
        %2644 = vmatpush1.bf16.msra.mxu0 0
        %2645 = vmatprep.subr.bf16.mxu0 0
        %2646 = vmatpush1.bf16.msra.mxu0 0
        %2647 = vmatprep.subr.bf16.mxu0 0
        %2648 = vmatpush1.bf16.msra.mxu0 0
        %2649 = vmatprep.subr.bf16.mxu0 0
        %2650 = vmatpush1.bf16.msra.mxu0 0
        %2651 = vmatprep.subr.bf16.mxu0 0
        %2652 = vmatpush1.bf16.msra.mxu0 0
        %2653 = vmatprep.subr.bf16.mxu0 0
        %2654 = vmatpush1.bf16.msra.mxu0 0
        %2655 = vmatprep.subr.bf16.mxu0 0
        %2656 = vmatpush1.bf16.msra.mxu0 0
        %2657 = vmatprep.subr.bf16.mxu0 0
        %2658 = vmatpush1.bf16.msra.mxu0 0
        %2659 = vmatprep.subr.bf16.mxu0 0
        %2660 = vmatpush1.bf16.msra.mxu0 0
        %2661 = vmatprep.subr.bf16.mxu0 0
        %2662 = vmatpush1.bf16.msra.mxu0 0
        %2663 = vmatprep.subr.bf16.mxu0 0
        %2664 = vmatpush1.bf16.msra.mxu0 0
        %2665 = vmatprep.subr.bf16.mxu0 0
        %2666 = vmatpush1.bf16.msra.mxu0 0
        %2667 = vmatprep.subr.bf16.mxu0 0
        %2668 = vmatpush1.bf16.msra.mxu0 0
        %2669 = vmatprep.subr.bf16.mxu0 0
        %2670 = vmatpush1.bf16.msra.mxu0 0
        %2671 = vmatprep.mubr.bf16.mxu0 0
        %2672 = vmatmul.mubr.bf16.gmra.mrb[0].mxu0 %v2637
        %v2673 = vpop.f32.mrb[0].mxu0
        %v2674 = vadd.f32 %v2622, %v2673
        %v2675 = vpop.f32.mrb[0].mxu0
        %v2676 = vpop.f32.mrb[0].mxu0
        %v2677 = vpop.f32.mrb[0].mxu0
        %2678 = vdwg.mxu0
        %v2679 = vmax.f32 %v2674, 0.0
        %v2680 = vpack.c.bf16 %v2679, %v2679
        %v2681 = vld [vmem:[%s19] sm:$0xf]
        %v2682 = vld [vmem:[%s19 + $0x4] sm:$0xf]
        %v2683 = vld [vmem:[%s19 + $0x8] sm:$0xf]
        %v2684 = vld [vmem:[%s19 + $0xc] sm:$0xf]
        %v2685 = vld [vmem:[%s19 + $0x10] sm:$0xf]
        %v2686 = vld [vmem:[%s19 + $0x14] sm:$0xf]
        %v2687 = vld [vmem:[%s19 + $0x18] sm:$0xf]
        %v2688 = vld [vmem:[%s19 + $0x1c] sm:$0xf]
        %v2689 = vld [vmem:[%s20] sm:$0x1]
        %v2691 = vlaneseq
        %v2692 = vshrl.u32 %v2691, 7
        %v2693 = vsub.s32 0, %v2692
        %v2694 = vrot.slane %v2689, %v2693
        %v2704 = vunpack.c.l.b16 %v2681
        %v2705 = vunpack.c.l.b16 %v2682
        %v2706 = vunpack.c.l.b16 %v2683
        %v2707 = vunpack.c.l.b16 %v2684
        %v2708 = vunpack.c.l.b16 %v2685
        %v2709 = vunpack.c.l.b16 %v2686
        %v2710 = vunpack.c.l.b16 %v2687
        %v2711 = vunpack.c.l.b16 %v2688
        %v2712 = vpack.c.b16 %v2705, %v2704
        %v2713 = vpack.c.b16 %v2707, %v2706
        %v2714 = vpack.c.b16 %v2709, %v2708
        %v2715 = vpack.c.b16 %v2711, %v2710
        %vm2720 = vcmask 523264
        %v2722 = vsel %vm2720, %v2680, 0
        %2724 = vmatprep.subr.bf16.mxu0 0
        %2725 = vmatpush1.bf16.msra.mxu0 %v2712
        %2726 = vmatprep.subr.bf16.mxu0 0
        %2727 = vmatpush1.bf16.msra.mxu0 %v2713
        %2728 = vmatprep.subr.bf16.mxu0 0
        %2729 = vmatpush1.bf16.msra.mxu0 %v2714
        %2730 = vmatprep.subr.bf16.mxu0 0
        %2731 = vmatpush1.bf16.msra.mxu0 %v2715
        %2732 = vmatprep.subr.bf16.mxu0 0
        %2733 = vmatpush1.bf16.msra.mxu0 0
        %2734 = vmatprep.subr.bf16.mxu0 0
        %2735 = vmatpush1.bf16.msra.mxu0 0
        %2736 = vmatprep.subr.bf16.mxu0 0
        %2737 = vmatpush1.bf16.msra.mxu0 0
        %2738 = vmatprep.subr.bf16.mxu0 0
        %2739 = vmatpush1.bf16.msra.mxu0 0
        %2740 = vmatprep.subr.bf16.mxu0 0
        %2741 = vmatpush1.bf16.msra.mxu0 0
        %2742 = vmatprep.subr.bf16.mxu0 0
        %2743 = vmatpush1.bf16.msra.mxu0 0
        %2744 = vmatprep.subr.bf16.mxu0 0
        %2745 = vmatpush1.bf16.msra.mxu0 0
        %2746 = vmatprep.subr.bf16.mxu0 0
        %2747 = vmatpush1.bf16.msra.mxu0 0
        %2748 = vmatprep.subr.bf16.mxu0 0
        %2749 = vmatpush1.bf16.msra.mxu0 0
        %2750 = vmatprep.subr.bf16.mxu0 0
        %2751 = vmatpush1.bf16.msra.mxu0 0
        %2752 = vmatprep.subr.bf16.mxu0 0
        %2753 = vmatpush1.bf16.msra.mxu0 0
        %2754 = vmatprep.subr.bf16.mxu0 0
        %2755 = vmatpush1.bf16.msra.mxu0 0
        %2756 = vmatprep.mubr.bf16.mxu0 0
        %2757 = vmatmul.mubr.bf16.gmra.mrb[0].mxu0 %v2722
        %v2758 = vpop.f32.mrb[0].mxu0
        %v2759 = vadd.f32 %v2694, %v2758
        %v2760 = vpop.f32.mrb[0].mxu0
        %v2761 = vpop.f32.mrb[0].mxu0
        %v2762 = vpop.f32.mrb[0].mxu0
        %2763 = vdwg.mxu0
        %v2764 = vadd.f32 %v2611, %v2759
        %v2765 = vld [vmem:[%s21] sm:$0x1]
        %v2766 = vld [vmem:[%s22] sm:$0x1]
        %v2767 = vsel %vm784, %v2764, 0.0
        %2768 = vadd.xlane.f32.xlu0 %v2767
        %v2769 = vpop.xlane.xlu0 %2768
        %v2770 = vmul.f32 %v2769, %v1524
        %v2771 = vsub.f32 %v2764, %v2770
        %v2772 = vmul.f32 %v2771, %v2771
        %v2773 = vsel %vm784, %v2772, 0.0
        %2774 = vadd.xlane.f32.xlu0 %v2773
        %v2775 = vpop.xlane.xlu0 %2774
        %v2776 = vmul.f32 %v2775, %v1524
        %v2777 = vadd.f32 %v2776, 1e-05
        %v2778 = vrsqrt.pop %v2777
        %v2779 = vmul.f32 %v2771, %v2778
        %v2781 = vlaneseq
        %v2782 = vshrl.u32 %v2781, 7
        %v2783 = vsub.s32 0, %v2782
        %v2784 = vrot.slane %v2765, %v2783
        %v2786 = vmul.f32 %v2779, %v2784
        %v2788 = vlaneseq
        %v2789 = vshrl.u32 %v2788, 7
        %v2790 = vsub.s32 0, %v2789
        %v2791 = vrot.slane %v2766, %v2790
        %v2793 = vadd.f32 %v2786, %v2791
        %v2794 = vpack.c.bf16 %v2793, %v2793
        %vm2795 = vcmask 257024
        %2796 = vst.msk [vmem:[%s714] sm:$0xf] %vm2795, %v2794
        %s2797 = sand.u32 %s538, 1
        %s2798 = scalar_lea.sflag [#allocation3], %s2797
        %s2799 = sand.u32 %s538, 1
        %s2800 = smul.addr %s2799, 4
        %s2801 = scalar_lea.vmem [#allocation2], %s2800
        // Predicated region
        $region113: #{tpu_custom_call.1} parent=111 // pred_check
          %p2802 = pneg %p548
        $region114: #{tpu_custom_call.1} parent=111 // pred_check_branch
          %2804 = sbr.rel (%p2802) target = $region116
        $region115: #{tpu_custom_call.1} parent=111 // pred_region
          %s2806 = ssub.s32 64, 64
          %2807 = vsyncadd %s2798, %s2806
          %s2808 = smul.addr %s37, 64
          %s2809 = scalar_lea.hbm %s23, %s2808
          %s2811 = sshll.u32 %s2801, 4
          %s2812 = int_to_ptr.vmem [resolvable:$true] %s2811
          %2814 = dma.vmem_to_hbm [thread:$0]  %s2812, 64, %s2809, %s2798
        $region116: #{tpu_custom_call.1} parent=111 // pred_fallthru
          _
      $region112: #{tpu_custom_call.1} parent=5 // pred_fallthru
        _
      %p2815 = scmp.le.s32.totalorder 2, %s32
      // Predicated region
      $region117: #{tpu_custom_call.1} parent=5 // pred_check
        %p2816 = pneg %p2815
      $region118: #{tpu_custom_call.1} parent=5 // pred_check_branch
        %2818 = sbr.rel (%p2816) target = $region120
      $region119: #{tpu_custom_call.1} parent=5 // pred_region
        %s2819 = ssub.s32 %s32, 2
        // Predicated region
        $region121: #{tpu_custom_call.1} parent=119 // pred_check
          %p2820 = pneg %p554
        $region122: #{tpu_custom_call.1} parent=119 // pred_check_branch
          %2822 = sbr.rel (%p2820) target = $region124
        $region123: #{tpu_custom_call.1} parent=119 // pred_region
          %s2823 = sand.u32 %s539, 1
          %s2824 = scalar_lea.sflag [#allocation3], %s2823
          %s2825 = sand.u32 %s539, 1
          %s2826 = smul.addr %s2825, 4
          %s2827 = scalar_lea.vmem [#allocation2], %s2826
          %2828 = dma.done %s2824, 64
        $region124: #{tpu_custom_call.1} parent=119 // pred_fallthru
          _
      $region120: #{tpu_custom_call.1} parent=5 // pred_fallthru
        _
    $region6: #{tpu_custom_call.1} parent=1 // loop_footer
      %s36 = sadd.s32 1, %s32
    $region7: #{tpu_custom_call.1} parent=1 // loop_footer_branch
      %31 = sbr.rel target = $region3
    $region8: #{tpu_custom_call.1} parent=1 // loop_exit
      _
    %2829 = vsyncpa [#allocation3], 1
    %s2830 = scalar_lea.sflag [#allocation3], 1
    %2831 = vsyncpa %s2830, 1

</llo_original>
